<compile_context>
chip_gen: v7x
topology: tpu7x:2x2x1
jax: 0.10.0
libtpu: 0.0.40
codegen_flags: <defaults>
</compile_context>

<pallas_src>
import functools

import jax
import jax.numpy as jnp
import numpy as np
from jax import lax
from jax.experimental import pallas as pl
from jax.experimental.pallas import tpu as pltpu

NEG_SLOPE = 0.01   # PyTorch LeakyReLU default
BN_EPS = 1e-5
LANE = 128


def _leaky(x):
    return jnp.where(x > 0, x, NEG_SLOPE * x)


def _round_up(x, m):
    return (x + m - 1) // m * m


# --------------------------------- fused kernel --------------------------------------
def _res_block_kernel(xs_ref, tw1_ref, tw2_ref, tw3_ref,
                      s1_ref, b1_ref, s2_ref, b2_ref, s3_ref, b3_ref,
                      o_ref, slab_ref, resid_ref, *, D, H, Lp2):
    """Whole Res_block3d for one batch element.

    xs_ref   : ((D+4)*H, Lp1) f32  input slab, rows = flattened (d, h) with two zero
                                   d-slabs of halo each side; W halo + channel pad merged
                                   into the 128-wide lane dim.
    twK_ref  : (3, 3*LpIn, Lp2) bf16 block-Toeplitz weights; kh on the leading axis, the
                                   three kd taps stacked along K.
    sK_/bK_  : (1, Lp2) f32        folded BN scale / bias rows (zero in halo / pad lanes).
    o_ref    : (D*H, Lp2) f32      output, lane-dense 128-wide rows (halo/pad lanes zero).
    slab_ref : VMEM ((D+4)*H, Lp2) f32 scratch holding the previous layer's activation.
    resid_ref: VMEM (D*H, Lp2) f32 scratch holding conv1's activation for the residual.
    """
    DH = D * H
    HALO = 2 * H

    # h-index of every output row, to mask taps whose H neighbour lies in the (unstored)
    # H halo (those contributions must be exactly zero).
    hidx = lax.broadcasted_iota(jnp.int32, (D, H, 1), 1).reshape(DH, 1)
    first_h = hidx == 0
    last_h = hidx == H - 1

    def conv(src_ref, tw_ref, s_ref, b_ref):
        """Conv3d(k=3, pad=1) + folded BN: padded src slab -> (DH, Lp2) f32."""
        acc = jnp.zeros((DH, Lp2), jnp.float32)
        for kh in range(3):
            # Three kd taps, read as ref-level row-range loads and stacked along lanes
            # -> one fat-K (3*LpIn) bf16 matmul per kh.
            patch = jnp.concatenate(
                [src_ref[pl.ds((kd + 1) * H + (kh - 1), DH), :] for kd in range(3)],
                axis=1).astype(jnp.bfloat16)
            part = jnp.dot(patch, tw_ref[kh], preferred_element_type=jnp.float32)
            if kh == 0:
                part = jnp.where(first_h, 0.0, part)
            elif kh == 2:
                part = jnp.where(last_h, 0.0, part)
            acc = acc + part
        # folded BatchNorm (+ conv bias); scale/bias are zero in halo/pad lanes, keeping
        # those lanes exactly zero for the next layer.
        return acc * s_ref[...] + b_ref[...]

    # D-halo rows of the activation slab: written once, stay zero across both stashes.
    zhalo = jnp.zeros((HALO, Lp2), slab_ref.dtype)
    slab_ref[pl.ds(0, HALO), :] = zhalo
    slab_ref[pl.ds(HALO + DH, HALO), :] = zhalo

    # conv1 + BN + LeakyReLU
    y1 = _leaky(conv(xs_ref, tw1_ref, s1_ref, b1_ref))
    resid_ref[...] = y1                                     # f32 copy for the residual add
    slab_ref[pl.ds(HALO, DH), :] = y1.astype(slab_ref.dtype)   # bulk interior store
    # conv2 + BN + LeakyReLU
    y2 = _leaky(conv(slab_ref, tw2_ref, s2_ref, b2_ref))
    slab_ref[pl.ds(HALO, DH), :] = y2.astype(slab_ref.dtype)
    # conv3 + BN, residual add of conv1, final LeakyReLU; lane-dense 128-wide store
    y3 = conv(slab_ref, tw3_ref, s3_ref, b3_ref)
    o_ref[...] = _leaky(y3 + resid_ref[...])


# --------------------------------- param preparation ---------------------------------
def fold_bn(gamma, beta, running_mean, running_var, conv_bias):
    """Fold eval-mode BN + conv bias into per-channel (scale, bias), shape (Cout,)."""
    scale = gamma / jnp.sqrt(running_var + BN_EPS)
    bias = beta + scale * (conv_bias - running_mean)
    return scale, bias


def _toeplitz_weight(w_dhwio, W, lp_in, lp_out):
    """(3,3,3,Ci,Co) -> (3, 3*lp_in, lp_out) bf16.

    kh on the leading axis, the three kd taps stacked along K, the kW taps folded as a
    block-Toeplitz over the lane-merged (and zero-padded) W axis.  Halo / pad output lanes
    get all-zero columns so they stay exactly zero through the whole block.
    """
    kD, kH, kW, Ci, Co = w_dhwio.shape
    w_np = np.asarray(w_dhwio, np.float32)
    t = np.zeros((kH, kD, lp_in, lp_out), np.float32)
    for j_out in range(1, W + 1):            # output column in padded W coordinates
        for kw in range(kW):
            j_in = j_out - 1 + kw            # input column in padded W coordinates
            t[:, :, j_in * Ci:(j_in + 1) * Ci, j_out * Co:(j_out + 1) * Co] = \
                np.transpose(w_np[:, :, kw], (1, 0, 2, 3))
    return jnp.asarray(t.reshape(kH, kD * lp_in, lp_out), dtype=jnp.bfloat16)


def _bn_rows(scale, bias, W, lp_out):
    """Per-channel (Co,) -> per-lane (1, lp_out) rows, zero in W-halo and pad lanes."""
    Co = scale.shape[0]
    pad = lp_out - (W + 2) * Co
    zc = jnp.zeros((Co,), jnp.float32)
    zp = jnp.zeros((pad,), jnp.float32)
    srow = jnp.concatenate([zc, jnp.tile(scale.astype(jnp.float32), W), zc, zp])
    brow = jnp.concatenate([zc, jnp.tile(bias.astype(jnp.float32), W), zc, zp])
    return srow[None, :], brow[None, :]


def prepare_kernel_params(raw_params, W):
    """raw_params: 3 x (w (3,3,3,Ci,Co), scale (Co,), bias (Co,)) -> kernel-ready params."""
    c_out = raw_params[0][0].shape[4]
    c_in = raw_params[0][0].shape[3]
    lp_in = _round_up((W + 2) * c_in, LANE)
    lp_out = _round_up((W + 2) * c_out, LANE)
    layers = []
    for li, (w, s, b) in enumerate(raw_params):
        lin = lp_in if li == 0 else lp_out
        srow, brow = _bn_rows(s, b, W, lp_out)
        layers.append((_toeplitz_weight(w, W, lin, lp_out), srow, brow))
    return tuple(layers), lp_in, lp_out, c_out


# --------------------------------- wrapper -------------------------------------------
def res_block3d_forward(x_ncdhw, kparams):
    """Mirrors Res_block3d.forward (eval-mode BN). Input NCDHW, output NCDHW."""
    layers, lp_in, lp_out, C2 = kparams
    (tw1, s1, b1), (tw2, s2, b2), (tw3, s3, b3) = layers
    N, C1, D, H, W = x_ncdhw.shape
    assert H % 8 == 0, "kernel assumes H is a multiple of 8 (sublane tile)"
    DH = D * H
    rows_in = (D + 4) * H

    # NCDHW -> NDHWC; single pad of the (small) raw input: D gets its conv halo plus one
    # extra zero slab each side (for the flattened-row H shifts), the W halo merges into
    # the lanes and the lanes are zero-padded up to a multiple of 128.
    x = jnp.transpose(x_ncdhw, (0, 2, 3, 4, 1))
    x = jnp.pad(x, ((0, 0), (2, 2), (0, 0), (1, 1), (0, 0)))
    x = x.reshape(N, D + 4, H, (W + 2) * C1)
    x = jnp.pad(x, ((0, 0), (0, 0), (0, 0), (0, lp_in - (W + 2) * C1)))
    x_slab = x.reshape(N, rows_in, lp_in).astype(jnp.float32)

    kernel = functools.partial(_res_block_kernel, D=D, H=H, Lp2=lp_out)
    rep2 = lambda n: (0, 0)
    rep3 = lambda n: (0, 0, 0)

    # NOTE: total VMEM use here is ~1-2 MiB, well under the default scoped limit on every
    # generation, so vmem_limit_bytes is left at its default (see TODO for large volumes).
    out = pl.pallas_call(
        kernel,
        out_shape=jax.ShapeDtypeStruct((N, DH, lp_out), jnp.float32),
        grid=(N,),
        in_specs=[
            pl.BlockSpec((None, rows_in, lp_in), lambda n: (n, 0, 0)),
            pl.BlockSpec(tw1.shape, rep3),
            pl.BlockSpec(tw2.shape, rep3),
            pl.BlockSpec(tw3.shape, rep3),
            pl.BlockSpec((1, lp_out), rep2),
            pl.BlockSpec((1, lp_out), rep2),
            pl.BlockSpec((1, lp_out), rep2),
            pl.BlockSpec((1, lp_out), rep2),
            pl.BlockSpec((1, lp_out), rep2),
            pl.BlockSpec((1, lp_out), rep2),
        ],
        out_specs=pl.BlockSpec((None, DH, lp_out), lambda n: (n, 0, 0)),
        scratch_shapes=[
            pltpu.VMEM((rows_in, lp_out), jnp.float32),   # inter-layer activation slab
            pltpu.VMEM((DH, lp_out), jnp.float32),        # conv1 residual copy
        ],
        compiler_params=pltpu.CompilerParams(
            dimension_semantics=("parallel",)),
    )(x_slab, tw1, tw2, tw3, s1, b1, s2, b2, s3, b3)

    # Drop the (all-zero) W-halo and channel-pad lanes, restore NCDHW.
    out = out.reshape(N, D, H, lp_out)[..., C2:(W + 1) * C2]
    out = out.reshape(N, D, H, W, C2)
    return jnp.transpose(out, (0, 4, 1, 2, 3))


# ----------------------------- pure-JAX reference ------------------------------------
def _conv_bn_ref(x, w, scale, bias):
    # conv operands in bf16 (matching the kernel's MXU precision), f32 accumulation
    y = lax.conv_general_dilated(
        x.astype(jnp.bfloat16), w.astype(jnp.bfloat16),
        window_strides=(1, 1, 1), padding=[(1, 1)] * 3,
        dimension_numbers=("NDHWC", "DHWIO", "NDHWC"),
        preferred_element_type=jnp.float32)
    return y * scale + bias


def res_block3d_ref(x_ncdhw, raw_params):
    x = jnp.transpose(x_ncdhw, (0, 2, 3, 4, 1))
    (w1, s1, b1), (w2, s2, b2), (w3, s3, b3) = raw_params
    c1 = _leaky(_conv_bn_ref(x, w1, s1, b1))
    c2 = _leaky(_conv_bn_ref(c1, w2, s2, b2))
    c3 = _conv_bn_ref(c2, w3, s3, b3)
    out = _leaky(c1 + c3)
    return jnp.transpose(out, (0, 4, 1, 2, 3))


# --------------------------------- main -----------------------------------------------
if __name__ == "__main__":
    key = jax.random.PRNGKey(0)
    N, in_ch, out_ch = 2, 4, 8
    D = H = W = 8

    def make_layer(k, cin, cout):
        ks = jax.random.split(k, 6)
        w = jax.random.normal(ks[0], (3, 3, 3, cin, cout), jnp.float32) * 0.1
        conv_b = jax.random.normal(ks[1], (cout,), jnp.float32) * 0.05
        gamma = 1.0 + 0.1 * jax.random.normal(ks[2], (cout,), jnp.float32)
        beta = 0.1 * jax.random.normal(ks[3], (cout,), jnp.float32)
        rmean = 0.05 * jax.random.normal(ks[4], (cout,), jnp.float32)
        rvar = jnp.abs(1.0 + 0.1 * jax.random.normal(ks[5], (cout,), jnp.float32))
        s, b = fold_bn(gamma, beta, rmean, rvar, conv_b)
        return w, s, b

    k0, k1, k2, kx = jax.random.split(key, 4)
    raw_params = (make_layer(k0, in_ch, out_ch),
                  make_layer(k1, out_ch, out_ch),
                  make_layer(k2, out_ch, out_ch))
    kparams = prepare_kernel_params(raw_params, W)

    x = jax.random.normal(kx, (N, in_ch, D, H, W), jnp.float32)  # NCDHW, like PyTorch

    out = jax.block_until_ready(res_block3d_forward(x, kparams))
    ref = jax.block_until_ready(res_block3d_ref(x, raw_params))

    assert out.shape == (N, out_ch, D, H, W), out.shape
    if not np.allclose(np.asarray(out), np.asarray(ref), atol=2e-2, rtol=2e-2):
        err = float(np.max(np.abs(np.asarray(out) - np.asarray(ref))))
        raise AssertionError(f"Pallas result does not match JAX reference (max abs err {err})")

    print("KERNEL_OK")
</pallas_src>

<mosaic_0001>
module attributes {stable_mosaic.version = 11 : i64} {
  func.func @_res_block_kernel(%arg0: i32, %arg1: memref<1x96x128xf32, #tpu.memory_space<vmem>>, %arg2: memref<3x384x128xbf16, #tpu.memory_space<vmem>>, %arg3: memref<3x384x128xbf16, #tpu.memory_space<vmem>>, %arg4: memref<3x384x128xbf16, #tpu.memory_space<vmem>>, %arg5: memref<1x128xf32, #tpu.memory_space<vmem>>, %arg6: memref<1x128xf32, #tpu.memory_space<vmem>>, %arg7: memref<1x128xf32, #tpu.memory_space<vmem>>, %arg8: memref<1x128xf32, #tpu.memory_space<vmem>>, %arg9: memref<1x128xf32, #tpu.memory_space<vmem>>, %arg10: memref<1x128xf32, #tpu.memory_space<vmem>>, %arg11: memref<1x64x128xf32, #tpu.memory_space<vmem>>, %arg12: memref<96x128xf32, #tpu.memory_space<vmem>>, %arg13: memref<64x128xf32, #tpu.memory_space<vmem>>) attributes {dimension_semantics = [#tpu.dimension_semantics<parallel>], iteration_bounds = array<i64: 2>, scalar_prefetch = 0 : i64, scratch_operands = 2 : i64, tpu.core_type = #tpu.core_type<tc>, window_params = [{transform_indices = @transform_0, window_bounds = array<i64: 1, 96, 128>}, {pipeline_mode = #tpu.pipeline_mode<synchronous>, transform_indices = @transform_1, window_bounds = array<i64: 3, 384, 128>}, {pipeline_mode = #tpu.pipeline_mode<synchronous>, transform_indices = @transform_2, window_bounds = array<i64: 3, 384, 128>}, {pipeline_mode = #tpu.pipeline_mode<synchronous>, transform_indices = @transform_3, window_bounds = array<i64: 3, 384, 128>}, {pipeline_mode = #tpu.pipeline_mode<synchronous>, transform_indices = @transform_4, window_bounds = array<i64: 1, 128>}, {pipeline_mode = #tpu.pipeline_mode<synchronous>, transform_indices = @transform_5, window_bounds = array<i64: 1, 128>}, {pipeline_mode = #tpu.pipeline_mode<synchronous>, transform_indices = @transform_6, window_bounds = array<i64: 1, 128>}, {pipeline_mode = #tpu.pipeline_mode<synchronous>, transform_indices = @transform_7, window_bounds = array<i64: 1, 128>}, {pipeline_mode = #tpu.pipeline_mode<synchronous>, transform_indices = @transform_8, window_bounds = array<i64: 1, 128>}, {pipeline_mode = #tpu.pipeline_mode<synchronous>, transform_indices = @transform_9, window_bounds = array<i64: 1, 128>}, {transform_indices = @transform_10, window_bounds = array<i64: 1, 64, 128>}]} {
    %0 = tpu.iota {dimensions = array<i32: 1>} : vector<8x8x1xi32>
    %1 = vector.shape_cast %0 : vector<8x8x1xi32> to vector<64x1xi32>
    %c0_i32 = arith.constant 0 : i32
    %2 = vector.broadcast %c0_i32 : i32 to vector<64x1xi32>
    %3 = arith.cmpi eq, %1, %2 : vector<64x1xi32>
    %c7_i32 = arith.constant 7 : i32
    %4 = vector.broadcast %c7_i32 : i32 to vector<64x1xi32>
    %5 = arith.cmpi eq, %1, %4 : vector<64x1xi32>
    %cst = arith.constant 0.000000e+00 : f32
    %6 = vector.broadcast %cst : f32 to vector<16x128xf32>
    %c0 = arith.constant 0 : index
    %c0_0 = arith.constant 0 : index
    %7 = vector.load %arg12[%c0, %c0_0] : memref<96x128xf32, #tpu.memory_space<vmem>>, vector<16x128xf32>
    tpu.vector_store %arg12[%c0, %c0_0], %6 {strides = array<i32>} : memref<96x128xf32, #tpu.memory_space<vmem>>, vector<16x128xf32>,
    %c80 = arith.constant 80 : index
    %c0_1 = arith.constant 0 : index
    %8 = vector.load %arg12[%c80, %c0_1] : memref<96x128xf32, #tpu.memory_space<vmem>>, vector<16x128xf32>
    tpu.vector_store %arg12[%c80, %c0_1], %6 {strides = array<i32>} : memref<96x128xf32, #tpu.memory_space<vmem>>, vector<16x128xf32>,
    %cst_2 = arith.constant 0.000000e+00 : f32
    %9 = vector.broadcast %cst_2 : f32 to vector<64x128xf32>
    %c0_3 = arith.constant 0 : index
    %c7 = arith.constant 7 : index
    %c0_4 = arith.constant 0 : index
    %10 = vector.load %arg1[%c0_3, %c7, %c0_4] : memref<1x96x128xf32, #tpu.memory_space<vmem>>, vector<1x64x128xf32>
    %11 = vector.shape_cast %10 : vector<1x64x128xf32> to vector<64x128xf32>
    %c0_5 = arith.constant 0 : index
    %c15 = arith.constant 15 : index
    %c0_6 = arith.constant 0 : index
    %12 = vector.load %arg1[%c0_5, %c15, %c0_6] : memref<1x96x128xf32, #tpu.memory_space<vmem>>, vector<1x64x128xf32>
    %13 = vector.shape_cast %12 : vector<1x64x128xf32> to vector<64x128xf32>
    %c0_7 = arith.constant 0 : index
    %c23 = arith.constant 23 : index
    %c0_8 = arith.constant 0 : index
    %14 = vector.load %arg1[%c0_7, %c23, %c0_8] : memref<1x96x128xf32, #tpu.memory_space<vmem>>, vector<1x64x128xf32>
    %15 = vector.shape_cast %14 : vector<1x64x128xf32> to vector<64x128xf32>
    %16 = tpu.concatenate %11, %13, %15 in 1 : vector<64x128xf32>, vector<64x128xf32>, vector<64x128xf32> -> vector<64x384xf32>
    %17 = arith.truncf %16 : vector<64x384xf32> to vector<64x384xbf16>
    %c0_9 = arith.constant 0 : index
    %c0_10 = arith.constant 0 : index
    %c0_11 = arith.constant 0 : index
    %18 = vector.load %arg2[%c0_9, %c0_10, %c0_11] : memref<3x384x128xbf16, #tpu.memory_space<vmem>>, vector<1x384x128xbf16>
    %19 = vector.shape_cast %18 : vector<1x384x128xbf16> to vector<384x128xbf16>
    %cst_12 = arith.constant dense<0.000000e+00> : vector<64x128xf32>
    %20 = tpu.matmul %17, %19, %cst_12 {dimension_numbers = #tpu.dot_dimension_numbers<[1], [0], [0], [1], [0, 0, 1, 1], [], []>} : vector<64x384xbf16>, vector<384x128xbf16>, vector<64x128xf32> -> vector<64x128xf32>
    %cst_13 = arith.constant 0.000000e+00 : f32
    %21 = vector.shape_cast %3 : vector<64x1xi1> to vector<64x1xi1>
    %22 = vector.broadcast %21 : vector<64x1xi1> to vector<64x128xi1>
    %23 = vector.broadcast %cst_13 : f32 to vector<64x128xf32>
    %24 = arith.select %22, %23, %20 : vector<64x128xi1>, vector<64x128xf32>
    %25 = arith.addf %9, %24 : vector<64x128xf32>
    %c0_14 = arith.constant 0 : index
    %c8 = arith.constant 8 : index
    %c0_15 = arith.constant 0 : index
    %26 = vector.load %arg1[%c0_14, %c8, %c0_15] : memref<1x96x128xf32, #tpu.memory_space<vmem>>, vector<1x64x128xf32>
    %27 = vector.shape_cast %26 : vector<1x64x128xf32> to vector<64x128xf32>
    %c0_16 = arith.constant 0 : index
    %c16 = arith.constant 16 : index
    %c0_17 = arith.constant 0 : index
    %28 = vector.load %arg1[%c0_16, %c16, %c0_17] : memref<1x96x128xf32, #tpu.memory_space<vmem>>, vector<1x64x128xf32>
    %29 = vector.shape_cast %28 : vector<1x64x128xf32> to vector<64x128xf32>
    %c0_18 = arith.constant 0 : index
    %c24 = arith.constant 24 : index
    %c0_19 = arith.constant 0 : index
    %30 = vector.load %arg1[%c0_18, %c24, %c0_19] : memref<1x96x128xf32, #tpu.memory_space<vmem>>, vector<1x64x128xf32>
    %31 = vector.shape_cast %30 : vector<1x64x128xf32> to vector<64x128xf32>
    %32 = tpu.concatenate %27, %29, %31 in 1 : vector<64x128xf32>, vector<64x128xf32>, vector<64x128xf32> -> vector<64x384xf32>
    %33 = arith.truncf %32 : vector<64x384xf32> to vector<64x384xbf16>
    %c1 = arith.constant 1 : index
    %c0_20 = arith.constant 0 : index
    %c0_21 = arith.constant 0 : index
    %34 = vector.load %arg2[%c1, %c0_20, %c0_21] : memref<3x384x128xbf16, #tpu.memory_space<vmem>>, vector<1x384x128xbf16>
    %35 = vector.shape_cast %34 : vector<1x384x128xbf16> to vector<384x128xbf16>
    %cst_22 = arith.constant dense<0.000000e+00> : vector<64x128xf32>
    %36 = tpu.matmul %33, %35, %cst_22 {dimension_numbers = #tpu.dot_dimension_numbers<[1], [0], [0], [1], [0, 0, 1, 1], [], []>} : vector<64x384xbf16>, vector<384x128xbf16>, vector<64x128xf32> -> vector<64x128xf32>
    %37 = arith.addf %25, %36 : vector<64x128xf32>
    %c0_23 = arith.constant 0 : index
    %c9 = arith.constant 9 : index
    %c0_24 = arith.constant 0 : index
    %38 = vector.load %arg1[%c0_23, %c9, %c0_24] : memref<1x96x128xf32, #tpu.memory_space<vmem>>, vector<1x64x128xf32>
    %39 = vector.shape_cast %38 : vector<1x64x128xf32> to vector<64x128xf32>
    %c0_25 = arith.constant 0 : index
    %c17 = arith.constant 17 : index
    %c0_26 = arith.constant 0 : index
    %40 = vector.load %arg1[%c0_25, %c17, %c0_26] : memref<1x96x128xf32, #tpu.memory_space<vmem>>, vector<1x64x128xf32>
    %41 = vector.shape_cast %40 : vector<1x64x128xf32> to vector<64x128xf32>
    %c0_27 = arith.constant 0 : index
    %c25 = arith.constant 25 : index
    %c0_28 = arith.constant 0 : index
    %42 = vector.load %arg1[%c0_27, %c25, %c0_28] : memref<1x96x128xf32, #tpu.memory_space<vmem>>, vector<1x64x128xf32>
    %43 = vector.shape_cast %42 : vector<1x64x128xf32> to vector<64x128xf32>
    %44 = tpu.concatenate %39, %41, %43 in 1 : vector<64x128xf32>, vector<64x128xf32>, vector<64x128xf32> -> vector<64x384xf32>
    %45 = arith.truncf %44 : vector<64x384xf32> to vector<64x384xbf16>
    %c2 = arith.constant 2 : index
    %c0_29 = arith.constant 0 : index
    %c0_30 = arith.constant 0 : index
    %46 = vector.load %arg2[%c2, %c0_29, %c0_30] : memref<3x384x128xbf16, #tpu.memory_space<vmem>>, vector<1x384x128xbf16>
    %47 = vector.shape_cast %46 : vector<1x384x128xbf16> to vector<384x128xbf16>
    %cst_31 = arith.constant dense<0.000000e+00> : vector<64x128xf32>
    %48 = tpu.matmul %45, %47, %cst_31 {dimension_numbers = #tpu.dot_dimension_numbers<[1], [0], [0], [1], [0, 0, 1, 1], [], []>} : vector<64x384xbf16>, vector<384x128xbf16>, vector<64x128xf32> -> vector<64x128xf32>
    %cst_32 = arith.constant 0.000000e+00 : f32
    %49 = vector.shape_cast %5 : vector<64x1xi1> to vector<64x1xi1>
    %50 = vector.broadcast %49 : vector<64x1xi1> to vector<64x128xi1>
    %51 = vector.broadcast %cst_32 : f32 to vector<64x128xf32>
    %52 = arith.select %50, %51, %48 : vector<64x128xi1>, vector<64x128xf32>
    %53 = arith.addf %37, %52 : vector<64x128xf32>
    %c0_33 = arith.constant 0 : index
    %c0_34 = arith.constant 0 : index
    %54 = vector.load %arg5[%c0_33, %c0_34] : memref<1x128xf32, #tpu.memory_space<vmem>>, vector<1x128xf32>
    %55 = vector.broadcast %54 : vector<1x128xf32> to vector<64x128xf32>
    %56 = arith.mulf %53, %55 : vector<64x128xf32>
    %c0_35 = arith.constant 0 : index
    %c0_36 = arith.constant 0 : index
    %57 = vector.load %arg6[%c0_35, %c0_36] : memref<1x128xf32, #tpu.memory_space<vmem>>, vector<1x128xf32>
    %58 = vector.broadcast %57 : vector<1x128xf32> to vector<64x128xf32>
    %59 = arith.addf %56, %58 : vector<64x128xf32>
    %cst_37 = arith.constant 0.000000e+00 : f32
    %60 = vector.broadcast %cst_37 : f32 to vector<64x128xf32>
    %61 = arith.cmpf ogt, %59, %60 : vector<64x128xf32>
    %cst_38 = arith.constant 0.00999999977 : f32
    %62 = vector.broadcast %cst_38 : f32 to vector<64x128xf32>
    %63 = arith.mulf %62, %59 : vector<64x128xf32>
    %64 = arith.select %61, %59, %63 : vector<64x128xi1>, vector<64x128xf32>
    %c0_39 = arith.constant 0 : index
    %c0_40 = arith.constant 0 : index
    %65 = vector.load %arg13[%c0_39, %c0_40] : memref<64x128xf32, #tpu.memory_space<vmem>>, vector<64x128xf32>
    tpu.vector_store %arg13[%c0_39, %c0_40], %64 {strides = array<i32>} : memref<64x128xf32, #tpu.memory_space<vmem>>, vector<64x128xf32>,
    %c16_41 = arith.constant 16 : index
    %c0_42 = arith.constant 0 : index
    %66 = vector.load %arg12[%c16_41, %c0_42] : memref<96x128xf32, #tpu.memory_space<vmem>>, vector<64x128xf32>
    tpu.vector_store %arg12[%c16_41, %c0_42], %64 {strides = array<i32>} : memref<96x128xf32, #tpu.memory_space<vmem>>, vector<64x128xf32>,
    %cst_43 = arith.constant 0.000000e+00 : f32
    %67 = vector.broadcast %cst_43 : f32 to vector<64x128xf32>
    %c7_44 = arith.constant 7 : index
    %c0_45 = arith.constant 0 : index
    %68 = vector.load %arg12[%c7_44, %c0_45] : memref<96x128xf32, #tpu.memory_space<vmem>>, vector<64x128xf32>
    %c15_46 = arith.constant 15 : index
    %c0_47 = arith.constant 0 : index
    %69 = vector.load %arg12[%c15_46, %c0_47] : memref<96x128xf32, #tpu.memory_space<vmem>>, vector<64x128xf32>
    %c23_48 = arith.constant 23 : index
    %c0_49 = arith.constant 0 : index
    %70 = vector.load %arg12[%c23_48, %c0_49] : memref<96x128xf32, #tpu.memory_space<vmem>>, vector<64x128xf32>
    %71 = tpu.concatenate %68, %69, %70 in 1 : vector<64x128xf32>, vector<64x128xf32>, vector<64x128xf32> -> vector<64x384xf32>
    %72 = arith.truncf %71 : vector<64x384xf32> to vector<64x384xbf16>
    %c0_50 = arith.constant 0 : index
    %c0_51 = arith.constant 0 : index
    %c0_52 = arith.constant 0 : index
    %73 = vector.load %arg3[%c0_50, %c0_51, %c0_52] : memref<3x384x128xbf16, #tpu.memory_space<vmem>>, vector<1x384x128xbf16>
    %74 = vector.shape_cast %73 : vector<1x384x128xbf16> to vector<384x128xbf16>
    %cst_53 = arith.constant dense<0.000000e+00> : vector<64x128xf32>
    %75 = tpu.matmul %72, %74, %cst_53 {dimension_numbers = #tpu.dot_dimension_numbers<[1], [0], [0], [1], [0, 0, 1, 1], [], []>} : vector<64x384xbf16>, vector<384x128xbf16>, vector<64x128xf32> -> vector<64x128xf32>
    %cst_54 = arith.constant 0.000000e+00 : f32
    %76 = vector.shape_cast %3 : vector<64x1xi1> to vector<64x1xi1>
    %77 = vector.broadcast %76 : vector<64x1xi1> to vector<64x128xi1>
    %78 = vector.broadcast %cst_54 : f32 to vector<64x128xf32>
    %79 = arith.select %77, %78, %75 : vector<64x128xi1>, vector<64x128xf32>
    %80 = arith.addf %67, %79 : vector<64x128xf32>
    %c8_55 = arith.constant 8 : index
    %c0_56 = arith.constant 0 : index
    %81 = vector.load %arg12[%c8_55, %c0_56] : memref<96x128xf32, #tpu.memory_space<vmem>>, vector<64x128xf32>
    %c16_57 = arith.constant 16 : index
    %c0_58 = arith.constant 0 : index
    %82 = vector.load %arg12[%c16_57, %c0_58] : memref<96x128xf32, #tpu.memory_space<vmem>>, vector<64x128xf32>
    %c24_59 = arith.constant 24 : index
    %c0_60 = arith.constant 0 : index
    %83 = vector.load %arg12[%c24_59, %c0_60] : memref<96x128xf32, #tpu.memory_space<vmem>>, vector<64x128xf32>
    %84 = tpu.concatenate %81, %82, %83 in 1 : vector<64x128xf32>, vector<64x128xf32>, vector<64x128xf32> -> vector<64x384xf32>
    %85 = arith.truncf %84 : vector<64x384xf32> to vector<64x384xbf16>
    %c1_61 = arith.constant 1 : index
    %c0_62 = arith.constant 0 : index
    %c0_63 = arith.constant 0 : index
    %86 = vector.load %arg3[%c1_61, %c0_62, %c0_63] : memref<3x384x128xbf16, #tpu.memory_space<vmem>>, vector<1x384x128xbf16>
    %87 = vector.shape_cast %86 : vector<1x384x128xbf16> to vector<384x128xbf16>
    %cst_64 = arith.constant dense<0.000000e+00> : vector<64x128xf32>
    %88 = tpu.matmul %85, %87, %cst_64 {dimension_numbers = #tpu.dot_dimension_numbers<[1], [0], [0], [1], [0, 0, 1, 1], [], []>} : vector<64x384xbf16>, vector<384x128xbf16>, vector<64x128xf32> -> vector<64x128xf32>
    %89 = arith.addf %80, %88 : vector<64x128xf32>
    %c9_65 = arith.constant 9 : index
    %c0_66 = arith.constant 0 : index
    %90 = vector.load %arg12[%c9_65, %c0_66] : memref<96x128xf32, #tpu.memory_space<vmem>>, vector<64x128xf32>
    %c17_67 = arith.constant 17 : index
    %c0_68 = arith.constant 0 : index
    %91 = vector.load %arg12[%c17_67, %c0_68] : memref<96x128xf32, #tpu.memory_space<vmem>>, vector<64x128xf32>
    %c25_69 = arith.constant 25 : index
    %c0_70 = arith.constant 0 : index
    %92 = vector.load %arg12[%c25_69, %c0_70] : memref<96x128xf32, #tpu.memory_space<vmem>>, vector<64x128xf32>
    %93 = tpu.concatenate %90, %91, %92 in 1 : vector<64x128xf32>, vector<64x128xf32>, vector<64x128xf32> -> vector<64x384xf32>
    %94 = arith.truncf %93 : vector<64x384xf32> to vector<64x384xbf16>
    %c2_71 = arith.constant 2 : index
    %c0_72 = arith.constant 0 : index
    %c0_73 = arith.constant 0 : index
    %95 = vector.load %arg3[%c2_71, %c0_72, %c0_73] : memref<3x384x128xbf16, #tpu.memory_space<vmem>>, vector<1x384x128xbf16>
    %96 = vector.shape_cast %95 : vector<1x384x128xbf16> to vector<384x128xbf16>
    %cst_74 = arith.constant dense<0.000000e+00> : vector<64x128xf32>
    %97 = tpu.matmul %94, %96, %cst_74 {dimension_numbers = #tpu.dot_dimension_numbers<[1], [0], [0], [1], [0, 0, 1, 1], [], []>} : vector<64x384xbf16>, vector<384x128xbf16>, vector<64x128xf32> -> vector<64x128xf32>
    %cst_75 = arith.constant 0.000000e+00 : f32
    %98 = vector.shape_cast %5 : vector<64x1xi1> to vector<64x1xi1>
    %99 = vector.broadcast %98 : vector<64x1xi1> to vector<64x128xi1>
    %100 = vector.broadcast %cst_75 : f32 to vector<64x128xf32>
    %101 = arith.select %99, %100, %97 : vector<64x128xi1>, vector<64x128xf32>
    %102 = arith.addf %89, %101 : vector<64x128xf32>
    %c0_76 = arith.constant 0 : index
    %c0_77 = arith.constant 0 : index
    %103 = vector.load %arg7[%c0_76, %c0_77] : memref<1x128xf32, #tpu.memory_space<vmem>>, vector<1x128xf32>
    %104 = vector.broadcast %103 : vector<1x128xf32> to vector<64x128xf32>
    %105 = arith.mulf %102, %104 : vector<64x128xf32>
    %c0_78 = arith.constant 0 : index
    %c0_79 = arith.constant 0 : index
    %106 = vector.load %arg8[%c0_78, %c0_79] : memref<1x128xf32, #tpu.memory_space<vmem>>, vector<1x128xf32>
    %107 = vector.broadcast %106 : vector<1x128xf32> to vector<64x128xf32>
    %108 = arith.addf %105, %107 : vector<64x128xf32>
    %cst_80 = arith.constant 0.000000e+00 : f32
    %109 = vector.broadcast %cst_80 : f32 to vector<64x128xf32>
    %110 = arith.cmpf ogt, %108, %109 : vector<64x128xf32>
    %cst_81 = arith.constant 0.00999999977 : f32
    %111 = vector.broadcast %cst_81 : f32 to vector<64x128xf32>
    %112 = arith.mulf %111, %108 : vector<64x128xf32>
    %113 = arith.select %110, %108, %112 : vector<64x128xi1>, vector<64x128xf32>
    %c16_82 = arith.constant 16 : index
    %c0_83 = arith.constant 0 : index
    %114 = vector.load %arg12[%c16_82, %c0_83] : memref<96x128xf32, #tpu.memory_space<vmem>>, vector<64x128xf32>
    tpu.vector_store %arg12[%c16_82, %c0_83], %113 {strides = array<i32>} : memref<96x128xf32, #tpu.memory_space<vmem>>, vector<64x128xf32>,
    %cst_84 = arith.constant 0.000000e+00 : f32
    %115 = vector.broadcast %cst_84 : f32 to vector<64x128xf32>
    %c7_85 = arith.constant 7 : index
    %c0_86 = arith.constant 0 : index
    %116 = vector.load %arg12[%c7_85, %c0_86] : memref<96x128xf32, #tpu.memory_space<vmem>>, vector<64x128xf32>
    %c15_87 = arith.constant 15 : index
    %c0_88 = arith.constant 0 : index
    %117 = vector.load %arg12[%c15_87, %c0_88] : memref<96x128xf32, #tpu.memory_space<vmem>>, vector<64x128xf32>
    %c23_89 = arith.constant 23 : index
    %c0_90 = arith.constant 0 : index
    %118 = vector.load %arg12[%c23_89, %c0_90] : memref<96x128xf32, #tpu.memory_space<vmem>>, vector<64x128xf32>
    %119 = tpu.concatenate %116, %117, %118 in 1 : vector<64x128xf32>, vector<64x128xf32>, vector<64x128xf32> -> vector<64x384xf32>
    %120 = arith.truncf %119 : vector<64x384xf32> to vector<64x384xbf16>
    %c0_91 = arith.constant 0 : index
    %c0_92 = arith.constant 0 : index
    %c0_93 = arith.constant 0 : index
    %121 = vector.load %arg4[%c0_91, %c0_92, %c0_93] : memref<3x384x128xbf16, #tpu.memory_space<vmem>>, vector<1x384x128xbf16>
    %122 = vector.shape_cast %121 : vector<1x384x128xbf16> to vector<384x128xbf16>
    %cst_94 = arith.constant dense<0.000000e+00> : vector<64x128xf32>
    %123 = tpu.matmul %120, %122, %cst_94 {dimension_numbers = #tpu.dot_dimension_numbers<[1], [0], [0], [1], [0, 0, 1, 1], [], []>} : vector<64x384xbf16>, vector<384x128xbf16>, vector<64x128xf32> -> vector<64x128xf32>
    %cst_95 = arith.constant 0.000000e+00 : f32
    %124 = vector.shape_cast %3 : vector<64x1xi1> to vector<64x1xi1>
    %125 = vector.broadcast %124 : vector<64x1xi1> to vector<64x128xi1>
    %126 = vector.broadcast %cst_95 : f32 to vector<64x128xf32>
    %127 = arith.select %125, %126, %123 : vector<64x128xi1>, vector<64x128xf32>
    %128 = arith.addf %115, %127 : vector<64x128xf32>
    %c8_96 = arith.constant 8 : index
    %c0_97 = arith.constant 0 : index
    %129 = vector.load %arg12[%c8_96, %c0_97] : memref<96x128xf32, #tpu.memory_space<vmem>>, vector<64x128xf32>
    %c16_98 = arith.constant 16 : index
    %c0_99 = arith.constant 0 : index
    %130 = vector.load %arg12[%c16_98, %c0_99] : memref<96x128xf32, #tpu.memory_space<vmem>>, vector<64x128xf32>
    %c24_100 = arith.constant 24 : index
    %c0_101 = arith.constant 0 : index
    %131 = vector.load %arg12[%c24_100, %c0_101] : memref<96x128xf32, #tpu.memory_space<vmem>>, vector<64x128xf32>
    %132 = tpu.concatenate %129, %130, %131 in 1 : vector<64x128xf32>, vector<64x128xf32>, vector<64x128xf32> -> vector<64x384xf32>
    %133 = arith.truncf %132 : vector<64x384xf32> to vector<64x384xbf16>
    %c1_102 = arith.constant 1 : index
    %c0_103 = arith.constant 0 : index
    %c0_104 = arith.constant 0 : index
    %134 = vector.load %arg4[%c1_102, %c0_103, %c0_104] : memref<3x384x128xbf16, #tpu.memory_space<vmem>>, vector<1x384x128xbf16>
    %135 = vector.shape_cast %134 : vector<1x384x128xbf16> to vector<384x128xbf16>
    %cst_105 = arith.constant dense<0.000000e+00> : vector<64x128xf32>
    %136 = tpu.matmul %133, %135, %cst_105 {dimension_numbers = #tpu.dot_dimension_numbers<[1], [0], [0], [1], [0, 0, 1, 1], [], []>} : vector<64x384xbf16>, vector<384x128xbf16>, vector<64x128xf32> -> vector<64x128xf32>
    %137 = arith.addf %128, %136 : vector<64x128xf32>
    %c9_106 = arith.constant 9 : index
    %c0_107 = arith.constant 0 : index
    %138 = vector.load %arg12[%c9_106, %c0_107] : memref<96x128xf32, #tpu.memory_space<vmem>>, vector<64x128xf32>
    %c17_108 = arith.constant 17 : index
    %c0_109 = arith.constant 0 : index
    %139 = vector.load %arg12[%c17_108, %c0_109] : memref<96x128xf32, #tpu.memory_space<vmem>>, vector<64x128xf32>
    %c25_110 = arith.constant 25 : index
    %c0_111 = arith.constant 0 : index
    %140 = vector.load %arg12[%c25_110, %c0_111] : memref<96x128xf32, #tpu.memory_space<vmem>>, vector<64x128xf32>
    %141 = tpu.concatenate %138, %139, %140 in 1 : vector<64x128xf32>, vector<64x128xf32>, vector<64x128xf32> -> vector<64x384xf32>
    %142 = arith.truncf %141 : vector<64x384xf32> to vector<64x384xbf16>
    %c2_112 = arith.constant 2 : index
    %c0_113 = arith.constant 0 : index
    %c0_114 = arith.constant 0 : index
    %143 = vector.load %arg4[%c2_112, %c0_113, %c0_114] : memref<3x384x128xbf16, #tpu.memory_space<vmem>>, vector<1x384x128xbf16>
    %144 = vector.shape_cast %143 : vector<1x384x128xbf16> to vector<384x128xbf16>
    %cst_115 = arith.constant dense<0.000000e+00> : vector<64x128xf32>
    %145 = tpu.matmul %142, %144, %cst_115 {dimension_numbers = #tpu.dot_dimension_numbers<[1], [0], [0], [1], [0, 0, 1, 1], [], []>} : vector<64x384xbf16>, vector<384x128xbf16>, vector<64x128xf32> -> vector<64x128xf32>
    %cst_116 = arith.constant 0.000000e+00 : f32
    %146 = vector.shape_cast %5 : vector<64x1xi1> to vector<64x1xi1>
    %147 = vector.broadcast %146 : vector<64x1xi1> to vector<64x128xi1>
    %148 = vector.broadcast %cst_116 : f32 to vector<64x128xf32>
    %149 = arith.select %147, %148, %145 : vector<64x128xi1>, vector<64x128xf32>
    %150 = arith.addf %137, %149 : vector<64x128xf32>
    %c0_117 = arith.constant 0 : index
    %c0_118 = arith.constant 0 : index
    %151 = vector.load %arg9[%c0_117, %c0_118] : memref<1x128xf32, #tpu.memory_space<vmem>>, vector<1x128xf32>
    %152 = vector.broadcast %151 : vector<1x128xf32> to vector<64x128xf32>
    %153 = arith.mulf %150, %152 : vector<64x128xf32>
    %c0_119 = arith.constant 0 : index
    %c0_120 = arith.constant 0 : index
    %154 = vector.load %arg10[%c0_119, %c0_120] : memref<1x128xf32, #tpu.memory_space<vmem>>, vector<1x128xf32>
    %155 = vector.broadcast %154 : vector<1x128xf32> to vector<64x128xf32>
    %156 = arith.addf %153, %155 : vector<64x128xf32>
    %c0_121 = arith.constant 0 : index
    %c0_122 = arith.constant 0 : index
    %157 = vector.load %arg13[%c0_121, %c0_122] : memref<64x128xf32, #tpu.memory_space<vmem>>, vector<64x128xf32>
    %158 = arith.addf %156, %157 : vector<64x128xf32>
    %cst_123 = arith.constant 0.000000e+00 : f32
    %159 = vector.broadcast %cst_123 : f32 to vector<64x128xf32>
    %160 = arith.cmpf ogt, %158, %159 : vector<64x128xf32>
    %cst_124 = arith.constant 0.00999999977 : f32
    %161 = vector.broadcast %cst_124 : f32 to vector<64x128xf32>
    %162 = arith.mulf %161, %158 : vector<64x128xf32>
    %163 = arith.select %160, %158, %162 : vector<64x128xi1>, vector<64x128xf32>
    %c0_125 = arith.constant 0 : index
    %c0_126 = arith.constant 0 : index
    %c0_127 = arith.constant 0 : index
    %164 = vector.load %arg11[%c0_125, %c0_126, %c0_127] : memref<1x64x128xf32, #tpu.memory_space<vmem>>, vector<1x64x128xf32>
    %165 = vector.shape_cast %164 : vector<1x64x128xf32> to vector<64x128xf32>
    %166 = vector.shape_cast %163 : vector<64x128xf32> to vector<1x64x128xf32>
    tpu.vector_store %arg11[%c0_125, %c0_126, %c0_127], %166 {strides = array<i32>} : memref<1x64x128xf32, #tpu.memory_space<vmem>>, vector<1x64x128xf32>,
    return
  }
  func.func @transform_0(%arg0: i32) -> (i32, i32, i32) {
    %c0_i32 = arith.constant 0 : i32
    %c0_i32_0 = arith.constant 0 : i32
    %c0_i32_1 = arith.constant 0 : i32
    return %arg0, %c0_i32, %c0_i32_0 : i32, i32, i32
  }
  func.func @transform_1(%arg0: i32) -> (i32, i32, i32) {
    %c0_i32 = arith.constant 0 : i32
    %c0_i32_0 = arith.constant 0 : i32
    %c0_i32_1 = arith.constant 0 : i32
    %c0_i32_2 = arith.constant 0 : i32
    return %c0_i32, %c0_i32_0, %c0_i32_1 : i32, i32, i32
  }
  func.func @transform_2(%arg0: i32) -> (i32, i32, i32) {
    %c0_i32 = arith.constant 0 : i32
    %c0_i32_0 = arith.constant 0 : i32
    %c0_i32_1 = arith.constant 0 : i32
    %c0_i32_2 = arith.constant 0 : i32
    return %c0_i32, %c0_i32_0, %c0_i32_1 : i32, i32, i32
  }
  func.func @transform_3(%arg0: i32) -> (i32, i32, i32) {
    %c0_i32 = arith.constant 0 : i32
    %c0_i32_0 = arith.constant 0 : i32
    %c0_i32_1 = arith.constant 0 : i32
    %c0_i32_2 = arith.constant 0 : i32
    return %c0_i32, %c0_i32_0, %c0_i32_1 : i32, i32, i32
  }
  func.func @transform_4(%arg0: i32) -> (i32, i32) {
    %c0_i32 = arith.constant 0 : i32
    %c0_i32_0 = arith.constant 0 : i32
    %c0_i32_1 = arith.constant 0 : i32
    return %c0_i32, %c0_i32_0 : i32, i32
  }
  func.func @transform_5(%arg0: i32) -> (i32, i32) {
    %c0_i32 = arith.constant 0 : i32
    %c0_i32_0 = arith.constant 0 : i32
    %c0_i32_1 = arith.constant 0 : i32
    return %c0_i32, %c0_i32_0 : i32, i32
  }
  func.func @transform_6(%arg0: i32) -> (i32, i32) {
    %c0_i32 = arith.constant 0 : i32
    %c0_i32_0 = arith.constant 0 : i32
    %c0_i32_1 = arith.constant 0 : i32
    return %c0_i32, %c0_i32_0 : i32, i32
  }
  func.func @transform_7(%arg0: i32) -> (i32, i32) {
    %c0_i32 = arith.constant 0 : i32
    %c0_i32_0 = arith.constant 0 : i32
    %c0_i32_1 = arith.constant 0 : i32
    return %c0_i32, %c0_i32_0 : i32, i32
  }
  func.func @transform_8(%arg0: i32) -> (i32, i32) {
    %c0_i32 = arith.constant 0 : i32
    %c0_i32_0 = arith.constant 0 : i32
    %c0_i32_1 = arith.constant 0 : i32
    return %c0_i32, %c0_i32_0 : i32, i32
  }
  func.func @transform_9(%arg0: i32) -> (i32, i32) {
    %c0_i32 = arith.constant 0 : i32
    %c0_i32_0 = arith.constant 0 : i32
    %c0_i32_1 = arith.constant 0 : i32
    return %c0_i32, %c0_i32_0 : i32, i32
  }
  func.func @transform_10(%arg0: i32) -> (i32, i32, i32) {
    %c0_i32 = arith.constant 0 : i32
    %c0_i32_0 = arith.constant 0 : i32
    %c0_i32_1 = arith.constant 0 : i32
    return %arg0, %c0_i32, %c0_i32_0 : i32, i32, i32
  }
}

</mosaic_0001>

<llo_original>
// kernel: tpu_custom_call.1
$region0: #{tpu_custom_call.1}
  #allocation0 [shape = 'u32[]', space=smem, size = 0x4, offset = 0x4, fixed_abs, tag = 'smem constant byte address 0x4 - core index']
  #allocation1 [shape = 'u32[144,128]{1,0:T(1,128)}', space=vmem, size = 0x12000, scoped, tag = 'internal scratch']
  #allocation2 [shape = 'f32[96,128]{1,0:T(8,128)}', space=vmem, size = 0xc000, scoped, tag = 'scratch operand']
  #allocation3 [shape = 'f32[64,128]{1,0:T(8,128)}', space=vmem, size = 0x8000, scoped, tag = 'scratch operand']
  %s0 = inlined_call_operand.hbm [shape: f32[2,96,128], index: 0, kind: input, shape index: {}]
  %s1 = inlined_call_operand.hbm [shape: bf16[3,384,128], index: 1, kind: input, shape index: {}]
  %s2 = inlined_call_operand.hbm [shape: bf16[3,384,128], index: 2, kind: input, shape index: {}]
  %s3 = inlined_call_operand.hbm [shape: bf16[3,384,128], index: 3, kind: input, shape index: {}]
  %s4 = inlined_call_operand.vmem [shape: f32[1,128], index: 4, kind: input, shape index: {}]
  %s5 = inlined_call_operand.vmem [shape: f32[1,128], index: 5, kind: input, shape index: {}]
  %s6 = inlined_call_operand.vmem [shape: f32[1,128], index: 6, kind: input, shape index: {}]
  %s7 = inlined_call_operand.vmem [shape: f32[1,128], index: 7, kind: input, shape index: {}]
  %s8 = inlined_call_operand.vmem [shape: f32[1,128], index: 8, kind: input, shape index: {}]
  %s9 = inlined_call_operand.vmem [shape: f32[1,128], index: 9, kind: input, shape index: {}]
  %s10 = inlined_call_operand.hbm [shape: f32[2,64,128], index: 10, kind: output, shape index: {}]
  %s11 = sld [smem:[#allocation0]]
  $region89: #{tpu_custom_call.1} parent=0
    _
  %s13 = ssub.s32 1, %s11
  %s14 = scalar_select 0, %s13, %s11
  $region1: #{tpu_custom_call.1} parent=0
    #allocation4 [shape = 'u8[98304]{0}', space=vmem, size = 0x18000, scoped, tag = 'input window, operand 0']
    #allocation5 [shape = 's32[2]{0}', space=sflag, size = 0x8, scoped, tag = 'scoped memory for tpu_custom_call.1']
    #allocation6 [shape = 's32[2]{0}', space=sflag, size = 0x8, scoped, tag = 'scoped memory for tpu_custom_call.1']
    #allocation7 [shape = 'u8[294912]{0}', space=vmem, size = 0x48000, scoped, tag = 'input window, operand 1, single buffered']
    #allocation8 [shape = 's32[1]{0}', space=sflag, size = 0x4, scoped, tag = 'scoped memory for tpu_custom_call.1']
    #allocation9 [shape = 'u8[294912]{0}', space=vmem, size = 0x48000, scoped, tag = 'input window, operand 2, single buffered']
    #allocation10 [shape = 'u8[294912]{0}', space=vmem, size = 0x48000, scoped, tag = 'input window, operand 3, single buffered']
    #allocation11 [shape = 's32[1]{0}', space=sflag, size = 0x4, scoped, tag = 'scoped memory for tpu_custom_call.1']
    #allocation12 [shape = 'u8[65536]{0}', space=vmem, size = 0x10000, scoped, tag = 'output window, operand 0']
    %15 = vsyncpa [#allocation5], 0
    %s16 = scalar_lea.sflag [#allocation5], 1
    %17 = vsyncpa %s16, 0
    %18 = vsyncpa [#allocation8], 0
    %19 = vsyncpa [#allocation11], 0
    %20 = vsyncpa [#allocation6], 0
    %s21 = scalar_lea.sflag [#allocation6], 1
    %22 = vsyncpa %s21, 0
    loop: start=0, step=1, limit=4
    $region2: #{tpu_custom_call.1} parent=1 // loop_pre_header
      _
    $region3: #{tpu_custom_call.1} parent=1 // loop_header
      %s24 = sphi 0, %s28
      %p25 = scmp.ge.s32.totalorder %s24, 4
      %s34 = sphi 0, %s36
      %s37 = sphi 0, %s34
      %s38 = sphi 0, %s37
      %s54 = sphi 0, %s38
      %s58 = sphi 0, %s58
      %s60 = sphi 0, %s58
      %s61 = sphi 0, %s60
      %s75 = sphi 0, %s61
      %s79 = sphi 0, %s79
      %s81 = sphi 0, %s79
      %s82 = sphi 0, %s81
      %s96 = sphi 0, %s82
      %s100 = sphi 0, %s100
      %s102 = sphi 0, %s100
      %s103 = sphi 0, %s102
      %s117 = sphi 0, %s103
      %s121 = sphi 0, %s121
      %s123 = sphi 0, %s121
      %s124 = sphi 0, %s123
      %s138 = sphi 0, %s124
      %s142 = sphi 0, %s142
      %s144 = sphi 0, %s142
      %s145 = sphi 0, %s144
      %s159 = sphi 0, %s145
      %s163 = sphi 0, %s163
      %s165 = sphi 0, %s163
      %s166 = sphi 0, %s165
      %s180 = sphi 0, %s166
      %s184 = sphi 0, %s184
      %s186 = sphi 0, %s184
      %s187 = sphi 0, %s186
      %s201 = sphi 0, %s187
      %s205 = sphi 0, %s205
      %s207 = sphi 0, %s205
      %s208 = sphi 0, %s207
      %s222 = sphi 0, %s208
      %s226 = sphi 0, %s226
      %s228 = sphi 0, %s226
      %s229 = sphi 0, %s228
      %s243 = sphi 0, %s229
      %s249 = sphi 0, %s251
      %s252 = sphi 0, %s249
      %s253 = sphi 0, %s252
      %s269 = sphi 0, %s253
    $region4: #{tpu_custom_call.1} parent=1 // loop_header_branch
      %27 = sbr.rel (%p25) target = $region8
    $region5: #{tpu_custom_call.1} parent=1 // loop_body
      %s29 = ssub.s32 %s24, 1
      %s30 = ssub.s32 %s24, 2
      %s31 = sadd.s32 %s24, 1
      %s32 = ssub.s32 %s24, %s31
      %p33 = scmp.eq.s32.totalorder %s32, 0
      %s35 = sadd.s32 %s34, 1
      %s36 = scalar_select %p33, %s34, %s35
      %p39 = pneg %p33
      %p40 = scmp.eq.s32.totalorder %s24, 1
      %p41 = por %p39, %p40
      %p42 = scmp.ne.s32.totalorder %s34, %s37
      %p43 = scmp.eq.s32.totalorder %s24, 0
      %p44 = por %p42, %p43
      %p45 = scmp.ne.s32.totalorder %s34, %s37
      %p46 = scmp.eq.s32.totalorder %s29, 1
      %p47 = por %p45, %p46
      %p48 = scmp.ne.s32.totalorder %s37, %s38
      %p49 = scmp.eq.s32.totalorder %s29, 0
      %p50 = por %p48, %p49
      %p51 = scmp.ne.s32.totalorder %s37, %s38
      %p52 = scmp.eq.s32.totalorder %s30, 1
      %p53 = por %p51, %p52
      %p55 = scmp.ne.s32.totalorder %s38, %s54
      %p56 = scmp.eq.s32.totalorder %s30, 0
      %p57 = por %p55, %p56
      %s59 = sadd.s32 %s58, 1
      %p62 = scmp.eq.s32.totalorder %s24, 1
      %p63 = scmp.ne.s32.totalorder %s58, %s60
      %p64 = scmp.eq.s32.totalorder %s24, 0
      %p65 = por %p63, %p64
      %p66 = scmp.ne.s32.totalorder %s58, %s60
      %p67 = scmp.eq.s32.totalorder %s29, 1
      %p68 = por %p66, %p67
      %p69 = scmp.ne.s32.totalorder %s60, %s61
      %p70 = scmp.eq.s32.totalorder %s29, 0
      %p71 = por %p69, %p70
      %p72 = scmp.ne.s32.totalorder %s60, %s61
      %p73 = scmp.eq.s32.totalorder %s30, 1
      %p74 = por %p72, %p73
      %p76 = scmp.ne.s32.totalorder %s61, %s75
      %p77 = scmp.eq.s32.totalorder %s30, 0
      %p78 = por %p76, %p77
      %s80 = sadd.s32 %s79, 1
      %p83 = scmp.eq.s32.totalorder %s24, 1
      %p84 = scmp.ne.s32.totalorder %s79, %s81
      %p85 = scmp.eq.s32.totalorder %s24, 0
      %p86 = por %p84, %p85
      %p87 = scmp.ne.s32.totalorder %s79, %s81
      %p88 = scmp.eq.s32.totalorder %s29, 1
      %p89 = por %p87, %p88
      %p90 = scmp.ne.s32.totalorder %s81, %s82
      %p91 = scmp.eq.s32.totalorder %s29, 0
      %p92 = por %p90, %p91
      %p93 = scmp.ne.s32.totalorder %s81, %s82
      %p94 = scmp.eq.s32.totalorder %s30, 1
      %p95 = por %p93, %p94
      %p97 = scmp.ne.s32.totalorder %s82, %s96
      %p98 = scmp.eq.s32.totalorder %s30, 0
      %p99 = por %p97, %p98
      %s101 = sadd.s32 %s100, 1
      %p104 = scmp.eq.s32.totalorder %s24, 1
      %p105 = scmp.ne.s32.totalorder %s100, %s102
      %p106 = scmp.eq.s32.totalorder %s24, 0
      %p107 = por %p105, %p106
      %p108 = scmp.ne.s32.totalorder %s100, %s102
      %p109 = scmp.eq.s32.totalorder %s29, 1
      %p110 = por %p108, %p109
      %p111 = scmp.ne.s32.totalorder %s102, %s103
      %p112 = scmp.eq.s32.totalorder %s29, 0
      %p113 = por %p111, %p112
      %p114 = scmp.ne.s32.totalorder %s102, %s103
      %p115 = scmp.eq.s32.totalorder %s30, 1
      %p116 = por %p114, %p115
      %p118 = scmp.ne.s32.totalorder %s103, %s117
      %p119 = scmp.eq.s32.totalorder %s30, 0
      %p120 = por %p118, %p119
      %s122 = sadd.s32 %s121, 1
      %p125 = scmp.eq.s32.totalorder %s24, 1
      %p126 = scmp.ne.s32.totalorder %s121, %s123
      %p127 = scmp.eq.s32.totalorder %s24, 0
      %p128 = por %p126, %p127
      %p129 = scmp.ne.s32.totalorder %s121, %s123
      %p130 = scmp.eq.s32.totalorder %s29, 1
      %p131 = por %p129, %p130
      %p132 = scmp.ne.s32.totalorder %s123, %s124
      %p133 = scmp.eq.s32.totalorder %s29, 0
      %p134 = por %p132, %p133
      %p135 = scmp.ne.s32.totalorder %s123, %s124
      %p136 = scmp.eq.s32.totalorder %s30, 1
      %p137 = por %p135, %p136
      %p139 = scmp.ne.s32.totalorder %s124, %s138
      %p140 = scmp.eq.s32.totalorder %s30, 0
      %p141 = por %p139, %p140
      %s143 = sadd.s32 %s142, 1
      %p146 = scmp.eq.s32.totalorder %s24, 1
      %p147 = scmp.ne.s32.totalorder %s142, %s144
      %p148 = scmp.eq.s32.totalorder %s24, 0
      %p149 = por %p147, %p148
      %p150 = scmp.ne.s32.totalorder %s142, %s144
      %p151 = scmp.eq.s32.totalorder %s29, 1
      %p152 = por %p150, %p151
      %p153 = scmp.ne.s32.totalorder %s144, %s145
      %p154 = scmp.eq.s32.totalorder %s29, 0
      %p155 = por %p153, %p154
      %p156 = scmp.ne.s32.totalorder %s144, %s145
      %p157 = scmp.eq.s32.totalorder %s30, 1
      %p158 = por %p156, %p157
      %p160 = scmp.ne.s32.totalorder %s145, %s159
      %p161 = scmp.eq.s32.totalorder %s30, 0
      %p162 = por %p160, %p161
      %s164 = sadd.s32 %s163, 1
      %p167 = scmp.eq.s32.totalorder %s24, 1
      %p168 = scmp.ne.s32.totalorder %s163, %s165
      %p169 = scmp.eq.s32.totalorder %s24, 0
      %p170 = por %p168, %p169
      %p171 = scmp.ne.s32.totalorder %s163, %s165
      %p172 = scmp.eq.s32.totalorder %s29, 1
      %p173 = por %p171, %p172
      %p174 = scmp.ne.s32.totalorder %s165, %s166
      %p175 = scmp.eq.s32.totalorder %s29, 0
      %p176 = por %p174, %p175
      %p177 = scmp.ne.s32.totalorder %s165, %s166
      %p178 = scmp.eq.s32.totalorder %s30, 1
      %p179 = por %p177, %p178
      %p181 = scmp.ne.s32.totalorder %s166, %s180
      %p182 = scmp.eq.s32.totalorder %s30, 0
      %p183 = por %p181, %p182
      %s185 = sadd.s32 %s184, 1
      %p188 = scmp.eq.s32.totalorder %s24, 1
      %p189 = scmp.ne.s32.totalorder %s184, %s186
      %p190 = scmp.eq.s32.totalorder %s24, 0
      %p191 = por %p189, %p190
      %p192 = scmp.ne.s32.totalorder %s184, %s186
      %p193 = scmp.eq.s32.totalorder %s29, 1
      %p194 = por %p192, %p193
      %p195 = scmp.ne.s32.totalorder %s186, %s187
      %p196 = scmp.eq.s32.totalorder %s29, 0
      %p197 = por %p195, %p196
      %p198 = scmp.ne.s32.totalorder %s186, %s187
      %p199 = scmp.eq.s32.totalorder %s30, 1
      %p200 = por %p198, %p199
      %p202 = scmp.ne.s32.totalorder %s187, %s201
      %p203 = scmp.eq.s32.totalorder %s30, 0
      %p204 = por %p202, %p203
      %s206 = sadd.s32 %s205, 1
      %p209 = scmp.eq.s32.totalorder %s24, 1
      %p210 = scmp.ne.s32.totalorder %s205, %s207
      %p211 = scmp.eq.s32.totalorder %s24, 0
      %p212 = por %p210, %p211
      %p213 = scmp.ne.s32.totalorder %s205, %s207
      %p214 = scmp.eq.s32.totalorder %s29, 1
      %p215 = por %p213, %p214
      %p216 = scmp.ne.s32.totalorder %s207, %s208
      %p217 = scmp.eq.s32.totalorder %s29, 0
      %p218 = por %p216, %p217
      %p219 = scmp.ne.s32.totalorder %s207, %s208
      %p220 = scmp.eq.s32.totalorder %s30, 1
      %p221 = por %p219, %p220
      %p223 = scmp.ne.s32.totalorder %s208, %s222
      %p224 = scmp.eq.s32.totalorder %s30, 0
      %p225 = por %p223, %p224
      %s227 = sadd.s32 %s226, 1
      %p230 = scmp.eq.s32.totalorder %s24, 1
      %p231 = scmp.ne.s32.totalorder %s226, %s228
      %p232 = scmp.eq.s32.totalorder %s24, 0
      %p233 = por %p231, %p232
      %p234 = scmp.ne.s32.totalorder %s226, %s228
      %p235 = scmp.eq.s32.totalorder %s29, 1
      %p236 = por %p234, %p235
      %p237 = scmp.ne.s32.totalorder %s228, %s229
      %p238 = scmp.eq.s32.totalorder %s29, 0
      %p239 = por %p237, %p238
      %p240 = scmp.ne.s32.totalorder %s228, %s229
      %p241 = scmp.eq.s32.totalorder %s30, 1
      %p242 = por %p240, %p241
      %p244 = scmp.ne.s32.totalorder %s229, %s243
      %p245 = scmp.eq.s32.totalorder %s30, 0
      %p246 = por %p244, %p245
      %s247 = ssub.s32 %s24, %s31
      %p248 = scmp.eq.s32.totalorder %s247, 0
      %s250 = sadd.s32 %s249, 1
      %s251 = scalar_select %p248, %s249, %s250
      %p254 = pneg %p248
      %p255 = scmp.eq.s32.totalorder %s24, 1
      %p256 = por %p254, %p255
      %p257 = scmp.ne.s32.totalorder %s249, %s252
      %p258 = scmp.eq.s32.totalorder %s24, 0
      %p259 = por %p257, %p258
      %p260 = scmp.ne.s32.totalorder %s249, %s252
      %p261 = scmp.eq.s32.totalorder %s29, 1
      %p262 = por %p260, %p261
      %p263 = scmp.ne.s32.totalorder %s252, %s253
      %p264 = scmp.eq.s32.totalorder %s29, 0
      %p265 = por %p263, %p264
      %p266 = scmp.ne.s32.totalorder %s252, %s253
      %p267 = scmp.eq.s32.totalorder %s30, 1
      %p268 = por %p266, %p267
      %p270 = scmp.ne.s32.totalorder %s253, %s269
      %p271 = scmp.eq.s32.totalorder %s30, 0
      %p272 = por %p270, %p271
      %p273 = scmp.le.s32.totalorder 1, %s24
      %p274 = scmp.lt.s32.totalorder %s24, 3
      %p275 = pnand %p273, %p274
      %p276 = pneg %p275
      // Predicated region
      $region9: #{tpu_custom_call.1} parent=5 // pred_check
        _
      $region10: #{tpu_custom_call.1} parent=5 // pred_check_branch
        %278 = sbr.rel (%p275) target = $region12
      $region11: #{tpu_custom_call.1} parent=5 // pred_region
        %s279 = ssub.s32 %s24, 1
        // Predicated region
        $region13: #{tpu_custom_call.1} parent=11 // pred_check
          %p280 = pneg %p71
        $region14: #{tpu_custom_call.1} parent=11 // pred_check_branch
          %282 = sbr.rel (%p280) target = $region16
        $region15: #{tpu_custom_call.1} parent=11 // pred_region
          %s284 = ssub.s32 9216, 9216
          %285 = vsyncadd [#allocation8], %s284
          %s286 = sshll.u32 [#allocation7], 4
          %s287 = int_to_ptr.vmem [resolvable:$true] %s286
          %292 = dma.hbm_to_vmem [thread:$0]  %s1, 9216, %s287, [#allocation8], 64, 64, 4
        $region16: #{tpu_custom_call.1} parent=11 // pred_fallthru
          _
        // Predicated region
        $region17: #{tpu_custom_call.1} parent=11 // pred_check
          %p293 = pneg %p92
        $region18: #{tpu_custom_call.1} parent=11 // pred_check_branch
          %295 = sbr.rel (%p293) target = $region20
        $region19: #{tpu_custom_call.1} parent=11 // pred_region
          %s297 = ssub.s32 9216, 9216
          %298 = vsyncadd [#allocation8], %s297
          %s299 = sshll.u32 [#allocation9], 4
          %s300 = int_to_ptr.vmem [resolvable:$true] %s299
          %305 = dma.hbm_to_vmem [thread:$0]  %s2, 9216, %s300, [#allocation8], 64, 64, 4
        $region20: #{tpu_custom_call.1} parent=11 // pred_fallthru
          _
        // Predicated region
        $region21: #{tpu_custom_call.1} parent=11 // pred_check
          %p306 = pneg %p113
        $region22: #{tpu_custom_call.1} parent=11 // pred_check_branch
          %308 = sbr.rel (%p306) target = $region24
        $region23: #{tpu_custom_call.1} parent=11 // pred_region
          %s310 = ssub.s32 9216, 9216
          %311 = vsyncadd [#allocation11], %s310
          %s312 = sshll.u32 [#allocation10], 4
          %s313 = int_to_ptr.vmem [resolvable:$true] %s312
          %318 = dma.hbm_to_vmem [thread:$0]  %s3, 9216, %s313, [#allocation11], 64, 64, 4
        $region24: #{tpu_custom_call.1} parent=11 // pred_fallthru
          _
        // Predicated region
        $region25: #{tpu_custom_call.1} parent=11 // pred_check
          %p319 = pneg %p134
        $region26: #{tpu_custom_call.1} parent=11 // pred_check_branch
          %321 = sbr.rel (%p319) target = $region28
        $region27: #{tpu_custom_call.1} parent=11 // pred_region
          _
        $region28: #{tpu_custom_call.1} parent=11 // pred_fallthru
          _
        // Predicated region
        $region29: #{tpu_custom_call.1} parent=11 // pred_check
          %p322 = pneg %p155
        $region30: #{tpu_custom_call.1} parent=11 // pred_check_branch
          %324 = sbr.rel (%p322) target = $region32
        $region31: #{tpu_custom_call.1} parent=11 // pred_region
          _
        $region32: #{tpu_custom_call.1} parent=11 // pred_fallthru
          _
        // Predicated region
        $region33: #{tpu_custom_call.1} parent=11 // pred_check
          %p325 = pneg %p176
        $region34: #{tpu_custom_call.1} parent=11 // pred_check_branch
          %327 = sbr.rel (%p325) target = $region36
        $region35: #{tpu_custom_call.1} parent=11 // pred_region
          _
        $region36: #{tpu_custom_call.1} parent=11 // pred_fallthru
          _
        // Predicated region
        $region37: #{tpu_custom_call.1} parent=11 // pred_check
          %p328 = pneg %p197
        $region38: #{tpu_custom_call.1} parent=11 // pred_check_branch
          %330 = sbr.rel (%p328) target = $region40
        $region39: #{tpu_custom_call.1} parent=11 // pred_region
          _
        $region40: #{tpu_custom_call.1} parent=11 // pred_fallthru
          _
        // Predicated region
        $region41: #{tpu_custom_call.1} parent=11 // pred_check
          %p331 = pneg %p218
        $region42: #{tpu_custom_call.1} parent=11 // pred_check_branch
          %333 = sbr.rel (%p331) target = $region44
        $region43: #{tpu_custom_call.1} parent=11 // pred_region
          _
        $region44: #{tpu_custom_call.1} parent=11 // pred_fallthru
          _
        // Predicated region
        $region45: #{tpu_custom_call.1} parent=11 // pred_check
          %p334 = pneg %p239
        $region46: #{tpu_custom_call.1} parent=11 // pred_check_branch
          %336 = sbr.rel (%p334) target = $region48
        $region47: #{tpu_custom_call.1} parent=11 // pred_region
          _
        $region48: #{tpu_custom_call.1} parent=11 // pred_fallthru
          _
      $region12: #{tpu_custom_call.1} parent=5 // pred_fallthru
        _
      %p337 = scmp.lt.s32.totalorder %s24, 2
      // Predicated region
      $region49: #{tpu_custom_call.1} parent=5 // pred_check
        %p338 = pneg %p337
      $region50: #{tpu_custom_call.1} parent=5 // pred_check_branch
        %340 = sbr.rel (%p338) target = $region52
      $region51: #{tpu_custom_call.1} parent=5 // pred_region
        // Predicated region
        $region53: #{tpu_custom_call.1} parent=51 // pred_check
          %p341 = pneg %p44
        $region54: #{tpu_custom_call.1} parent=51 // pred_check_branch
          %343 = sbr.rel (%p341) target = $region56
        $region55: #{tpu_custom_call.1} parent=51 // pred_region
          %s344 = sand.u32 %s34, 1
          %s345 = scalar_lea.sflag [#allocation5], %s344
          %s346 = sand.u32 %s34, 1
          %s347 = smul.addr %s346, 96
          %s348 = scalar_lea.vmem [#allocation4], %s347
          %s350 = ssub.s32 1536, 1536
          %351 = vsyncadd %s345, %s350
          %s352 = smul.addr %s24, 12
          %s353 = smul.addr %s352, 128
          %s354 = scalar_lea.hbm %s0, %s353
          %s355 = sshll.u32 %s348, 4
          %s356 = int_to_ptr.vmem [resolvable:$true] %s355
          %361 = dma.hbm_to_vmem [thread:$0]  %s354, 1536, %s356, %s345, 128, 128, 8
        $region56: #{tpu_custom_call.1} parent=51 // pred_fallthru
          _
      $region52: #{tpu_custom_call.1} parent=5 // pred_fallthru
        _
      %p362 = scmp.le.s32.totalorder 1, %s24
      %p363 = scmp.lt.s32.totalorder %s24, 3
      %p364 = pnand %p362, %p363
      %p365 = pneg %p364
      // Predicated region
      $region57: #{tpu_custom_call.1} parent=5 // pred_check
        _
      $region58: #{tpu_custom_call.1} parent=5 // pred_check_branch
        %367 = sbr.rel (%p364) target = $region60
      $region59: #{tpu_custom_call.1} parent=5 // pred_region
        %s368 = ssub.s32 %s24, 1
        %s369 = sand.u32 %s37, 1
        %s370 = scalar_lea.sflag [#allocation5], %s369
        %s371 = sand.u32 %s37, 1
        %s372 = smul.addr %s371, 96
        %s373 = scalar_lea.vmem [#allocation4], %s372
        // Predicated region
        $region61: #{tpu_custom_call.1} parent=59 // pred_check
          %p374 = pneg %p50
        $region62: #{tpu_custom_call.1} parent=59 // pred_check_branch
          %376 = sbr.rel (%p374) target = $region64
        $region63: #{tpu_custom_call.1} parent=59 // pred_region
          %377 = dma.done %s370, 1536
        $region64: #{tpu_custom_call.1} parent=59 // pred_fallthru
          _
        // Predicated region
        $region65: #{tpu_custom_call.1} parent=59 // pred_check
          %p378 = pneg %p71
        $region66: #{tpu_custom_call.1} parent=59 // pred_check_branch
          %380 = sbr.rel (%p378) target = $region68
        $region67: #{tpu_custom_call.1} parent=59 // pred_region
          %381 = dma.done [#allocation8], 9216
        $region68: #{tpu_custom_call.1} parent=59 // pred_fallthru
          _
        // Predicated region
        $region69: #{tpu_custom_call.1} parent=59 // pred_check
          %p382 = pneg %p92
        $region70: #{tpu_custom_call.1} parent=59 // pred_check_branch
          %384 = sbr.rel (%p382) target = $region72
        $region71: #{tpu_custom_call.1} parent=59 // pred_region
          %385 = dma.done [#allocation8], 9216
        $region72: #{tpu_custom_call.1} parent=59 // pred_fallthru
          _
        // Predicated region
        $region73: #{tpu_custom_call.1} parent=59 // pred_check
          %p386 = pneg %p113
        $region74: #{tpu_custom_call.1} parent=59 // pred_check_branch
          %388 = sbr.rel (%p386) target = $region76
        $region75: #{tpu_custom_call.1} parent=59 // pred_region
          %389 = dma.done [#allocation11], 9216
        $region76: #{tpu_custom_call.1} parent=59 // pred_fallthru
          _
        %s390 = sand.u32 %s37, 1
        %s391 = scalar_lea.sflag [#allocation5], %s390
        %s392 = sand.u32 %s37, 1
        %s393 = smul.addr %s392, 96
        %s394 = scalar_lea.vmem [#allocation4], %s393
        %p395 = pneg %p50
        %p396 = pneg %p47
        %p397 = pneg %p71
        %p398 = pneg %p68
        %p399 = pneg %p92
        %p400 = pneg %p89
        %p401 = pneg %p113
        %p402 = pneg %p110
        %p403 = pneg %p134
        %p404 = pneg %p131
        %p405 = pneg %p155
        %p406 = pneg %p152
        %p407 = pneg %p176
        %p408 = pneg %p173
        %p409 = pneg %p197
        %p410 = pneg %p194
        %p411 = pneg %p218
        %p412 = pneg %p215
        %p413 = pneg %p239
        %p414 = pneg %p236
        %p415 = pneg %p265
        %p416 = pneg %p262
        %s417 = sand.u32 %s252, 1
        %s418 = scalar_lea.sflag [#allocation6], %s417
        %s419 = sand.u32 %s252, 1
        %s420 = smul.addr %s419, 64
        %s421 = scalar_lea.vmem [#allocation12], %s420
        %v423 = vlaneseq
        %v424 = vshrl.u32 %v423, 7
        %vm425 = vcmp.eq.s32.totalorder %v424, 0
        %vm426 = vcmp.eq.s32.totalorder %v424, 7
        %427 = vst [vmem:[#allocation2] sm:$0xff] 0.0
        %428 = vst [vmem:[#allocation2 + $0x8] sm:$0xff] 0.0
        %429 = vst [vmem:[#allocation2 + $0x50] sm:$0xff] 0.0
        %430 = vst [vmem:[#allocation2 + $0x58] sm:$0xff] 0.0
        %v431 = vld [vmem:[%s373 + $0x7] sm:$0xff]
        %v432 = vld [vmem:[%s373 + $0xf] sm:$0xff]
        %v433 = vld [vmem:[%s373 + $0x17] sm:$0xff]
        %v434 = vld [vmem:[%s373 + $0x1f] sm:$0xff]
        %v435 = vld [vmem:[%s373 + $0x27] sm:$0xff]
        %v436 = vld [vmem:[%s373 + $0x2f] sm:$0xff]
        %v437 = vld [vmem:[%s373 + $0x37] sm:$0xff]
        %v438 = vld [vmem:[%s373 + $0x3f] sm:$0xff]
        %v439 = vld [vmem:[%s373 + $0x47] sm:$0xff]
        %v440 = vld [vmem:[%s373 + $0x4f] sm:$0xff]
        %v441 = vpack.c.bf16 %v432, %v431
        %v442 = vpack.c.bf16 %v433, %v432
        %v443 = vpack.c.bf16 %v434, %v433
        %v444 = vpack.c.bf16 %v435, %v434
        %v445 = vpack.c.bf16 %v436, %v435
        %v446 = vpack.c.bf16 %v437, %v436
        %v447 = vpack.c.bf16 %v438, %v437
        %v448 = vpack.c.bf16 %v439, %v438
        %v449 = vpack.c.bf16 %v440, %v439
        %v450 = vld [vmem:[#allocation7] sm:$0xf]
        %v451 = vld [vmem:[#allocation7 + $0x4] sm:$0xf]
        %v452 = vld [vmem:[#allocation7 + $0x8] sm:$0xf]
        %v453 = vld [vmem:[#allocation7 + $0xc] sm:$0xf]
        %v454 = vld [vmem:[#allocation7 + $0x10] sm:$0xf]
        %v455 = vld [vmem:[#allocation7 + $0x14] sm:$0xf]
        %v456 = vld [vmem:[#allocation7 + $0x18] sm:$0xf]
        %v457 = vld [vmem:[#allocation7 + $0x1c] sm:$0xf]
        %v458 = vld [vmem:[#allocation7 + $0x20] sm:$0xf]
        %v459 = vld [vmem:[#allocation7 + $0x24] sm:$0xf]
        %v460 = vld [vmem:[#allocation7 + $0x28] sm:$0xf]
        %v461 = vld [vmem:[#allocation7 + $0x2c] sm:$0xf]
        %v462 = vld [vmem:[#allocation7 + $0x30] sm:$0xf]
        %v463 = vld [vmem:[#allocation7 + $0x34] sm:$0xf]
        %v464 = vld [vmem:[#allocation7 + $0x38] sm:$0xf]
        %v465 = vld [vmem:[#allocation7 + $0x3c] sm:$0xf]
        %v466 = vld [vmem:[#allocation7 + $0x40] sm:$0xf]
        %v467 = vld [vmem:[#allocation7 + $0x44] sm:$0xf]
        %v468 = vld [vmem:[#allocation7 + $0x48] sm:$0xf]
        %v469 = vld [vmem:[#allocation7 + $0x4c] sm:$0xf]
        %v470 = vld [vmem:[#allocation7 + $0x50] sm:$0xf]
        %v471 = vld [vmem:[#allocation7 + $0x54] sm:$0xf]
        %v472 = vld [vmem:[#allocation7 + $0x58] sm:$0xf]
        %v473 = vld [vmem:[#allocation7 + $0x5c] sm:$0xf]
        %v474 = vld [vmem:[#allocation7 + $0x60] sm:$0xf]
        %v475 = vld [vmem:[#allocation7 + $0x64] sm:$0xf]
        %v476 = vld [vmem:[#allocation7 + $0x68] sm:$0xf]
        %v477 = vld [vmem:[#allocation7 + $0x6c] sm:$0xf]
        %v478 = vld [vmem:[#allocation7 + $0x70] sm:$0xf]
        %v479 = vld [vmem:[#allocation7 + $0x74] sm:$0xf]
        %v480 = vld [vmem:[#allocation7 + $0x78] sm:$0xf]
        %v481 = vld [vmem:[#allocation7 + $0x7c] sm:$0xf]
        %v482 = vld [vmem:[#allocation7 + $0x80] sm:$0xf]
        %v483 = vld [vmem:[#allocation7 + $0x84] sm:$0xf]
        %v484 = vld [vmem:[#allocation7 + $0x88] sm:$0xf]
        %v485 = vld [vmem:[#allocation7 + $0x8c] sm:$0xf]
        %v486 = vld [vmem:[#allocation7 + $0x90] sm:$0xf]
        %v487 = vld [vmem:[#allocation7 + $0x94] sm:$0xf]
        %v488 = vld [vmem:[#allocation7 + $0x98] sm:$0xf]
        %v489 = vld [vmem:[#allocation7 + $0x9c] sm:$0xf]
        %v490 = vld [vmem:[#allocation7 + $0xa0] sm:$0xf]
        %v491 = vld [vmem:[#allocation7 + $0xa4] sm:$0xf]
        %v492 = vld [vmem:[#allocation7 + $0xa8] sm:$0xf]
        %v493 = vld [vmem:[#allocation7 + $0xac] sm:$0xf]
        %v494 = vld [vmem:[#allocation7 + $0xb0] sm:$0xf]
        %v495 = vld [vmem:[#allocation7 + $0xb4] sm:$0xf]
        %v496 = vld [vmem:[#allocation7 + $0xb8] sm:$0xf]
        %v497 = vld [vmem:[#allocation7 + $0xbc] sm:$0xf]
        %v546 = vunpack.c.l.b16 %v450
        %v547 = vunpack.c.l.b16 %v451
        %v548 = vunpack.c.l.b16 %v452
        %v549 = vunpack.c.l.b16 %v453
        %v550 = vunpack.c.l.b16 %v454
        %v551 = vunpack.c.l.b16 %v455
        %v552 = vunpack.c.l.b16 %v456
        %v553 = vunpack.c.l.b16 %v457
        %v554 = vunpack.c.l.b16 %v458
        %v555 = vunpack.c.l.b16 %v459
        %v556 = vunpack.c.l.b16 %v460
        %v557 = vunpack.c.l.b16 %v461
        %v558 = vunpack.c.l.b16 %v462
        %v559 = vunpack.c.l.b16 %v463
        %v560 = vunpack.c.l.b16 %v464
        %v561 = vunpack.c.l.b16 %v465
        %v562 = vunpack.c.l.b16 %v466
        %v563 = vunpack.c.l.b16 %v467
        %v564 = vunpack.c.l.b16 %v468
        %v565 = vunpack.c.l.b16 %v469
        %v566 = vunpack.c.l.b16 %v470
        %v567 = vunpack.c.l.b16 %v471
        %v568 = vunpack.c.l.b16 %v472
        %v569 = vunpack.c.l.b16 %v473
        %v570 = vunpack.c.l.b16 %v474
        %v571 = vunpack.c.l.b16 %v475
        %v572 = vunpack.c.l.b16 %v476
        %v573 = vunpack.c.l.b16 %v477
        %v574 = vunpack.c.l.b16 %v478
        %v575 = vunpack.c.l.b16 %v479
        %v576 = vunpack.c.l.b16 %v480
        %v577 = vunpack.c.l.b16 %v481
        %v578 = vunpack.c.l.b16 %v482
        %v579 = vunpack.c.l.b16 %v483
        %v580 = vunpack.c.l.b16 %v484
        %v581 = vunpack.c.l.b16 %v485
        %v582 = vunpack.c.l.b16 %v486
        %v583 = vunpack.c.l.b16 %v487
        %v584 = vunpack.c.l.b16 %v488
        %v585 = vunpack.c.l.b16 %v489
        %v586 = vunpack.c.l.b16 %v490
        %v587 = vunpack.c.l.b16 %v491
        %v588 = vunpack.c.l.b16 %v492
        %v589 = vunpack.c.l.b16 %v493
        %v590 = vunpack.c.l.b16 %v494
        %v591 = vunpack.c.l.b16 %v495
        %v592 = vunpack.c.l.b16 %v496
        %v593 = vunpack.c.l.b16 %v497
        %v594 = vpack.c.b16 %v547, %v546
        %v595 = vpack.c.b16 %v549, %v548
        %v596 = vpack.c.b16 %v551, %v550
        %v597 = vpack.c.b16 %v553, %v552
        %v598 = vpack.c.b16 %v555, %v554
        %v599 = vpack.c.b16 %v557, %v556
        %v600 = vpack.c.b16 %v559, %v558
        %v601 = vpack.c.b16 %v561, %v560
        %v602 = vpack.c.b16 %v563, %v562
        %v603 = vpack.c.b16 %v565, %v564
        %v604 = vpack.c.b16 %v567, %v566
        %v605 = vpack.c.b16 %v569, %v568
        %v606 = vpack.c.b16 %v571, %v570
        %v607 = vpack.c.b16 %v573, %v572
        %v608 = vpack.c.b16 %v575, %v574
        %v609 = vpack.c.b16 %v577, %v576
        %v610 = vpack.c.b16 %v579, %v578
        %v611 = vpack.c.b16 %v581, %v580
        %v612 = vpack.c.b16 %v583, %v582
        %v613 = vpack.c.b16 %v585, %v584
        %v614 = vpack.c.b16 %v587, %v586
        %v615 = vpack.c.b16 %v589, %v588
        %v616 = vpack.c.b16 %v591, %v590
        %v617 = vpack.c.b16 %v593, %v592
        %642 = vmatprep.subr.bf16.mxu0 0
        %643 = vmatpush1.bf16.msra.mxu0 %v594
        %644 = vmatprep.subr.bf16.mxu0 0
        %645 = vmatpush1.bf16.msra.mxu0 %v595
        %646 = vmatprep.subr.bf16.mxu0 0
        %647 = vmatpush1.bf16.msra.mxu0 %v596
        %648 = vmatprep.subr.bf16.mxu0 0
        %649 = vmatpush1.bf16.msra.mxu0 %v597
        %650 = vmatprep.subr.bf16.mxu0 0
        %651 = vmatpush1.bf16.msra.mxu0 %v598
        %652 = vmatprep.subr.bf16.mxu0 0
        %653 = vmatpush1.bf16.msra.mxu0 %v599
        %654 = vmatprep.subr.bf16.mxu0 0
        %655 = vmatpush1.bf16.msra.mxu0 %v600
        %656 = vmatprep.subr.bf16.mxu0 0
        %657 = vmatpush1.bf16.msra.mxu0 %v601
        %658 = vmatprep.subr.bf16.mxu0 0
        %659 = vmatpush1.bf16.msra.mxu0 %v602
        %660 = vmatprep.subr.bf16.mxu0 0
        %661 = vmatpush1.bf16.msra.mxu0 %v603
        %662 = vmatprep.subr.bf16.mxu0 0
        %663 = vmatpush1.bf16.msra.mxu0 %v604
        %664 = vmatprep.subr.bf16.mxu0 0
        %665 = vmatpush1.bf16.msra.mxu0 %v605
        %666 = vmatprep.subr.bf16.mxu0 0
        %667 = vmatpush1.bf16.msra.mxu0 %v606
        %668 = vmatprep.subr.bf16.mxu0 0
        %669 = vmatpush1.bf16.msra.mxu0 %v607
        %670 = vmatprep.subr.bf16.mxu0 0
        %671 = vmatpush1.bf16.msra.mxu0 %v608
        %672 = vmatprep.subr.bf16.mxu0 0
        %673 = vmatpush1.bf16.msra.mxu0 %v609
        %674 = vmatprep.mubr.bf16.mxu0 %v442
        %675 = vmatmul.mubr.bf16.gmra.mrb[0].mxu0 %v441
        %v676 = vpop.f32.mrb[0].mxu0
        %v677 = vadd.f32 0.0, %v676
        %v678 = vpop.f32.mrb[0].mxu0
        %v679 = vpop.f32.mrb[0].mxu0
        %v680 = vadd.f32 0.0, %v679
        %v681 = vpop.f32.mrb[0].mxu0
        %682 = vmatprep.mubr.bf16.mxu0 %v444
        %683 = vmatmul.mubr.bf16.gmra.mrb[0].mxu0 %v443
        %v684 = vpop.f32.mrb[0].mxu0
        %v685 = vadd.f32 0.0, %v684
        %v686 = vpop.f32.mrb[0].mxu0
        %v687 = vpop.f32.mrb[0].mxu0
        %v688 = vadd.f32 0.0, %v687
        %v689 = vpop.f32.mrb[0].mxu0
        %690 = vmatprep.mubr.bf16.mxu0 %v446
        %691 = vmatmul.mubr.bf16.gmra.mrb[0].mxu0 %v445
        %v692 = vpop.f32.mrb[0].mxu0
        %v693 = vadd.f32 0.0, %v692
        %v694 = vpop.f32.mrb[0].mxu0
        %v695 = vpop.f32.mrb[0].mxu0
        %v696 = vadd.f32 0.0, %v695
        %v697 = vpop.f32.mrb[0].mxu0
        %698 = vmatprep.mubr.bf16.mxu0 %v448
        %699 = vmatmul.mubr.bf16.gmra.mrb[0].mxu0 %v447
        %v700 = vpop.f32.mrb[0].mxu0
        %v701 = vadd.f32 0.0, %v700
        %v702 = vpop.f32.mrb[0].mxu0
        %v703 = vpop.f32.mrb[0].mxu0
        %v704 = vadd.f32 0.0, %v703
        %v705 = vpop.f32.mrb[0].mxu0
        %706 = vdwg.mxu0
        %707 = vmatprep.subr.bf16.mxu0 0
        %708 = vmatpush1.bf16.msra.mxu0 %v610
        %709 = vmatprep.subr.bf16.mxu0 0
        %710 = vmatpush1.bf16.msra.mxu0 %v611
        %711 = vmatprep.subr.bf16.mxu0 0
        %712 = vmatpush1.bf16.msra.mxu0 %v612
        %713 = vmatprep.subr.bf16.mxu0 0
        %714 = vmatpush1.bf16.msra.mxu0 %v613
        %715 = vmatprep.subr.bf16.mxu0 0
        %716 = vmatpush1.bf16.msra.mxu0 %v614
        %717 = vmatprep.subr.bf16.mxu0 0
        %718 = vmatpush1.bf16.msra.mxu0 %v615
        %719 = vmatprep.subr.bf16.mxu0 0
        %720 = vmatpush1.bf16.msra.mxu0 %v616
        %721 = vmatprep.subr.bf16.mxu0 0
        %722 = vmatpush1.bf16.msra.mxu0 %v617
        %723 = vmatprep.subr.bf16.mxu0 0
        %724 = vmatpush1.bf16.msra.mxu0 0
        %725 = vmatprep.subr.bf16.mxu0 0
        %726 = vmatpush1.bf16.msra.mxu0 0
        %727 = vmatprep.subr.bf16.mxu0 0
        %728 = vmatpush1.bf16.msra.mxu0 0
        %729 = vmatprep.subr.bf16.mxu0 0
        %730 = vmatpush1.bf16.msra.mxu0 0
        %731 = vmatprep.subr.bf16.mxu0 0
        %732 = vmatpush1.bf16.msra.mxu0 0
        %733 = vmatprep.subr.bf16.mxu0 0
        %734 = vmatpush1.bf16.msra.mxu0 0
        %735 = vmatprep.subr.bf16.mxu0 0
        %736 = vmatpush1.bf16.msra.mxu0 0
        %737 = vmatprep.subr.bf16.mxu0 0
        %738 = vmatpush1.bf16.msra.mxu0 0
        %739 = vmatprep.mubr.bf16.mxu0 0
        %740 = vmatmul.mubr.bf16.gmra.mrb[0].mxu0 %v443
        %v741 = vpop.f32.mrb[0].mxu0
        %v742 = vadd.f32 %v677, %v741
        %v743 = vpop.f32.mrb[0].mxu0
        %v744 = vpop.f32.mrb[0].mxu0
        %v745 = vadd.f32 %v680, %v744
        %v746 = vpop.f32.mrb[0].mxu0
        %747 = vmatprep.mubr.bf16.mxu0 0
        %748 = vmatmul.mubr.bf16.gmra.mrb[0].mxu0 %v445
        %v749 = vpop.f32.mrb[0].mxu0
        %v750 = vadd.f32 %v685, %v749
        %v751 = vpop.f32.mrb[0].mxu0
        %v752 = vpop.f32.mrb[0].mxu0
        %v753 = vadd.f32 %v688, %v752
        %v754 = vpop.f32.mrb[0].mxu0
        %755 = vmatprep.mubr.bf16.mxu0 0
        %756 = vmatmul.mubr.bf16.gmra.mrb[0].mxu0 %v447
        %v757 = vpop.f32.mrb[0].mxu0
        %v758 = vadd.f32 %v693, %v757
        %v759 = vpop.f32.mrb[0].mxu0
        %v760 = vpop.f32.mrb[0].mxu0
        %v761 = vadd.f32 %v696, %v760
        %v762 = vpop.f32.mrb[0].mxu0
        %763 = vmatprep.mubr.bf16.mxu0 0
        %764 = vmatmul.mubr.bf16.gmra.mrb[0].mxu0 %v449
        %v765 = vpop.f32.mrb[0].mxu0
        %v766 = vadd.f32 %v701, %v765
        %v767 = vpop.f32.mrb[0].mxu0
        %v768 = vpop.f32.mrb[0].mxu0
        %v769 = vadd.f32 %v704, %v768
        %v770 = vpop.f32.mrb[0].mxu0
        %771 = vdwg.mxu0
        %v772 = vsel %vm425, 1, 0
        %vm773 = vcmp.eq.s32.totalorder %v772, 1
        %v774 = vsel %vm773, 0.0, %v742
        %v775 = vsel %vm773, 0.0, %v745
        %v776 = vsel %vm773, 0.0, %v750
        %v777 = vsel %vm773, 0.0, %v753
        %v778 = vsel %vm773, 0.0, %v758
        %v779 = vsel %vm773, 0.0, %v761
        %v780 = vsel %vm773, 0.0, %v766
        %v781 = vsel %vm773, 0.0, %v769
        %v782 = vadd.f32 %v774, 0.0
        %v783 = vadd.f32 %v775, 0.0
        %v784 = vadd.f32 %v776, 0.0
        %v785 = vadd.f32 %v777, 0.0
        %v786 = vadd.f32 %v778, 0.0
        %v787 = vadd.f32 %v779, 0.0
        %v788 = vadd.f32 %v780, 0.0
        %v789 = vadd.f32 %v781, 0.0
        %v790 = vld [vmem:[%s373 + $0x8] sm:$0xff]
        %v791 = vld [vmem:[%s373 + $0x10] sm:$0xff]
        %v792 = vld [vmem:[%s373 + $0x18] sm:$0xff]
        %v793 = vld [vmem:[%s373 + $0x20] sm:$0xff]
        %v794 = vld [vmem:[%s373 + $0x28] sm:$0xff]
        %v795 = vld [vmem:[%s373 + $0x30] sm:$0xff]
        %v796 = vld [vmem:[%s373 + $0x38] sm:$0xff]
        %v797 = vld [vmem:[%s373 + $0x40] sm:$0xff]
        %v798 = vld [vmem:[%s373 + $0x48] sm:$0xff]
        %v799 = vld [vmem:[%s373 + $0x50] sm:$0xff]
        %v800 = vpack.c.bf16 %v791, %v790
        %v801 = vpack.c.bf16 %v792, %v791
        %v802 = vpack.c.bf16 %v793, %v792
        %v803 = vpack.c.bf16 %v794, %v793
        %v804 = vpack.c.bf16 %v795, %v794
        %v805 = vpack.c.bf16 %v796, %v795
        %v806 = vpack.c.bf16 %v797, %v796
        %v807 = vpack.c.bf16 %v798, %v797
        %v808 = vpack.c.bf16 %v799, %v798
        %s809 = scalar_lea.vmem [#allocation7], 192
        %v810 = vld [vmem:[%s809] sm:$0xf]
        %v811 = vld [vmem:[%s809 + $0x4] sm:$0xf]
        %v812 = vld [vmem:[%s809 + $0x8] sm:$0xf]
        %v813 = vld [vmem:[%s809 + $0xc] sm:$0xf]
        %v814 = vld [vmem:[%s809 + $0x10] sm:$0xf]
        %v815 = vld [vmem:[%s809 + $0x14] sm:$0xf]
        %v816 = vld [vmem:[%s809 + $0x18] sm:$0xf]
        %v817 = vld [vmem:[%s809 + $0x1c] sm:$0xf]
        %v818 = vld [vmem:[%s809 + $0x20] sm:$0xf]
        %v819 = vld [vmem:[%s809 + $0x24] sm:$0xf]
        %v820 = vld [vmem:[%s809 + $0x28] sm:$0xf]
        %v821 = vld [vmem:[%s809 + $0x2c] sm:$0xf]
        %v822 = vld [vmem:[%s809 + $0x30] sm:$0xf]
        %v823 = vld [vmem:[%s809 + $0x34] sm:$0xf]
        %v824 = vld [vmem:[%s809 + $0x38] sm:$0xf]
        %v825 = vld [vmem:[%s809 + $0x3c] sm:$0xf]
        %v826 = vld [vmem:[%s809 + $0x40] sm:$0xf]
        %v827 = vld [vmem:[%s809 + $0x44] sm:$0xf]
        %v828 = vld [vmem:[%s809 + $0x48] sm:$0xf]
        %v829 = vld [vmem:[%s809 + $0x4c] sm:$0xf]
        %v830 = vld [vmem:[%s809 + $0x50] sm:$0xf]
        %v831 = vld [vmem:[%s809 + $0x54] sm:$0xf]
        %v832 = vld [vmem:[%s809 + $0x58] sm:$0xf]
        %v833 = vld [vmem:[%s809 + $0x5c] sm:$0xf]
        %v834 = vld [vmem:[%s809 + $0x60] sm:$0xf]
        %v835 = vld [vmem:[%s809 + $0x64] sm:$0xf]
        %v836 = vld [vmem:[%s809 + $0x68] sm:$0xf]
        %v837 = vld [vmem:[%s809 + $0x6c] sm:$0xf]
        %v838 = vld [vmem:[%s809 + $0x70] sm:$0xf]
        %v839 = vld [vmem:[%s809 + $0x74] sm:$0xf]
        %v840 = vld [vmem:[%s809 + $0x78] sm:$0xf]
        %v841 = vld [vmem:[%s809 + $0x7c] sm:$0xf]
        %v842 = vld [vmem:[%s809 + $0x80] sm:$0xf]
        %v843 = vld [vmem:[%s809 + $0x84] sm:$0xf]
        %v844 = vld [vmem:[%s809 + $0x88] sm:$0xf]
        %v845 = vld [vmem:[%s809 + $0x8c] sm:$0xf]
        %v846 = vld [vmem:[%s809 + $0x90] sm:$0xf]
        %v847 = vld [vmem:[%s809 + $0x94] sm:$0xf]
        %v848 = vld [vmem:[%s809 + $0x98] sm:$0xf]
        %v849 = vld [vmem:[%s809 + $0x9c] sm:$0xf]
        %v850 = vld [vmem:[%s809 + $0xa0] sm:$0xf]
        %v851 = vld [vmem:[%s809 + $0xa4] sm:$0xf]
        %v852 = vld [vmem:[%s809 + $0xa8] sm:$0xf]
        %v853 = vld [vmem:[%s809 + $0xac] sm:$0xf]
        %v854 = vld [vmem:[%s809 + $0xb0] sm:$0xf]
        %v855 = vld [vmem:[%s809 + $0xb4] sm:$0xf]
        %v856 = vld [vmem:[%s809 + $0xb8] sm:$0xf]
        %v857 = vld [vmem:[%s809 + $0xbc] sm:$0xf]
        %v906 = vunpack.c.l.b16 %v810
        %v907 = vunpack.c.l.b16 %v811
        %v908 = vunpack.c.l.b16 %v812
        %v909 = vunpack.c.l.b16 %v813
        %v910 = vunpack.c.l.b16 %v814
        %v911 = vunpack.c.l.b16 %v815
        %v912 = vunpack.c.l.b16 %v816
        %v913 = vunpack.c.l.b16 %v817
        %v914 = vunpack.c.l.b16 %v818
        %v915 = vunpack.c.l.b16 %v819
        %v916 = vunpack.c.l.b16 %v820
        %v917 = vunpack.c.l.b16 %v821
        %v918 = vunpack.c.l.b16 %v822
        %v919 = vunpack.c.l.b16 %v823
        %v920 = vunpack.c.l.b16 %v824
        %v921 = vunpack.c.l.b16 %v825
        %v922 = vunpack.c.l.b16 %v826
        %v923 = vunpack.c.l.b16 %v827
        %v924 = vunpack.c.l.b16 %v828
        %v925 = vunpack.c.l.b16 %v829
        %v926 = vunpack.c.l.b16 %v830
        %v927 = vunpack.c.l.b16 %v831
        %v928 = vunpack.c.l.b16 %v832
        %v929 = vunpack.c.l.b16 %v833
        %v930 = vunpack.c.l.b16 %v834
        %v931 = vunpack.c.l.b16 %v835
        %v932 = vunpack.c.l.b16 %v836
        %v933 = vunpack.c.l.b16 %v837
        %v934 = vunpack.c.l.b16 %v838
        %v935 = vunpack.c.l.b16 %v839
        %v936 = vunpack.c.l.b16 %v840
        %v937 = vunpack.c.l.b16 %v841
        %v938 = vunpack.c.l.b16 %v842
        %v939 = vunpack.c.l.b16 %v843
        %v940 = vunpack.c.l.b16 %v844
        %v941 = vunpack.c.l.b16 %v845
        %v942 = vunpack.c.l.b16 %v846
        %v943 = vunpack.c.l.b16 %v847
        %v944 = vunpack.c.l.b16 %v848
        %v945 = vunpack.c.l.b16 %v849
        %v946 = vunpack.c.l.b16 %v850
        %v947 = vunpack.c.l.b16 %v851
        %v948 = vunpack.c.l.b16 %v852
        %v949 = vunpack.c.l.b16 %v853
        %v950 = vunpack.c.l.b16 %v854
        %v951 = vunpack.c.l.b16 %v855
        %v952 = vunpack.c.l.b16 %v856
        %v953 = vunpack.c.l.b16 %v857
        %v954 = vpack.c.b16 %v907, %v906
        %v955 = vpack.c.b16 %v909, %v908
        %v956 = vpack.c.b16 %v911, %v910
        %v957 = vpack.c.b16 %v913, %v912
        %v958 = vpack.c.b16 %v915, %v914
        %v959 = vpack.c.b16 %v917, %v916
        %v960 = vpack.c.b16 %v919, %v918
        %v961 = vpack.c.b16 %v921, %v920
        %v962 = vpack.c.b16 %v923, %v922
        %v963 = vpack.c.b16 %v925, %v924
        %v964 = vpack.c.b16 %v927, %v926
        %v965 = vpack.c.b16 %v929, %v928
        %v966 = vpack.c.b16 %v931, %v930
        %v967 = vpack.c.b16 %v933, %v932
        %v968 = vpack.c.b16 %v935, %v934
        %v969 = vpack.c.b16 %v937, %v936
        %v970 = vpack.c.b16 %v939, %v938
        %v971 = vpack.c.b16 %v941, %v940
        %v972 = vpack.c.b16 %v943, %v942
        %v973 = vpack.c.b16 %v945, %v944
        %v974 = vpack.c.b16 %v947, %v946
        %v975 = vpack.c.b16 %v949, %v948
        %v976 = vpack.c.b16 %v951, %v950
        %v977 = vpack.c.b16 %v953, %v952
        %1002 = vmatprep.subr.bf16.mxu0 0
        %1003 = vmatpush1.bf16.msra.mxu0 %v954
        %1004 = vmatprep.subr.bf16.mxu0 0
        %1005 = vmatpush1.bf16.msra.mxu0 %v955
        %1006 = vmatprep.subr.bf16.mxu0 0
        %1007 = vmatpush1.bf16.msra.mxu0 %v956
        %1008 = vmatprep.subr.bf16.mxu0 0
        %1009 = vmatpush1.bf16.msra.mxu0 %v957
        %1010 = vmatprep.subr.bf16.mxu0 0
        %1011 = vmatpush1.bf16.msra.mxu0 %v958
        %1012 = vmatprep.subr.bf16.mxu0 0
        %1013 = vmatpush1.bf16.msra.mxu0 %v959
        %1014 = vmatprep.subr.bf16.mxu0 0
        %1015 = vmatpush1.bf16.msra.mxu0 %v960
        %1016 = vmatprep.subr.bf16.mxu0 0
        %1017 = vmatpush1.bf16.msra.mxu0 %v961
        %1018 = vmatprep.subr.bf16.mxu0 0
        %1019 = vmatpush1.bf16.msra.mxu0 %v962
        %1020 = vmatprep.subr.bf16.mxu0 0
        %1021 = vmatpush1.bf16.msra.mxu0 %v963
        %1022 = vmatprep.subr.bf16.mxu0 0
        %1023 = vmatpush1.bf16.msra.mxu0 %v964
        %1024 = vmatprep.subr.bf16.mxu0 0
        %1025 = vmatpush1.bf16.msra.mxu0 %v965
        %1026 = vmatprep.subr.bf16.mxu0 0
        %1027 = vmatpush1.bf16.msra.mxu0 %v966
        %1028 = vmatprep.subr.bf16.mxu0 0
        %1029 = vmatpush1.bf16.msra.mxu0 %v967
        %1030 = vmatprep.subr.bf16.mxu0 0
        %1031 = vmatpush1.bf16.msra.mxu0 %v968
        %1032 = vmatprep.subr.bf16.mxu0 0
        %1033 = vmatpush1.bf16.msra.mxu0 %v969
        %1034 = vmatprep.mubr.bf16.mxu0 %v801
        %1035 = vmatmul.mubr.bf16.gmra.mrb[0].mxu0 %v800
        %v1036 = vpop.f32.mrb[0].mxu0
        %v1037 = vadd.f32 0.0, %v1036
        %v1038 = vpop.f32.mrb[0].mxu0
        %v1039 = vpop.f32.mrb[0].mxu0
        %v1040 = vadd.f32 0.0, %v1039
        %v1041 = vpop.f32.mrb[0].mxu0
        %1042 = vmatprep.mubr.bf16.mxu0 %v803
        %1043 = vmatmul.mubr.bf16.gmra.mrb[0].mxu0 %v802
        %v1044 = vpop.f32.mrb[0].mxu0
        %v1045 = vadd.f32 0.0, %v1044
        %v1046 = vpop.f32.mrb[0].mxu0
        %v1047 = vpop.f32.mrb[0].mxu0
        %v1048 = vadd.f32 0.0, %v1047
        %v1049 = vpop.f32.mrb[0].mxu0
        %1050 = vmatprep.mubr.bf16.mxu0 %v805
        %1051 = vmatmul.mubr.bf16.gmra.mrb[0].mxu0 %v804
        %v1052 = vpop.f32.mrb[0].mxu0
        %v1053 = vadd.f32 0.0, %v1052
        %v1054 = vpop.f32.mrb[0].mxu0
        %v1055 = vpop.f32.mrb[0].mxu0
        %v1056 = vadd.f32 0.0, %v1055
        %v1057 = vpop.f32.mrb[0].mxu0
        %1058 = vmatprep.mubr.bf16.mxu0 %v807
        %1059 = vmatmul.mubr.bf16.gmra.mrb[0].mxu0 %v806
        %v1060 = vpop.f32.mrb[0].mxu0
        %v1061 = vadd.f32 0.0, %v1060
        %v1062 = vpop.f32.mrb[0].mxu0
        %v1063 = vpop.f32.mrb[0].mxu0
        %v1064 = vadd.f32 0.0, %v1063
        %v1065 = vpop.f32.mrb[0].mxu0
        %1066 = vdwg.mxu0
        %1067 = vmatprep.subr.bf16.mxu0 0
        %1068 = vmatpush1.bf16.msra.mxu0 %v970
        %1069 = vmatprep.subr.bf16.mxu0 0
        %1070 = vmatpush1.bf16.msra.mxu0 %v971
        %1071 = vmatprep.subr.bf16.mxu0 0
        %1072 = vmatpush1.bf16.msra.mxu0 %v972
        %1073 = vmatprep.subr.bf16.mxu0 0
        %1074 = vmatpush1.bf16.msra.mxu0 %v973
        %1075 = vmatprep.subr.bf16.mxu0 0
        %1076 = vmatpush1.bf16.msra.mxu0 %v974
        %1077 = vmatprep.subr.bf16.mxu0 0
        %1078 = vmatpush1.bf16.msra.mxu0 %v975
        %1079 = vmatprep.subr.bf16.mxu0 0
        %1080 = vmatpush1.bf16.msra.mxu0 %v976
        %1081 = vmatprep.subr.bf16.mxu0 0
        %1082 = vmatpush1.bf16.msra.mxu0 %v977
        %1083 = vmatprep.subr.bf16.mxu0 0
        %1084 = vmatpush1.bf16.msra.mxu0 0
        %1085 = vmatprep.subr.bf16.mxu0 0
        %1086 = vmatpush1.bf16.msra.mxu0 0
        %1087 = vmatprep.subr.bf16.mxu0 0
        %1088 = vmatpush1.bf16.msra.mxu0 0
        %1089 = vmatprep.subr.bf16.mxu0 0
        %1090 = vmatpush1.bf16.msra.mxu0 0
        %1091 = vmatprep.subr.bf16.mxu0 0
        %1092 = vmatpush1.bf16.msra.mxu0 0
        %1093 = vmatprep.subr.bf16.mxu0 0
        %1094 = vmatpush1.bf16.msra.mxu0 0
        %1095 = vmatprep.subr.bf16.mxu0 0
        %1096 = vmatpush1.bf16.msra.mxu0 0
        %1097 = vmatprep.subr.bf16.mxu0 0
        %1098 = vmatpush1.bf16.msra.mxu0 0
        %1099 = vmatprep.mubr.bf16.mxu0 0
        %1100 = vmatmul.mubr.bf16.gmra.mrb[0].mxu0 %v802
        %v1101 = vpop.f32.mrb[0].mxu0
        %v1102 = vadd.f32 %v1037, %v1101
        %v1103 = vpop.f32.mrb[0].mxu0
        %v1104 = vpop.f32.mrb[0].mxu0
        %v1105 = vadd.f32 %v1040, %v1104
        %v1106 = vpop.f32.mrb[0].mxu0
        %1107 = vmatprep.mubr.bf16.mxu0 0
        %1108 = vmatmul.mubr.bf16.gmra.mrb[0].mxu0 %v804
        %v1109 = vpop.f32.mrb[0].mxu0
        %v1110 = vadd.f32 %v1045, %v1109
        %v1111 = vpop.f32.mrb[0].mxu0
        %v1112 = vpop.f32.mrb[0].mxu0
        %v1113 = vadd.f32 %v1048, %v1112
        %v1114 = vpop.f32.mrb[0].mxu0
        %1115 = vmatprep.mubr.bf16.mxu0 0
        %1116 = vmatmul.mubr.bf16.gmra.mrb[0].mxu0 %v806
        %v1117 = vpop.f32.mrb[0].mxu0
        %v1118 = vadd.f32 %v1053, %v1117
        %v1119 = vpop.f32.mrb[0].mxu0
        %v1120 = vpop.f32.mrb[0].mxu0
        %v1121 = vadd.f32 %v1056, %v1120
        %v1122 = vpop.f32.mrb[0].mxu0
        %1123 = vmatprep.mubr.bf16.mxu0 0
        %1124 = vmatmul.mubr.bf16.gmra.mrb[0].mxu0 %v808
        %v1125 = vpop.f32.mrb[0].mxu0
        %v1126 = vadd.f32 %v1061, %v1125
        %v1127 = vpop.f32.mrb[0].mxu0
        %v1128 = vpop.f32.mrb[0].mxu0
        %v1129 = vadd.f32 %v1064, %v1128
        %v1130 = vpop.f32.mrb[0].mxu0
        %1131 = vdwg.mxu0
        %v1132 = vadd.f32 %v782, %v1102
        %v1133 = vadd.f32 %v783, %v1105
        %v1134 = vadd.f32 %v784, %v1110
        %v1135 = vadd.f32 %v785, %v1113
        %v1136 = vadd.f32 %v786, %v1118
        %v1137 = vadd.f32 %v787, %v1121
        %v1138 = vadd.f32 %v788, %v1126
        %v1139 = vadd.f32 %v789, %v1129
        %v1140 = vld [vmem:[%s373 + $0x9] sm:$0xff]
        %v1141 = vld [vmem:[%s373 + $0x11] sm:$0xff]
        %v1142 = vld [vmem:[%s373 + $0x19] sm:$0xff]
        %v1143 = vld [vmem:[%s373 + $0x21] sm:$0xff]
        %v1144 = vld [vmem:[%s373 + $0x29] sm:$0xff]
        %v1145 = vld [vmem:[%s373 + $0x31] sm:$0xff]
        %v1146 = vld [vmem:[%s373 + $0x39] sm:$0xff]
        %v1147 = vld [vmem:[%s373 + $0x41] sm:$0xff]
        %v1148 = vld [vmem:[%s373 + $0x49] sm:$0xff]
        %v1149 = vld [vmem:[%s373 + $0x51] sm:$0xff]
        %v1150 = vpack.c.bf16 %v1141, %v1140
        %v1151 = vpack.c.bf16 %v1142, %v1141
        %v1152 = vpack.c.bf16 %v1143, %v1142
        %v1153 = vpack.c.bf16 %v1144, %v1143
        %v1154 = vpack.c.bf16 %v1145, %v1144
        %v1155 = vpack.c.bf16 %v1146, %v1145
        %v1156 = vpack.c.bf16 %v1147, %v1146
        %v1157 = vpack.c.bf16 %v1148, %v1147
        %v1158 = vpack.c.bf16 %v1149, %v1148
        %s1159 = scalar_lea.vmem [#allocation7], 384
        %v1160 = vld [vmem:[%s1159] sm:$0xf]
        %v1161 = vld [vmem:[%s1159 + $0x4] sm:$0xf]
        %v1162 = vld [vmem:[%s1159 + $0x8] sm:$0xf]
        %v1163 = vld [vmem:[%s1159 + $0xc] sm:$0xf]
        %v1164 = vld [vmem:[%s1159 + $0x10] sm:$0xf]
        %v1165 = vld [vmem:[%s1159 + $0x14] sm:$0xf]
        %v1166 = vld [vmem:[%s1159 + $0x18] sm:$0xf]
        %v1167 = vld [vmem:[%s1159 + $0x1c] sm:$0xf]
        %v1168 = vld [vmem:[%s1159 + $0x20] sm:$0xf]
        %v1169 = vld [vmem:[%s1159 + $0x24] sm:$0xf]
        %v1170 = vld [vmem:[%s1159 + $0x28] sm:$0xf]
        %v1171 = vld [vmem:[%s1159 + $0x2c] sm:$0xf]
        %v1172 = vld [vmem:[%s1159 + $0x30] sm:$0xf]
        %v1173 = vld [vmem:[%s1159 + $0x34] sm:$0xf]
        %v1174 = vld [vmem:[%s1159 + $0x38] sm:$0xf]
        %v1175 = vld [vmem:[%s1159 + $0x3c] sm:$0xf]
        %v1176 = vld [vmem:[%s1159 + $0x40] sm:$0xf]
        %v1177 = vld [vmem:[%s1159 + $0x44] sm:$0xf]
        %v1178 = vld [vmem:[%s1159 + $0x48] sm:$0xf]
        %v1179 = vld [vmem:[%s1159 + $0x4c] sm:$0xf]
        %v1180 = vld [vmem:[%s1159 + $0x50] sm:$0xf]
        %v1181 = vld [vmem:[%s1159 + $0x54] sm:$0xf]
        %v1182 = vld [vmem:[%s1159 + $0x58] sm:$0xf]
        %v1183 = vld [vmem:[%s1159 + $0x5c] sm:$0xf]
        %v1184 = vld [vmem:[%s1159 + $0x60] sm:$0xf]
        %v1185 = vld [vmem:[%s1159 + $0x64] sm:$0xf]
        %v1186 = vld [vmem:[%s1159 + $0x68] sm:$0xf]
        %v1187 = vld [vmem:[%s1159 + $0x6c] sm:$0xf]
        %v1188 = vld [vmem:[%s1159 + $0x70] sm:$0xf]
        %v1189 = vld [vmem:[%s1159 + $0x74] sm:$0xf]
        %v1190 = vld [vmem:[%s1159 + $0x78] sm:$0xf]
        %v1191 = vld [vmem:[%s1159 + $0x7c] sm:$0xf]
        %v1192 = vld [vmem:[%s1159 + $0x80] sm:$0xf]
        %v1193 = vld [vmem:[%s1159 + $0x84] sm:$0xf]
        %v1194 = vld [vmem:[%s1159 + $0x88] sm:$0xf]
        %v1195 = vld [vmem:[%s1159 + $0x8c] sm:$0xf]
        %v1196 = vld [vmem:[%s1159 + $0x90] sm:$0xf]
        %v1197 = vld [vmem:[%s1159 + $0x94] sm:$0xf]
        %v1198 = vld [vmem:[%s1159 + $0x98] sm:$0xf]
        %v1199 = vld [vmem:[%s1159 + $0x9c] sm:$0xf]
        %v1200 = vld [vmem:[%s1159 + $0xa0] sm:$0xf]
        %v1201 = vld [vmem:[%s1159 + $0xa4] sm:$0xf]
        %v1202 = vld [vmem:[%s1159 + $0xa8] sm:$0xf]
        %v1203 = vld [vmem:[%s1159 + $0xac] sm:$0xf]
        %v1204 = vld [vmem:[%s1159 + $0xb0] sm:$0xf]
        %v1205 = vld [vmem:[%s1159 + $0xb4] sm:$0xf]
        %v1206 = vld [vmem:[%s1159 + $0xb8] sm:$0xf]
        %v1207 = vld [vmem:[%s1159 + $0xbc] sm:$0xf]
        %v1256 = vunpack.c.l.b16 %v1160
        %v1257 = vunpack.c.l.b16 %v1161
        %v1258 = vunpack.c.l.b16 %v1162
        %v1259 = vunpack.c.l.b16 %v1163
        %v1260 = vunpack.c.l.b16 %v1164
        %v1261 = vunpack.c.l.b16 %v1165
        %v1262 = vunpack.c.l.b16 %v1166
        %v1263 = vunpack.c.l.b16 %v1167
        %v1264 = vunpack.c.l.b16 %v1168
        %v1265 = vunpack.c.l.b16 %v1169
        %v1266 = vunpack.c.l.b16 %v1170
        %v1267 = vunpack.c.l.b16 %v1171
        %v1268 = vunpack.c.l.b16 %v1172
        %v1269 = vunpack.c.l.b16 %v1173
        %v1270 = vunpack.c.l.b16 %v1174
        %v1271 = vunpack.c.l.b16 %v1175
        %v1272 = vunpack.c.l.b16 %v1176
        %v1273 = vunpack.c.l.b16 %v1177
        %v1274 = vunpack.c.l.b16 %v1178
        %v1275 = vunpack.c.l.b16 %v1179
        %v1276 = vunpack.c.l.b16 %v1180
        %v1277 = vunpack.c.l.b16 %v1181
        %v1278 = vunpack.c.l.b16 %v1182
        %v1279 = vunpack.c.l.b16 %v1183
        %v1280 = vunpack.c.l.b16 %v1184
        %v1281 = vunpack.c.l.b16 %v1185
        %v1282 = vunpack.c.l.b16 %v1186
        %v1283 = vunpack.c.l.b16 %v1187
        %v1284 = vunpack.c.l.b16 %v1188
        %v1285 = vunpack.c.l.b16 %v1189
        %v1286 = vunpack.c.l.b16 %v1190
        %v1287 = vunpack.c.l.b16 %v1191
        %v1288 = vunpack.c.l.b16 %v1192
        %v1289 = vunpack.c.l.b16 %v1193
        %v1290 = vunpack.c.l.b16 %v1194
        %v1291 = vunpack.c.l.b16 %v1195
        %v1292 = vunpack.c.l.b16 %v1196
        %v1293 = vunpack.c.l.b16 %v1197
        %v1294 = vunpack.c.l.b16 %v1198
        %v1295 = vunpack.c.l.b16 %v1199
        %v1296 = vunpack.c.l.b16 %v1200
        %v1297 = vunpack.c.l.b16 %v1201
        %v1298 = vunpack.c.l.b16 %v1202
        %v1299 = vunpack.c.l.b16 %v1203
        %v1300 = vunpack.c.l.b16 %v1204
        %v1301 = vunpack.c.l.b16 %v1205
        %v1302 = vunpack.c.l.b16 %v1206
        %v1303 = vunpack.c.l.b16 %v1207
        %v1304 = vpack.c.b16 %v1257, %v1256
        %v1305 = vpack.c.b16 %v1259, %v1258
        %v1306 = vpack.c.b16 %v1261, %v1260
        %v1307 = vpack.c.b16 %v1263, %v1262
        %v1308 = vpack.c.b16 %v1265, %v1264
        %v1309 = vpack.c.b16 %v1267, %v1266
        %v1310 = vpack.c.b16 %v1269, %v1268
        %v1311 = vpack.c.b16 %v1271, %v1270
        %v1312 = vpack.c.b16 %v1273, %v1272
        %v1313 = vpack.c.b16 %v1275, %v1274
        %v1314 = vpack.c.b16 %v1277, %v1276
        %v1315 = vpack.c.b16 %v1279, %v1278
        %v1316 = vpack.c.b16 %v1281, %v1280
        %v1317 = vpack.c.b16 %v1283, %v1282
        %v1318 = vpack.c.b16 %v1285, %v1284
        %v1319 = vpack.c.b16 %v1287, %v1286
        %v1320 = vpack.c.b16 %v1289, %v1288
        %v1321 = vpack.c.b16 %v1291, %v1290
        %v1322 = vpack.c.b16 %v1293, %v1292
        %v1323 = vpack.c.b16 %v1295, %v1294
        %v1324 = vpack.c.b16 %v1297, %v1296
        %v1325 = vpack.c.b16 %v1299, %v1298
        %v1326 = vpack.c.b16 %v1301, %v1300
        %v1327 = vpack.c.b16 %v1303, %v1302
        %1352 = vmatprep.subr.bf16.mxu0 0
        %1353 = vmatpush1.bf16.msra.mxu0 %v1304
        %1354 = vmatprep.subr.bf16.mxu0 0
        %1355 = vmatpush1.bf16.msra.mxu0 %v1305
        %1356 = vmatprep.subr.bf16.mxu0 0
        %1357 = vmatpush1.bf16.msra.mxu0 %v1306
        %1358 = vmatprep.subr.bf16.mxu0 0
        %1359 = vmatpush1.bf16.msra.mxu0 %v1307
        %1360 = vmatprep.subr.bf16.mxu0 0
        %1361 = vmatpush1.bf16.msra.mxu0 %v1308
        %1362 = vmatprep.subr.bf16.mxu0 0
        %1363 = vmatpush1.bf16.msra.mxu0 %v1309
        %1364 = vmatprep.subr.bf16.mxu0 0
        %1365 = vmatpush1.bf16.msra.mxu0 %v1310
        %1366 = vmatprep.subr.bf16.mxu0 0
        %1367 = vmatpush1.bf16.msra.mxu0 %v1311
        %1368 = vmatprep.subr.bf16.mxu0 0
        %1369 = vmatpush1.bf16.msra.mxu0 %v1312
        %1370 = vmatprep.subr.bf16.mxu0 0
        %1371 = vmatpush1.bf16.msra.mxu0 %v1313
        %1372 = vmatprep.subr.bf16.mxu0 0
        %1373 = vmatpush1.bf16.msra.mxu0 %v1314
        %1374 = vmatprep.subr.bf16.mxu0 0
        %1375 = vmatpush1.bf16.msra.mxu0 %v1315
        %1376 = vmatprep.subr.bf16.mxu0 0
        %1377 = vmatpush1.bf16.msra.mxu0 %v1316
        %1378 = vmatprep.subr.bf16.mxu0 0
        %1379 = vmatpush1.bf16.msra.mxu0 %v1317
        %1380 = vmatprep.subr.bf16.mxu0 0
        %1381 = vmatpush1.bf16.msra.mxu0 %v1318
        %1382 = vmatprep.subr.bf16.mxu0 0
        %1383 = vmatpush1.bf16.msra.mxu0 %v1319
        %1384 = vmatprep.mubr.bf16.mxu0 %v1151
        %1385 = vmatmul.mubr.bf16.gmra.mrb[0].mxu0 %v1150
        %v1386 = vpop.f32.mrb[0].mxu0
        %v1387 = vadd.f32 0.0, %v1386
        %v1388 = vpop.f32.mrb[0].mxu0
        %v1389 = vpop.f32.mrb[0].mxu0
        %v1390 = vadd.f32 0.0, %v1389
        %v1391 = vpop.f32.mrb[0].mxu0
        %1392 = vmatprep.mubr.bf16.mxu0 %v1153
        %1393 = vmatmul.mubr.bf16.gmra.mrb[0].mxu0 %v1152
        %v1394 = vpop.f32.mrb[0].mxu0
        %v1395 = vadd.f32 0.0, %v1394
        %v1396 = vpop.f32.mrb[0].mxu0
        %v1397 = vpop.f32.mrb[0].mxu0
        %v1398 = vadd.f32 0.0, %v1397
        %v1399 = vpop.f32.mrb[0].mxu0
        %1400 = vmatprep.mubr.bf16.mxu0 %v1155
        %1401 = vmatmul.mubr.bf16.gmra.mrb[0].mxu0 %v1154
        %v1402 = vpop.f32.mrb[0].mxu0
        %v1403 = vadd.f32 0.0, %v1402
        %v1404 = vpop.f32.mrb[0].mxu0
        %v1405 = vpop.f32.mrb[0].mxu0
        %v1406 = vadd.f32 0.0, %v1405
        %v1407 = vpop.f32.mrb[0].mxu0
        %1408 = vmatprep.mubr.bf16.mxu0 %v1157
        %1409 = vmatmul.mubr.bf16.gmra.mrb[0].mxu0 %v1156
        %v1410 = vpop.f32.mrb[0].mxu0
        %v1411 = vadd.f32 0.0, %v1410
        %v1412 = vpop.f32.mrb[0].mxu0
        %v1413 = vpop.f32.mrb[0].mxu0
        %v1414 = vadd.f32 0.0, %v1413
        %v1415 = vpop.f32.mrb[0].mxu0
        %1416 = vdwg.mxu0
        %1417 = vmatprep.subr.bf16.mxu0 0
        %1418 = vmatpush1.bf16.msra.mxu0 %v1320
        %1419 = vmatprep.subr.bf16.mxu0 0
        %1420 = vmatpush1.bf16.msra.mxu0 %v1321
        %1421 = vmatprep.subr.bf16.mxu0 0
        %1422 = vmatpush1.bf16.msra.mxu0 %v1322
        %1423 = vmatprep.subr.bf16.mxu0 0
        %1424 = vmatpush1.bf16.msra.mxu0 %v1323
        %1425 = vmatprep.subr.bf16.mxu0 0
        %1426 = vmatpush1.bf16.msra.mxu0 %v1324
        %1427 = vmatprep.subr.bf16.mxu0 0
        %1428 = vmatpush1.bf16.msra.mxu0 %v1325
        %1429 = vmatprep.subr.bf16.mxu0 0
        %1430 = vmatpush1.bf16.msra.mxu0 %v1326
        %1431 = vmatprep.subr.bf16.mxu0 0
        %1432 = vmatpush1.bf16.msra.mxu0 %v1327
        %1433 = vmatprep.subr.bf16.mxu0 0
        %1434 = vmatpush1.bf16.msra.mxu0 0
        %1435 = vmatprep.subr.bf16.mxu0 0
        %1436 = vmatpush1.bf16.msra.mxu0 0
        %1437 = vmatprep.subr.bf16.mxu0 0
        %1438 = vmatpush1.bf16.msra.mxu0 0
        %1439 = vmatprep.subr.bf16.mxu0 0
        %1440 = vmatpush1.bf16.msra.mxu0 0
        %1441 = vmatprep.subr.bf16.mxu0 0
        %1442 = vmatpush1.bf16.msra.mxu0 0
        %1443 = vmatprep.subr.bf16.mxu0 0
        %1444 = vmatpush1.bf16.msra.mxu0 0
        %1445 = vmatprep.subr.bf16.mxu0 0
        %1446 = vmatpush1.bf16.msra.mxu0 0
        %1447 = vmatprep.subr.bf16.mxu0 0
        %1448 = vmatpush1.bf16.msra.mxu0 0
        %1449 = vmatprep.mubr.bf16.mxu0 0
        %1450 = vmatmul.mubr.bf16.gmra.mrb[0].mxu0 %v1152
        %v1451 = vpop.f32.mrb[0].mxu0
        %v1452 = vadd.f32 %v1387, %v1451
        %v1453 = vpop.f32.mrb[0].mxu0
        %v1454 = vpop.f32.mrb[0].mxu0
        %v1455 = vadd.f32 %v1390, %v1454
        %v1456 = vpop.f32.mrb[0].mxu0
        %1457 = vmatprep.mubr.bf16.mxu0 0
        %1458 = vmatmul.mubr.bf16.gmra.mrb[0].mxu0 %v1154
        %v1459 = vpop.f32.mrb[0].mxu0
        %v1460 = vadd.f32 %v1395, %v1459
        %v1461 = vpop.f32.mrb[0].mxu0
        %v1462 = vpop.f32.mrb[0].mxu0
        %v1463 = vadd.f32 %v1398, %v1462
        %v1464 = vpop.f32.mrb[0].mxu0
        %1465 = vmatprep.mubr.bf16.mxu0 0
        %1466 = vmatmul.mubr.bf16.gmra.mrb[0].mxu0 %v1156
        %v1467 = vpop.f32.mrb[0].mxu0
        %v1468 = vadd.f32 %v1403, %v1467
        %v1469 = vpop.f32.mrb[0].mxu0
        %v1470 = vpop.f32.mrb[0].mxu0
        %v1471 = vadd.f32 %v1406, %v1470
        %v1472 = vpop.f32.mrb[0].mxu0
        %1473 = vmatprep.mubr.bf16.mxu0 0
        %1474 = vmatmul.mubr.bf16.gmra.mrb[0].mxu0 %v1158
        %v1475 = vpop.f32.mrb[0].mxu0
        %v1476 = vadd.f32 %v1411, %v1475
        %v1477 = vpop.f32.mrb[0].mxu0
        %v1478 = vpop.f32.mrb[0].mxu0
        %v1479 = vadd.f32 %v1414, %v1478
        %v1480 = vpop.f32.mrb[0].mxu0
        %1481 = vdwg.mxu0
        %v1482 = vsel %vm426, 1, 0
        %vm1483 = vcmp.eq.s32.totalorder %v1482, 1
        %v1484 = vsel %vm1483, 0.0, %v1452
        %v1485 = vsel %vm1483, 0.0, %v1455
        %v1486 = vsel %vm1483, 0.0, %v1460
        %v1487 = vsel %vm1483, 0.0, %v1463
        %v1488 = vsel %vm1483, 0.0, %v1468
        %v1489 = vsel %vm1483, 0.0, %v1471
        %v1490 = vsel %vm1483, 0.0, %v1476
        %v1491 = vsel %vm1483, 0.0, %v1479
        %v1492 = vadd.f32 %v1132, %v1484
        %v1493 = vadd.f32 %v1133, %v1485
        %v1494 = vadd.f32 %v1134, %v1486
        %v1495 = vadd.f32 %v1135, %v1487
        %v1496 = vadd.f32 %v1136, %v1488
        %v1497 = vadd.f32 %v1137, %v1489
        %v1498 = vadd.f32 %v1138, %v1490
        %v1499 = vadd.f32 %v1139, %v1491
        %v1500 = vld [vmem:[%s4] sm:$0x1]
        %v1502 = vlaneseq
        %v1503 = vshrl.u32 %v1502, 7
        %v1504 = vsub.s32 0, %v1503
        %v1505 = vrot.slane %v1500, %v1504
        %v1507 = vmul.f32 %v1492, %v1505
        %v1508 = vmul.f32 %v1493, %v1505
        %v1509 = vmul.f32 %v1494, %v1505
        %v1510 = vmul.f32 %v1495, %v1505
        %v1511 = vmul.f32 %v1496, %v1505
        %v1512 = vmul.f32 %v1497, %v1505
        %v1513 = vmul.f32 %v1498, %v1505
        %v1514 = vmul.f32 %v1499, %v1505
        %v1515 = vld [vmem:[%s5] sm:$0x1]
        %v1517 = vlaneseq
        %v1518 = vshrl.u32 %v1517, 7
        %v1519 = vsub.s32 0, %v1518
        %v1520 = vrot.slane %v1515, %v1519
        %v1522 = vadd.f32 %v1507, %v1520
        %v1523 = vadd.f32 %v1508, %v1520
        %v1524 = vadd.f32 %v1509, %v1520
        %v1525 = vadd.f32 %v1510, %v1520
        %v1526 = vadd.f32 %v1511, %v1520
        %v1527 = vadd.f32 %v1512, %v1520
        %v1528 = vadd.f32 %v1513, %v1520
        %v1529 = vadd.f32 %v1514, %v1520
        %vm1530 = vcmp.gt.f32.partialorder %v1522, 0.0
        %vm1531 = vcmp.gt.f32.partialorder %v1523, 0.0
        %vm1532 = vcmp.gt.f32.partialorder %v1524, 0.0
        %vm1533 = vcmp.gt.f32.partialorder %v1525, 0.0
        %vm1534 = vcmp.gt.f32.partialorder %v1526, 0.0
        %vm1535 = vcmp.gt.f32.partialorder %v1527, 0.0
        %vm1536 = vcmp.gt.f32.partialorder %v1528, 0.0
        %vm1537 = vcmp.gt.f32.partialorder %v1529, 0.0
        %v1538 = vmul.f32 %v1522, 0.01
        %v1539 = vmul.f32 %v1523, 0.01
        %v1540 = vmul.f32 %v1524, 0.01
        %v1541 = vmul.f32 %v1525, 0.01
        %v1542 = vmul.f32 %v1526, 0.01
        %v1543 = vmul.f32 %v1527, 0.01
        %v1544 = vmul.f32 %v1528, 0.01
        %v1545 = vmul.f32 %v1529, 0.01
        %v1546 = vsel %vm1530, %v1522, %v1538
        %v1547 = vsel %vm1531, %v1523, %v1539
        %v1548 = vsel %vm1532, %v1524, %v1540
        %v1549 = vsel %vm1533, %v1525, %v1541
        %v1550 = vsel %vm1534, %v1526, %v1542
        %v1551 = vsel %vm1535, %v1527, %v1543
        %v1552 = vsel %vm1536, %v1528, %v1544
        %v1553 = vsel %vm1537, %v1529, %v1545
        %1554 = vst [vmem:[#allocation3] sm:$0xff] %v1546
        %1555 = vst [vmem:[#allocation3 + $0x8] sm:$0xff] %v1547
        %1556 = vst [vmem:[#allocation3 + $0x10] sm:$0xff] %v1548
        %1557 = vst [vmem:[#allocation3 + $0x18] sm:$0xff] %v1549
        %1558 = vst [vmem:[#allocation3 + $0x20] sm:$0xff] %v1550
        %1559 = vst [vmem:[#allocation3 + $0x28] sm:$0xff] %v1551
        %1560 = vst [vmem:[#allocation3 + $0x30] sm:$0xff] %v1552
        %1561 = vst [vmem:[#allocation3 + $0x38] sm:$0xff] %v1553
        %1562 = vst [vmem:[#allocation2 + $0x10] sm:$0xff] %v1546
        %1563 = vst [vmem:[#allocation2 + $0x18] sm:$0xff] %v1547
        %1564 = vst [vmem:[#allocation2 + $0x20] sm:$0xff] %v1548
        %1565 = vst [vmem:[#allocation2 + $0x28] sm:$0xff] %v1549
        %1566 = vst [vmem:[#allocation2 + $0x30] sm:$0xff] %v1550
        %1567 = vst [vmem:[#allocation2 + $0x38] sm:$0xff] %v1551
        %1568 = vst [vmem:[#allocation2 + $0x40] sm:$0xff] %v1552
        %1569 = vst [vmem:[#allocation2 + $0x48] sm:$0xff] %v1553
        %v1570 = vld [vmem:[#allocation2 + $0x7] sm:$0xff]
        %v1571 = vld [vmem:[#allocation2 + $0xf] sm:$0xff]
        %v1572 = vld [vmem:[#allocation2 + $0x17] sm:$0xff]
        %v1573 = vld [vmem:[#allocation2 + $0x1f] sm:$0xff]
        %v1574 = vld [vmem:[#allocation2 + $0x27] sm:$0xff]
        %v1575 = vld [vmem:[#allocation2 + $0x2f] sm:$0xff]
        %v1576 = vld [vmem:[#allocation2 + $0x37] sm:$0xff]
        %v1577 = vld [vmem:[#allocation2 + $0x3f] sm:$0xff]
        %v1578 = vld [vmem:[#allocation2 + $0x47] sm:$0xff]
        %v1579 = vld [vmem:[#allocation2 + $0x4f] sm:$0xff]
        %v1580 = vpack.c.bf16 %v1571, %v1570
        %v1581 = vpack.c.bf16 %v1572, %v1571
        %v1582 = vpack.c.bf16 %v1573, %v1572
        %v1583 = vpack.c.bf16 %v1574, %v1573
        %v1584 = vpack.c.bf16 %v1575, %v1574
        %v1585 = vpack.c.bf16 %v1576, %v1575
        %v1586 = vpack.c.bf16 %v1577, %v1576
        %v1587 = vpack.c.bf16 %v1578, %v1577
        %v1588 = vpack.c.bf16 %v1579, %v1578
        %v1589 = vld [vmem:[#allocation9] sm:$0xf]
        %v1590 = vld [vmem:[#allocation9 + $0x4] sm:$0xf]
        %v1591 = vld [vmem:[#allocation9 + $0x8] sm:$0xf]
        %v1592 = vld [vmem:[#allocation9 + $0xc] sm:$0xf]
        %v1593 = vld [vmem:[#allocation9 + $0x10] sm:$0xf]
        %v1594 = vld [vmem:[#allocation9 + $0x14] sm:$0xf]
        %v1595 = vld [vmem:[#allocation9 + $0x18] sm:$0xf]
        %v1596 = vld [vmem:[#allocation9 + $0x1c] sm:$0xf]
        %v1597 = vld [vmem:[#allocation9 + $0x20] sm:$0xf]
        %v1598 = vld [vmem:[#allocation9 + $0x24] sm:$0xf]
        %v1599 = vld [vmem:[#allocation9 + $0x28] sm:$0xf]
        %v1600 = vld [vmem:[#allocation9 + $0x2c] sm:$0xf]
        %v1601 = vld [vmem:[#allocation9 + $0x30] sm:$0xf]
        %v1602 = vld [vmem:[#allocation9 + $0x34] sm:$0xf]
        %v1603 = vld [vmem:[#allocation9 + $0x38] sm:$0xf]
        %v1604 = vld [vmem:[#allocation9 + $0x3c] sm:$0xf]
        %v1605 = vld [vmem:[#allocation9 + $0x40] sm:$0xf]
        %v1606 = vld [vmem:[#allocation9 + $0x44] sm:$0xf]
        %v1607 = vld [vmem:[#allocation9 + $0x48] sm:$0xf]
        %v1608 = vld [vmem:[#allocation9 + $0x4c] sm:$0xf]
        %v1609 = vld [vmem:[#allocation9 + $0x50] sm:$0xf]
        %v1610 = vld [vmem:[#allocation9 + $0x54] sm:$0xf]
        %v1611 = vld [vmem:[#allocation9 + $0x58] sm:$0xf]
        %v1612 = vld [vmem:[#allocation9 + $0x5c] sm:$0xf]
        %v1613 = vld [vmem:[#allocation9 + $0x60] sm:$0xf]
        %v1614 = vld [vmem:[#allocation9 + $0x64] sm:$0xf]
        %v1615 = vld [vmem:[#allocation9 + $0x68] sm:$0xf]
        %v1616 = vld [vmem:[#allocation9 + $0x6c] sm:$0xf]
        %v1617 = vld [vmem:[#allocation9 + $0x70] sm:$0xf]
        %v1618 = vld [vmem:[#allocation9 + $0x74] sm:$0xf]
        %v1619 = vld [vmem:[#allocation9 + $0x78] sm:$0xf]
        %v1620 = vld [vmem:[#allocation9 + $0x7c] sm:$0xf]
        %v1621 = vld [vmem:[#allocation9 + $0x80] sm:$0xf]
        %v1622 = vld [vmem:[#allocation9 + $0x84] sm:$0xf]
        %v1623 = vld [vmem:[#allocation9 + $0x88] sm:$0xf]
        %v1624 = vld [vmem:[#allocation9 + $0x8c] sm:$0xf]
        %v1625 = vld [vmem:[#allocation9 + $0x90] sm:$0xf]
        %v1626 = vld [vmem:[#allocation9 + $0x94] sm:$0xf]
        %v1627 = vld [vmem:[#allocation9 + $0x98] sm:$0xf]
        %v1628 = vld [vmem:[#allocation9 + $0x9c] sm:$0xf]
        %v1629 = vld [vmem:[#allocation9 + $0xa0] sm:$0xf]
        %v1630 = vld [vmem:[#allocation9 + $0xa4] sm:$0xf]
        %v1631 = vld [vmem:[#allocation9 + $0xa8] sm:$0xf]
        %v1632 = vld [vmem:[#allocation9 + $0xac] sm:$0xf]
        %v1633 = vld [vmem:[#allocation9 + $0xb0] sm:$0xf]
        %v1634 = vld [vmem:[#allocation9 + $0xb4] sm:$0xf]
        %v1635 = vld [vmem:[#allocation9 + $0xb8] sm:$0xf]
        %v1636 = vld [vmem:[#allocation9 + $0xbc] sm:$0xf]
        %v1685 = vunpack.c.l.b16 %v1589
        %v1686 = vunpack.c.l.b16 %v1590
        %v1687 = vunpack.c.l.b16 %v1591
        %v1688 = vunpack.c.l.b16 %v1592
        %v1689 = vunpack.c.l.b16 %v1593
        %v1690 = vunpack.c.l.b16 %v1594
        %v1691 = vunpack.c.l.b16 %v1595
        %v1692 = vunpack.c.l.b16 %v1596
        %v1693 = vunpack.c.l.b16 %v1597
        %v1694 = vunpack.c.l.b16 %v1598
        %v1695 = vunpack.c.l.b16 %v1599
        %v1696 = vunpack.c.l.b16 %v1600
        %v1697 = vunpack.c.l.b16 %v1601
        %v1698 = vunpack.c.l.b16 %v1602
        %v1699 = vunpack.c.l.b16 %v1603
        %v1700 = vunpack.c.l.b16 %v1604
        %v1701 = vunpack.c.l.b16 %v1605
        %v1702 = vunpack.c.l.b16 %v1606
        %v1703 = vunpack.c.l.b16 %v1607
        %v1704 = vunpack.c.l.b16 %v1608
        %v1705 = vunpack.c.l.b16 %v1609
        %v1706 = vunpack.c.l.b16 %v1610
        %v1707 = vunpack.c.l.b16 %v1611
        %v1708 = vunpack.c.l.b16 %v1612
        %v1709 = vunpack.c.l.b16 %v1613
        %v1710 = vunpack.c.l.b16 %v1614
        %v1711 = vunpack.c.l.b16 %v1615
        %v1712 = vunpack.c.l.b16 %v1616
        %v1713 = vunpack.c.l.b16 %v1617
        %v1714 = vunpack.c.l.b16 %v1618
        %v1715 = vunpack.c.l.b16 %v1619
        %v1716 = vunpack.c.l.b16 %v1620
        %v1717 = vunpack.c.l.b16 %v1621
        %v1718 = vunpack.c.l.b16 %v1622
        %v1719 = vunpack.c.l.b16 %v1623
        %v1720 = vunpack.c.l.b16 %v1624
        %v1721 = vunpack.c.l.b16 %v1625
        %v1722 = vunpack.c.l.b16 %v1626
        %v1723 = vunpack.c.l.b16 %v1627
        %v1724 = vunpack.c.l.b16 %v1628
        %v1725 = vunpack.c.l.b16 %v1629
        %v1726 = vunpack.c.l.b16 %v1630
        %v1727 = vunpack.c.l.b16 %v1631
        %v1728 = vunpack.c.l.b16 %v1632
        %v1729 = vunpack.c.l.b16 %v1633
        %v1730 = vunpack.c.l.b16 %v1634
        %v1731 = vunpack.c.l.b16 %v1635
        %v1732 = vunpack.c.l.b16 %v1636
        %v1733 = vpack.c.b16 %v1686, %v1685
        %v1734 = vpack.c.b16 %v1688, %v1687
        %v1735 = vpack.c.b16 %v1690, %v1689
        %v1736 = vpack.c.b16 %v1692, %v1691
        %v1737 = vpack.c.b16 %v1694, %v1693
        %v1738 = vpack.c.b16 %v1696, %v1695
        %v1739 = vpack.c.b16 %v1698, %v1697
        %v1740 = vpack.c.b16 %v1700, %v1699
        %v1741 = vpack.c.b16 %v1702, %v1701
        %v1742 = vpack.c.b16 %v1704, %v1703
        %v1743 = vpack.c.b16 %v1706, %v1705
        %v1744 = vpack.c.b16 %v1708, %v1707
        %v1745 = vpack.c.b16 %v1710, %v1709
        %v1746 = vpack.c.b16 %v1712, %v1711
        %v1747 = vpack.c.b16 %v1714, %v1713
        %v1748 = vpack.c.b16 %v1716, %v1715
        %v1749 = vpack.c.b16 %v1718, %v1717
        %v1750 = vpack.c.b16 %v1720, %v1719
        %v1751 = vpack.c.b16 %v1722, %v1721
        %v1752 = vpack.c.b16 %v1724, %v1723
        %v1753 = vpack.c.b16 %v1726, %v1725
        %v1754 = vpack.c.b16 %v1728, %v1727
        %v1755 = vpack.c.b16 %v1730, %v1729
        %v1756 = vpack.c.b16 %v1732, %v1731
        %1781 = vmatprep.subr.bf16.mxu0 0
        %1782 = vmatpush1.bf16.msra.mxu0 %v1733
        %1783 = vmatprep.subr.bf16.mxu0 0
        %1784 = vmatpush1.bf16.msra.mxu0 %v1734
        %1785 = vmatprep.subr.bf16.mxu0 0
        %1786 = vmatpush1.bf16.msra.mxu0 %v1735
        %1787 = vmatprep.subr.bf16.mxu0 0
        %1788 = vmatpush1.bf16.msra.mxu0 %v1736
        %1789 = vmatprep.subr.bf16.mxu0 0
        %1790 = vmatpush1.bf16.msra.mxu0 %v1737
        %1791 = vmatprep.subr.bf16.mxu0 0
        %1792 = vmatpush1.bf16.msra.mxu0 %v1738
        %1793 = vmatprep.subr.bf16.mxu0 0
        %1794 = vmatpush1.bf16.msra.mxu0 %v1739
        %1795 = vmatprep.subr.bf16.mxu0 0
        %1796 = vmatpush1.bf16.msra.mxu0 %v1740
        %1797 = vmatprep.subr.bf16.mxu0 0
        %1798 = vmatpush1.bf16.msra.mxu0 %v1741
        %1799 = vmatprep.subr.bf16.mxu0 0
        %1800 = vmatpush1.bf16.msra.mxu0 %v1742
        %1801 = vmatprep.subr.bf16.mxu0 0
        %1802 = vmatpush1.bf16.msra.mxu0 %v1743
        %1803 = vmatprep.subr.bf16.mxu0 0
        %1804 = vmatpush1.bf16.msra.mxu0 %v1744
        %1805 = vmatprep.subr.bf16.mxu0 0
        %1806 = vmatpush1.bf16.msra.mxu0 %v1745
        %1807 = vmatprep.subr.bf16.mxu0 0
        %1808 = vmatpush1.bf16.msra.mxu0 %v1746
        %1809 = vmatprep.subr.bf16.mxu0 0
        %1810 = vmatpush1.bf16.msra.mxu0 %v1747
        %1811 = vmatprep.subr.bf16.mxu0 0
        %1812 = vmatpush1.bf16.msra.mxu0 %v1748
        %1813 = vmatprep.mubr.bf16.mxu0 %v1581
        %1814 = vmatmul.mubr.bf16.gmra.mrb[0].mxu0 %v1580
        %v1815 = vpop.f32.mrb[0].mxu0
        %v1816 = vadd.f32 0.0, %v1815
        %v1817 = vpop.f32.mrb[0].mxu0
        %v1818 = vpop.f32.mrb[0].mxu0
        %v1819 = vadd.f32 0.0, %v1818
        %v1820 = vpop.f32.mrb[0].mxu0
        %1821 = vmatprep.mubr.bf16.mxu0 %v1583
        %1822 = vmatmul.mubr.bf16.gmra.mrb[0].mxu0 %v1582
        %v1823 = vpop.f32.mrb[0].mxu0
        %v1824 = vadd.f32 0.0, %v1823
        %v1825 = vpop.f32.mrb[0].mxu0
        %v1826 = vpop.f32.mrb[0].mxu0
        %v1827 = vadd.f32 0.0, %v1826
        %v1828 = vpop.f32.mrb[0].mxu0
        %1829 = vmatprep.mubr.bf16.mxu0 %v1585
        %1830 = vmatmul.mubr.bf16.gmra.mrb[0].mxu0 %v1584
        %v1831 = vpop.f32.mrb[0].mxu0
        %v1832 = vadd.f32 0.0, %v1831
        %v1833 = vpop.f32.mrb[0].mxu0
        %v1834 = vpop.f32.mrb[0].mxu0
        %v1835 = vadd.f32 0.0, %v1834
        %v1836 = vpop.f32.mrb[0].mxu0
        %1837 = vmatprep.mubr.bf16.mxu0 %v1587
        %1838 = vmatmul.mubr.bf16.gmra.mrb[0].mxu0 %v1586
        %v1839 = vpop.f32.mrb[0].mxu0
        %v1840 = vadd.f32 0.0, %v1839
        %v1841 = vpop.f32.mrb[0].mxu0
        %v1842 = vpop.f32.mrb[0].mxu0
        %v1843 = vadd.f32 0.0, %v1842
        %v1844 = vpop.f32.mrb[0].mxu0
        %1845 = vdwg.mxu0
        %1846 = vmatprep.subr.bf16.mxu0 0
        %1847 = vmatpush1.bf16.msra.mxu0 %v1749
        %1848 = vmatprep.subr.bf16.mxu0 0
        %1849 = vmatpush1.bf16.msra.mxu0 %v1750
        %1850 = vmatprep.subr.bf16.mxu0 0
        %1851 = vmatpush1.bf16.msra.mxu0 %v1751
        %1852 = vmatprep.subr.bf16.mxu0 0
        %1853 = vmatpush1.bf16.msra.mxu0 %v1752
        %1854 = vmatprep.subr.bf16.mxu0 0
        %1855 = vmatpush1.bf16.msra.mxu0 %v1753
        %1856 = vmatprep.subr.bf16.mxu0 0
        %1857 = vmatpush1.bf16.msra.mxu0 %v1754
        %1858 = vmatprep.subr.bf16.mxu0 0
        %1859 = vmatpush1.bf16.msra.mxu0 %v1755
        %1860 = vmatprep.subr.bf16.mxu0 0
        %1861 = vmatpush1.bf16.msra.mxu0 %v1756
        %1862 = vmatprep.subr.bf16.mxu0 0
        %1863 = vmatpush1.bf16.msra.mxu0 0
        %1864 = vmatprep.subr.bf16.mxu0 0
        %1865 = vmatpush1.bf16.msra.mxu0 0
        %1866 = vmatprep.subr.bf16.mxu0 0
        %1867 = vmatpush1.bf16.msra.mxu0 0
        %1868 = vmatprep.subr.bf16.mxu0 0
        %1869 = vmatpush1.bf16.msra.mxu0 0
        %1870 = vmatprep.subr.bf16.mxu0 0
        %1871 = vmatpush1.bf16.msra.mxu0 0
        %1872 = vmatprep.subr.bf16.mxu0 0
        %1873 = vmatpush1.bf16.msra.mxu0 0
        %1874 = vmatprep.subr.bf16.mxu0 0
        %1875 = vmatpush1.bf16.msra.mxu0 0
        %1876 = vmatprep.subr.bf16.mxu0 0
        %1877 = vmatpush1.bf16.msra.mxu0 0
        %1878 = vmatprep.mubr.bf16.mxu0 0
        %1879 = vmatmul.mubr.bf16.gmra.mrb[0].mxu0 %v1582
        %v1880 = vpop.f32.mrb[0].mxu0
        %v1881 = vadd.f32 %v1816, %v1880
        %v1882 = vpop.f32.mrb[0].mxu0
        %v1883 = vpop.f32.mrb[0].mxu0
        %v1884 = vadd.f32 %v1819, %v1883
        %v1885 = vpop.f32.mrb[0].mxu0
        %1886 = vmatprep.mubr.bf16.mxu0 0
        %1887 = vmatmul.mubr.bf16.gmra.mrb[0].mxu0 %v1584
        %v1888 = vpop.f32.mrb[0].mxu0
        %v1889 = vadd.f32 %v1824, %v1888
        %v1890 = vpop.f32.mrb[0].mxu0
        %v1891 = vpop.f32.mrb[0].mxu0
        %v1892 = vadd.f32 %v1827, %v1891
        %v1893 = vpop.f32.mrb[0].mxu0
        %1894 = vmatprep.mubr.bf16.mxu0 0
        %1895 = vmatmul.mubr.bf16.gmra.mrb[0].mxu0 %v1586
        %v1896 = vpop.f32.mrb[0].mxu0
        %v1897 = vadd.f32 %v1832, %v1896
        %v1898 = vpop.f32.mrb[0].mxu0
        %v1899 = vpop.f32.mrb[0].mxu0
        %v1900 = vadd.f32 %v1835, %v1899
        %v1901 = vpop.f32.mrb[0].mxu0
        %1902 = vmatprep.mubr.bf16.mxu0 0
        %1903 = vmatmul.mubr.bf16.gmra.mrb[0].mxu0 %v1588
        %v1904 = vpop.f32.mrb[0].mxu0
        %v1905 = vadd.f32 %v1840, %v1904
        %v1906 = vpop.f32.mrb[0].mxu0
        %v1907 = vpop.f32.mrb[0].mxu0
        %v1908 = vadd.f32 %v1843, %v1907
        %v1909 = vpop.f32.mrb[0].mxu0
        %1910 = vdwg.mxu0
        %v1911 = vsel %vm773, 0.0, %v1881
        %v1912 = vsel %vm773, 0.0, %v1884
        %v1913 = vsel %vm773, 0.0, %v1889
        %v1914 = vsel %vm773, 0.0, %v1892
        %v1915 = vsel %vm773, 0.0, %v1897
        %v1916 = vsel %vm773, 0.0, %v1900
        %v1917 = vsel %vm773, 0.0, %v1905
        %v1918 = vsel %vm773, 0.0, %v1908
        %v1919 = vadd.f32 %v1911, 0.0
        %v1920 = vadd.f32 %v1912, 0.0
        %v1921 = vadd.f32 %v1913, 0.0
        %v1922 = vadd.f32 %v1914, 0.0
        %v1923 = vadd.f32 %v1915, 0.0
        %v1924 = vadd.f32 %v1916, 0.0
        %v1925 = vadd.f32 %v1917, 0.0
        %v1926 = vadd.f32 %v1918, 0.0
        %v1927 = vld [vmem:[#allocation2 + $0x8] sm:$0xff]
        %v1928 = vld [vmem:[#allocation2 + $0x10] sm:$0xff]
        %v1929 = vld [vmem:[#allocation2 + $0x18] sm:$0xff]
        %v1930 = vld [vmem:[#allocation2 + $0x20] sm:$0xff]
        %v1931 = vld [vmem:[#allocation2 + $0x28] sm:$0xff]
        %v1932 = vld [vmem:[#allocation2 + $0x30] sm:$0xff]
        %v1933 = vld [vmem:[#allocation2 + $0x38] sm:$0xff]
        %v1934 = vld [vmem:[#allocation2 + $0x40] sm:$0xff]
        %v1935 = vld [vmem:[#allocation2 + $0x48] sm:$0xff]
        %v1936 = vld [vmem:[#allocation2 + $0x50] sm:$0xff]
        %v1937 = vpack.c.bf16 %v1928, %v1927
        %v1938 = vpack.c.bf16 %v1929, %v1928
        %v1939 = vpack.c.bf16 %v1930, %v1929
        %v1940 = vpack.c.bf16 %v1931, %v1930
        %v1941 = vpack.c.bf16 %v1932, %v1931
        %v1942 = vpack.c.bf16 %v1933, %v1932
        %v1943 = vpack.c.bf16 %v1934, %v1933
        %v1944 = vpack.c.bf16 %v1935, %v1934
        %v1945 = vpack.c.bf16 %v1936, %v1935
        %s1946 = scalar_lea.vmem [#allocation9], 192
        %v1947 = vld [vmem:[%s1946] sm:$0xf]
        %v1948 = vld [vmem:[%s1946 + $0x4] sm:$0xf]
        %v1949 = vld [vmem:[%s1946 + $0x8] sm:$0xf]
        %v1950 = vld [vmem:[%s1946 + $0xc] sm:$0xf]
        %v1951 = vld [vmem:[%s1946 + $0x10] sm:$0xf]
        %v1952 = vld [vmem:[%s1946 + $0x14] sm:$0xf]
        %v1953 = vld [vmem:[%s1946 + $0x18] sm:$0xf]
        %v1954 = vld [vmem:[%s1946 + $0x1c] sm:$0xf]
        %v1955 = vld [vmem:[%s1946 + $0x20] sm:$0xf]
        %v1956 = vld [vmem:[%s1946 + $0x24] sm:$0xf]
        %v1957 = vld [vmem:[%s1946 + $0x28] sm:$0xf]
        %v1958 = vld [vmem:[%s1946 + $0x2c] sm:$0xf]
        %v1959 = vld [vmem:[%s1946 + $0x30] sm:$0xf]
        %v1960 = vld [vmem:[%s1946 + $0x34] sm:$0xf]
        %v1961 = vld [vmem:[%s1946 + $0x38] sm:$0xf]
        %v1962 = vld [vmem:[%s1946 + $0x3c] sm:$0xf]
        %v1963 = vld [vmem:[%s1946 + $0x40] sm:$0xf]
        %v1964 = vld [vmem:[%s1946 + $0x44] sm:$0xf]
        %v1965 = vld [vmem:[%s1946 + $0x48] sm:$0xf]
        %v1966 = vld [vmem:[%s1946 + $0x4c] sm:$0xf]
        %v1967 = vld [vmem:[%s1946 + $0x50] sm:$0xf]
        %v1968 = vld [vmem:[%s1946 + $0x54] sm:$0xf]
        %v1969 = vld [vmem:[%s1946 + $0x58] sm:$0xf]
        %v1970 = vld [vmem:[%s1946 + $0x5c] sm:$0xf]
        %v1971 = vld [vmem:[%s1946 + $0x60] sm:$0xf]
        %v1972 = vld [vmem:[%s1946 + $0x64] sm:$0xf]
        %v1973 = vld [vmem:[%s1946 + $0x68] sm:$0xf]
        %v1974 = vld [vmem:[%s1946 + $0x6c] sm:$0xf]
        %v1975 = vld [vmem:[%s1946 + $0x70] sm:$0xf]
        %v1976 = vld [vmem:[%s1946 + $0x74] sm:$0xf]
        %v1977 = vld [vmem:[%s1946 + $0x78] sm:$0xf]
        %v1978 = vld [vmem:[%s1946 + $0x7c] sm:$0xf]
        %v1979 = vld [vmem:[%s1946 + $0x80] sm:$0xf]
        %v1980 = vld [vmem:[%s1946 + $0x84] sm:$0xf]
        %v1981 = vld [vmem:[%s1946 + $0x88] sm:$0xf]
        %v1982 = vld [vmem:[%s1946 + $0x8c] sm:$0xf]
        %v1983 = vld [vmem:[%s1946 + $0x90] sm:$0xf]
        %v1984 = vld [vmem:[%s1946 + $0x94] sm:$0xf]
        %v1985 = vld [vmem:[%s1946 + $0x98] sm:$0xf]
        %v1986 = vld [vmem:[%s1946 + $0x9c] sm:$0xf]
        %v1987 = vld [vmem:[%s1946 + $0xa0] sm:$0xf]
        %v1988 = vld [vmem:[%s1946 + $0xa4] sm:$0xf]
        %v1989 = vld [vmem:[%s1946 + $0xa8] sm:$0xf]
        %v1990 = vld [vmem:[%s1946 + $0xac] sm:$0xf]
        %v1991 = vld [vmem:[%s1946 + $0xb0] sm:$0xf]
        %v1992 = vld [vmem:[%s1946 + $0xb4] sm:$0xf]
        %v1993 = vld [vmem:[%s1946 + $0xb8] sm:$0xf]
        %v1994 = vld [vmem:[%s1946 + $0xbc] sm:$0xf]
        %v2043 = vunpack.c.l.b16 %v1947
        %v2044 = vunpack.c.l.b16 %v1948
        %v2045 = vunpack.c.l.b16 %v1949
        %v2046 = vunpack.c.l.b16 %v1950
        %v2047 = vunpack.c.l.b16 %v1951
        %v2048 = vunpack.c.l.b16 %v1952
        %v2049 = vunpack.c.l.b16 %v1953
        %v2050 = vunpack.c.l.b16 %v1954
        %v2051 = vunpack.c.l.b16 %v1955
        %v2052 = vunpack.c.l.b16 %v1956
        %v2053 = vunpack.c.l.b16 %v1957
        %v2054 = vunpack.c.l.b16 %v1958
        %v2055 = vunpack.c.l.b16 %v1959
        %v2056 = vunpack.c.l.b16 %v1960
        %v2057 = vunpack.c.l.b16 %v1961
        %v2058 = vunpack.c.l.b16 %v1962
        %v2059 = vunpack.c.l.b16 %v1963
        %v2060 = vunpack.c.l.b16 %v1964
        %v2061 = vunpack.c.l.b16 %v1965
        %v2062 = vunpack.c.l.b16 %v1966
        %v2063 = vunpack.c.l.b16 %v1967
        %v2064 = vunpack.c.l.b16 %v1968
        %v2065 = vunpack.c.l.b16 %v1969
        %v2066 = vunpack.c.l.b16 %v1970
        %v2067 = vunpack.c.l.b16 %v1971
        %v2068 = vunpack.c.l.b16 %v1972
        %v2069 = vunpack.c.l.b16 %v1973
        %v2070 = vunpack.c.l.b16 %v1974
        %v2071 = vunpack.c.l.b16 %v1975
        %v2072 = vunpack.c.l.b16 %v1976
        %v2073 = vunpack.c.l.b16 %v1977
        %v2074 = vunpack.c.l.b16 %v1978
        %v2075 = vunpack.c.l.b16 %v1979
        %v2076 = vunpack.c.l.b16 %v1980
        %v2077 = vunpack.c.l.b16 %v1981
        %v2078 = vunpack.c.l.b16 %v1982
        %v2079 = vunpack.c.l.b16 %v1983
        %v2080 = vunpack.c.l.b16 %v1984
        %v2081 = vunpack.c.l.b16 %v1985
        %v2082 = vunpack.c.l.b16 %v1986
        %v2083 = vunpack.c.l.b16 %v1987
        %v2084 = vunpack.c.l.b16 %v1988
        %v2085 = vunpack.c.l.b16 %v1989
        %v2086 = vunpack.c.l.b16 %v1990
        %v2087 = vunpack.c.l.b16 %v1991
        %v2088 = vunpack.c.l.b16 %v1992
        %v2089 = vunpack.c.l.b16 %v1993
        %v2090 = vunpack.c.l.b16 %v1994
        %v2091 = vpack.c.b16 %v2044, %v2043
        %v2092 = vpack.c.b16 %v2046, %v2045
        %v2093 = vpack.c.b16 %v2048, %v2047
        %v2094 = vpack.c.b16 %v2050, %v2049
        %v2095 = vpack.c.b16 %v2052, %v2051
        %v2096 = vpack.c.b16 %v2054, %v2053
        %v2097 = vpack.c.b16 %v2056, %v2055
        %v2098 = vpack.c.b16 %v2058, %v2057
        %v2099 = vpack.c.b16 %v2060, %v2059
        %v2100 = vpack.c.b16 %v2062, %v2061
        %v2101 = vpack.c.b16 %v2064, %v2063
        %v2102 = vpack.c.b16 %v2066, %v2065
        %v2103 = vpack.c.b16 %v2068, %v2067
        %v2104 = vpack.c.b16 %v2070, %v2069
        %v2105 = vpack.c.b16 %v2072, %v2071
        %v2106 = vpack.c.b16 %v2074, %v2073
        %v2107 = vpack.c.b16 %v2076, %v2075
        %v2108 = vpack.c.b16 %v2078, %v2077
        %v2109 = vpack.c.b16 %v2080, %v2079
        %v2110 = vpack.c.b16 %v2082, %v2081
        %v2111 = vpack.c.b16 %v2084, %v2083
        %v2112 = vpack.c.b16 %v2086, %v2085
        %v2113 = vpack.c.b16 %v2088, %v2087
        %v2114 = vpack.c.b16 %v2090, %v2089
        %2139 = vmatprep.subr.bf16.mxu0 0
        %2140 = vmatpush1.bf16.msra.mxu0 %v2091
        %2141 = vmatprep.subr.bf16.mxu0 0
        %2142 = vmatpush1.bf16.msra.mxu0 %v2092
        %2143 = vmatprep.subr.bf16.mxu0 0
        %2144 = vmatpush1.bf16.msra.mxu0 %v2093
        %2145 = vmatprep.subr.bf16.mxu0 0
        %2146 = vmatpush1.bf16.msra.mxu0 %v2094
        %2147 = vmatprep.subr.bf16.mxu0 0
        %2148 = vmatpush1.bf16.msra.mxu0 %v2095
        %2149 = vmatprep.subr.bf16.mxu0 0
        %2150 = vmatpush1.bf16.msra.mxu0 %v2096
        %2151 = vmatprep.subr.bf16.mxu0 0
        %2152 = vmatpush1.bf16.msra.mxu0 %v2097
        %2153 = vmatprep.subr.bf16.mxu0 0
        %2154 = vmatpush1.bf16.msra.mxu0 %v2098
        %2155 = vmatprep.subr.bf16.mxu0 0
        %2156 = vmatpush1.bf16.msra.mxu0 %v2099
        %2157 = vmatprep.subr.bf16.mxu0 0
        %2158 = vmatpush1.bf16.msra.mxu0 %v2100
        %2159 = vmatprep.subr.bf16.mxu0 0
        %2160 = vmatpush1.bf16.msra.mxu0 %v2101
        %2161 = vmatprep.subr.bf16.mxu0 0
        %2162 = vmatpush1.bf16.msra.mxu0 %v2102
        %2163 = vmatprep.subr.bf16.mxu0 0
        %2164 = vmatpush1.bf16.msra.mxu0 %v2103
        %2165 = vmatprep.subr.bf16.mxu0 0
        %2166 = vmatpush1.bf16.msra.mxu0 %v2104
        %2167 = vmatprep.subr.bf16.mxu0 0
        %2168 = vmatpush1.bf16.msra.mxu0 %v2105
        %2169 = vmatprep.subr.bf16.mxu0 0
        %2170 = vmatpush1.bf16.msra.mxu0 %v2106
        %2171 = vmatprep.mubr.bf16.mxu0 %v1938
        %2172 = vmatmul.mubr.bf16.gmra.mrb[0].mxu0 %v1937
        %v2173 = vpop.f32.mrb[0].mxu0
        %v2174 = vadd.f32 0.0, %v2173
        %v2175 = vpop.f32.mrb[0].mxu0
        %v2176 = vpop.f32.mrb[0].mxu0
        %v2177 = vadd.f32 0.0, %v2176
        %v2178 = vpop.f32.mrb[0].mxu0
        %2179 = vmatprep.mubr.bf16.mxu0 %v1940
        %2180 = vmatmul.mubr.bf16.gmra.mrb[0].mxu0 %v1939
        %v2181 = vpop.f32.mrb[0].mxu0
        %v2182 = vadd.f32 0.0, %v2181
        %v2183 = vpop.f32.mrb[0].mxu0
        %v2184 = vpop.f32.mrb[0].mxu0
        %v2185 = vadd.f32 0.0, %v2184
        %v2186 = vpop.f32.mrb[0].mxu0
        %2187 = vmatprep.mubr.bf16.mxu0 %v1942
        %2188 = vmatmul.mubr.bf16.gmra.mrb[0].mxu0 %v1941
        %v2189 = vpop.f32.mrb[0].mxu0
        %v2190 = vadd.f32 0.0, %v2189
        %v2191 = vpop.f32.mrb[0].mxu0
        %v2192 = vpop.f32.mrb[0].mxu0
        %v2193 = vadd.f32 0.0, %v2192
        %v2194 = vpop.f32.mrb[0].mxu0
        %2195 = vmatprep.mubr.bf16.mxu0 %v1944
        %2196 = vmatmul.mubr.bf16.gmra.mrb[0].mxu0 %v1943
        %v2197 = vpop.f32.mrb[0].mxu0
        %v2198 = vadd.f32 0.0, %v2197
        %v2199 = vpop.f32.mrb[0].mxu0
        %v2200 = vpop.f32.mrb[0].mxu0
        %v2201 = vadd.f32 0.0, %v2200
        %v2202 = vpop.f32.mrb[0].mxu0
        %2203 = vdwg.mxu0
        %2204 = vmatprep.subr.bf16.mxu0 0
        %2205 = vmatpush1.bf16.msra.mxu0 %v2107
        %2206 = vmatprep.subr.bf16.mxu0 0
        %2207 = vmatpush1.bf16.msra.mxu0 %v2108
        %2208 = vmatprep.subr.bf16.mxu0 0
        %2209 = vmatpush1.bf16.msra.mxu0 %v2109
        %2210 = vmatprep.subr.bf16.mxu0 0
        %2211 = vmatpush1.bf16.msra.mxu0 %v2110
        %2212 = vmatprep.subr.bf16.mxu0 0
        %2213 = vmatpush1.bf16.msra.mxu0 %v2111
        %2214 = vmatprep.subr.bf16.mxu0 0
        %2215 = vmatpush1.bf16.msra.mxu0 %v2112
        %2216 = vmatprep.subr.bf16.mxu0 0
        %2217 = vmatpush1.bf16.msra.mxu0 %v2113
        %2218 = vmatprep.subr.bf16.mxu0 0
        %2219 = vmatpush1.bf16.msra.mxu0 %v2114
        %2220 = vmatprep.subr.bf16.mxu0 0
        %2221 = vmatpush1.bf16.msra.mxu0 0
        %2222 = vmatprep.subr.bf16.mxu0 0
        %2223 = vmatpush1.bf16.msra.mxu0 0
        %2224 = vmatprep.subr.bf16.mxu0 0
        %2225 = vmatpush1.bf16.msra.mxu0 0
        %2226 = vmatprep.subr.bf16.mxu0 0
        %2227 = vmatpush1.bf16.msra.mxu0 0
        %2228 = vmatprep.subr.bf16.mxu0 0
        %2229 = vmatpush1.bf16.msra.mxu0 0
        %2230 = vmatprep.subr.bf16.mxu0 0
        %2231 = vmatpush1.bf16.msra.mxu0 0
        %2232 = vmatprep.subr.bf16.mxu0 0
        %2233 = vmatpush1.bf16.msra.mxu0 0
        %2234 = vmatprep.subr.bf16.mxu0 0
        %2235 = vmatpush1.bf16.msra.mxu0 0
        %2236 = vmatprep.mubr.bf16.mxu0 0
        %2237 = vmatmul.mubr.bf16.gmra.mrb[0].mxu0 %v1939
        %v2238 = vpop.f32.mrb[0].mxu0
        %v2239 = vadd.f32 %v2174, %v2238
        %v2240 = vpop.f32.mrb[0].mxu0
        %v2241 = vpop.f32.mrb[0].mxu0
        %v2242 = vadd.f32 %v2177, %v2241
        %v2243 = vpop.f32.mrb[0].mxu0
        %2244 = vmatprep.mubr.bf16.mxu0 0
        %2245 = vmatmul.mubr.bf16.gmra.mrb[0].mxu0 %v1941
        %v2246 = vpop.f32.mrb[0].mxu0
        %v2247 = vadd.f32 %v2182, %v2246
        %v2248 = vpop.f32.mrb[0].mxu0
        %v2249 = vpop.f32.mrb[0].mxu0
        %v2250 = vadd.f32 %v2185, %v2249
        %v2251 = vpop.f32.mrb[0].mxu0
        %2252 = vmatprep.mubr.bf16.mxu0 0
        %2253 = vmatmul.mubr.bf16.gmra.mrb[0].mxu0 %v1943
        %v2254 = vpop.f32.mrb[0].mxu0
        %v2255 = vadd.f32 %v2190, %v2254
        %v2256 = vpop.f32.mrb[0].mxu0
        %v2257 = vpop.f32.mrb[0].mxu0
        %v2258 = vadd.f32 %v2193, %v2257
        %v2259 = vpop.f32.mrb[0].mxu0
        %2260 = vmatprep.mubr.bf16.mxu0 0
        %2261 = vmatmul.mubr.bf16.gmra.mrb[0].mxu0 %v1945
        %v2262 = vpop.f32.mrb[0].mxu0
        %v2263 = vadd.f32 %v2198, %v2262
        %v2264 = vpop.f32.mrb[0].mxu0
        %v2265 = vpop.f32.mrb[0].mxu0
        %v2266 = vadd.f32 %v2201, %v2265
        %v2267 = vpop.f32.mrb[0].mxu0
        %2268 = vdwg.mxu0
        %v2269 = vadd.f32 %v1919, %v2239
        %v2270 = vadd.f32 %v1920, %v2242
        %v2271 = vadd.f32 %v1921, %v2247
        %v2272 = vadd.f32 %v1922, %v2250
        %v2273 = vadd.f32 %v1923, %v2255
        %v2274 = vadd.f32 %v1924, %v2258
        %v2275 = vadd.f32 %v1925, %v2263
        %v2276 = vadd.f32 %v1926, %v2266
        %v2277 = vld [vmem:[#allocation2 + $0x9] sm:$0xff]
        %v2278 = vld [vmem:[#allocation2 + $0x11] sm:$0xff]
        %v2279 = vld [vmem:[#allocation2 + $0x19] sm:$0xff]
        %v2280 = vld [vmem:[#allocation2 + $0x21] sm:$0xff]
        %v2281 = vld [vmem:[#allocation2 + $0x29] sm:$0xff]
        %v2282 = vld [vmem:[#allocation2 + $0x31] sm:$0xff]
        %v2283 = vld [vmem:[#allocation2 + $0x39] sm:$0xff]
        %v2284 = vld [vmem:[#allocation2 + $0x41] sm:$0xff]
        %v2285 = vld [vmem:[#allocation2 + $0x49] sm:$0xff]
        %v2286 = vld [vmem:[#allocation2 + $0x51] sm:$0xff]
        %v2287 = vpack.c.bf16 %v2278, %v2277
        %v2288 = vpack.c.bf16 %v2279, %v2278
        %v2289 = vpack.c.bf16 %v2280, %v2279
        %v2290 = vpack.c.bf16 %v2281, %v2280
        %v2291 = vpack.c.bf16 %v2282, %v2281
        %v2292 = vpack.c.bf16 %v2283, %v2282
        %v2293 = vpack.c.bf16 %v2284, %v2283
        %v2294 = vpack.c.bf16 %v2285, %v2284
        %v2295 = vpack.c.bf16 %v2286, %v2285
        %s2296 = scalar_lea.vmem [#allocation9], 384
        %v2297 = vld [vmem:[%s2296] sm:$0xf]
        %v2298 = vld [vmem:[%s2296 + $0x4] sm:$0xf]
        %v2299 = vld [vmem:[%s2296 + $0x8] sm:$0xf]
        %v2300 = vld [vmem:[%s2296 + $0xc] sm:$0xf]
        %v2301 = vld [vmem:[%s2296 + $0x10] sm:$0xf]
        %v2302 = vld [vmem:[%s2296 + $0x14] sm:$0xf]
        %v2303 = vld [vmem:[%s2296 + $0x18] sm:$0xf]
        %v2304 = vld [vmem:[%s2296 + $0x1c] sm:$0xf]
        %v2305 = vld [vmem:[%s2296 + $0x20] sm:$0xf]
        %v2306 = vld [vmem:[%s2296 + $0x24] sm:$0xf]
        %v2307 = vld [vmem:[%s2296 + $0x28] sm:$0xf]
        %v2308 = vld [vmem:[%s2296 + $0x2c] sm:$0xf]
        %v2309 = vld [vmem:[%s2296 + $0x30] sm:$0xf]
        %v2310 = vld [vmem:[%s2296 + $0x34] sm:$0xf]
        %v2311 = vld [vmem:[%s2296 + $0x38] sm:$0xf]
        %v2312 = vld [vmem:[%s2296 + $0x3c] sm:$0xf]
        %v2313 = vld [vmem:[%s2296 + $0x40] sm:$0xf]
        %v2314 = vld [vmem:[%s2296 + $0x44] sm:$0xf]
        %v2315 = vld [vmem:[%s2296 + $0x48] sm:$0xf]
        %v2316 = vld [vmem:[%s2296 + $0x4c] sm:$0xf]
        %v2317 = vld [vmem:[%s2296 + $0x50] sm:$0xf]
        %v2318 = vld [vmem:[%s2296 + $0x54] sm:$0xf]
        %v2319 = vld [vmem:[%s2296 + $0x58] sm:$0xf]
        %v2320 = vld [vmem:[%s2296 + $0x5c] sm:$0xf]
        %v2321 = vld [vmem:[%s2296 + $0x60] sm:$0xf]
        %v2322 = vld [vmem:[%s2296 + $0x64] sm:$0xf]
        %v2323 = vld [vmem:[%s2296 + $0x68] sm:$0xf]
        %v2324 = vld [vmem:[%s2296 + $0x6c] sm:$0xf]
        %v2325 = vld [vmem:[%s2296 + $0x70] sm:$0xf]
        %v2326 = vld [vmem:[%s2296 + $0x74] sm:$0xf]
        %v2327 = vld [vmem:[%s2296 + $0x78] sm:$0xf]
        %v2328 = vld [vmem:[%s2296 + $0x7c] sm:$0xf]
        %v2329 = vld [vmem:[%s2296 + $0x80] sm:$0xf]
        %v2330 = vld [vmem:[%s2296 + $0x84] sm:$0xf]
        %v2331 = vld [vmem:[%s2296 + $0x88] sm:$0xf]
        %v2332 = vld [vmem:[%s2296 + $0x8c] sm:$0xf]
        %v2333 = vld [vmem:[%s2296 + $0x90] sm:$0xf]
        %v2334 = vld [vmem:[%s2296 + $0x94] sm:$0xf]
        %v2335 = vld [vmem:[%s2296 + $0x98] sm:$0xf]
        %v2336 = vld [vmem:[%s2296 + $0x9c] sm:$0xf]
        %v2337 = vld [vmem:[%s2296 + $0xa0] sm:$0xf]
        %v2338 = vld [vmem:[%s2296 + $0xa4] sm:$0xf]
        %v2339 = vld [vmem:[%s2296 + $0xa8] sm:$0xf]
        %v2340 = vld [vmem:[%s2296 + $0xac] sm:$0xf]
        %v2341 = vld [vmem:[%s2296 + $0xb0] sm:$0xf]
        %v2342 = vld [vmem:[%s2296 + $0xb4] sm:$0xf]
        %v2343 = vld [vmem:[%s2296 + $0xb8] sm:$0xf]
        %v2344 = vld [vmem:[%s2296 + $0xbc] sm:$0xf]
        %v2393 = vunpack.c.l.b16 %v2297
        %v2394 = vunpack.c.l.b16 %v2298
        %v2395 = vunpack.c.l.b16 %v2299
        %v2396 = vunpack.c.l.b16 %v2300
        %v2397 = vunpack.c.l.b16 %v2301
        %v2398 = vunpack.c.l.b16 %v2302
        %v2399 = vunpack.c.l.b16 %v2303
        %v2400 = vunpack.c.l.b16 %v2304
        %v2401 = vunpack.c.l.b16 %v2305
        %v2402 = vunpack.c.l.b16 %v2306
        %v2403 = vunpack.c.l.b16 %v2307
        %v2404 = vunpack.c.l.b16 %v2308
        %v2405 = vunpack.c.l.b16 %v2309
        %v2406 = vunpack.c.l.b16 %v2310
        %v2407 = vunpack.c.l.b16 %v2311
        %v2408 = vunpack.c.l.b16 %v2312
        %v2409 = vunpack.c.l.b16 %v2313
        %v2410 = vunpack.c.l.b16 %v2314
        %v2411 = vunpack.c.l.b16 %v2315
        %v2412 = vunpack.c.l.b16 %v2316
        %v2413 = vunpack.c.l.b16 %v2317
        %v2414 = vunpack.c.l.b16 %v2318
        %v2415 = vunpack.c.l.b16 %v2319
        %v2416 = vunpack.c.l.b16 %v2320
        %v2417 = vunpack.c.l.b16 %v2321
        %v2418 = vunpack.c.l.b16 %v2322
        %v2419 = vunpack.c.l.b16 %v2323
        %v2420 = vunpack.c.l.b16 %v2324
        %v2421 = vunpack.c.l.b16 %v2325
        %v2422 = vunpack.c.l.b16 %v2326
        %v2423 = vunpack.c.l.b16 %v2327
        %v2424 = vunpack.c.l.b16 %v2328
        %v2425 = vunpack.c.l.b16 %v2329
        %v2426 = vunpack.c.l.b16 %v2330
        %v2427 = vunpack.c.l.b16 %v2331
        %v2428 = vunpack.c.l.b16 %v2332
        %v2429 = vunpack.c.l.b16 %v2333
        %v2430 = vunpack.c.l.b16 %v2334
        %v2431 = vunpack.c.l.b16 %v2335
        %v2432 = vunpack.c.l.b16 %v2336
        %v2433 = vunpack.c.l.b16 %v2337
        %v2434 = vunpack.c.l.b16 %v2338
        %v2435 = vunpack.c.l.b16 %v2339
        %v2436 = vunpack.c.l.b16 %v2340
        %v2437 = vunpack.c.l.b16 %v2341
        %v2438 = vunpack.c.l.b16 %v2342
        %v2439 = vunpack.c.l.b16 %v2343
        %v2440 = vunpack.c.l.b16 %v2344
        %v2441 = vpack.c.b16 %v2394, %v2393
        %v2442 = vpack.c.b16 %v2396, %v2395
        %v2443 = vpack.c.b16 %v2398, %v2397
        %v2444 = vpack.c.b16 %v2400, %v2399
        %v2445 = vpack.c.b16 %v2402, %v2401
        %v2446 = vpack.c.b16 %v2404, %v2403
        %v2447 = vpack.c.b16 %v2406, %v2405
        %v2448 = vpack.c.b16 %v2408, %v2407
        %v2449 = vpack.c.b16 %v2410, %v2409
        %v2450 = vpack.c.b16 %v2412, %v2411
        %v2451 = vpack.c.b16 %v2414, %v2413
        %v2452 = vpack.c.b16 %v2416, %v2415
        %v2453 = vpack.c.b16 %v2418, %v2417
        %v2454 = vpack.c.b16 %v2420, %v2419
        %v2455 = vpack.c.b16 %v2422, %v2421
        %v2456 = vpack.c.b16 %v2424, %v2423
        %v2457 = vpack.c.b16 %v2426, %v2425
        %v2458 = vpack.c.b16 %v2428, %v2427
        %v2459 = vpack.c.b16 %v2430, %v2429
        %v2460 = vpack.c.b16 %v2432, %v2431
        %v2461 = vpack.c.b16 %v2434, %v2433
        %v2462 = vpack.c.b16 %v2436, %v2435
        %v2463 = vpack.c.b16 %v2438, %v2437
        %v2464 = vpack.c.b16 %v2440, %v2439
        %2489 = vmatprep.subr.bf16.mxu0 0
        %2490 = vmatpush1.bf16.msra.mxu0 %v2441
        %2491 = vmatprep.subr.bf16.mxu0 0
        %2492 = vmatpush1.bf16.msra.mxu0 %v2442
        %2493 = vmatprep.subr.bf16.mxu0 0
        %2494 = vmatpush1.bf16.msra.mxu0 %v2443
        %2495 = vmatprep.subr.bf16.mxu0 0
        %2496 = vmatpush1.bf16.msra.mxu0 %v2444
        %2497 = vmatprep.subr.bf16.mxu0 0
        %2498 = vmatpush1.bf16.msra.mxu0 %v2445
        %2499 = vmatprep.subr.bf16.mxu0 0
        %2500 = vmatpush1.bf16.msra.mxu0 %v2446
        %2501 = vmatprep.subr.bf16.mxu0 0
        %2502 = vmatpush1.bf16.msra.mxu0 %v2447
        %2503 = vmatprep.subr.bf16.mxu0 0
        %2504 = vmatpush1.bf16.msra.mxu0 %v2448
        %2505 = vmatprep.subr.bf16.mxu0 0
        %2506 = vmatpush1.bf16.msra.mxu0 %v2449
        %2507 = vmatprep.subr.bf16.mxu0 0
        %2508 = vmatpush1.bf16.msra.mxu0 %v2450
        %2509 = vmatprep.subr.bf16.mxu0 0
        %2510 = vmatpush1.bf16.msra.mxu0 %v2451
        %2511 = vmatprep.subr.bf16.mxu0 0
        %2512 = vmatpush1.bf16.msra.mxu0 %v2452
        %2513 = vmatprep.subr.bf16.mxu0 0
        %2514 = vmatpush1.bf16.msra.mxu0 %v2453
        %2515 = vmatprep.subr.bf16.mxu0 0
        %2516 = vmatpush1.bf16.msra.mxu0 %v2454
        %2517 = vmatprep.subr.bf16.mxu0 0
        %2518 = vmatpush1.bf16.msra.mxu0 %v2455
        %2519 = vmatprep.subr.bf16.mxu0 0
        %2520 = vmatpush1.bf16.msra.mxu0 %v2456
        %2521 = vmatprep.mubr.bf16.mxu0 %v2288
        %2522 = vmatmul.mubr.bf16.gmra.mrb[0].mxu0 %v2287
        %v2523 = vpop.f32.mrb[0].mxu0
        %v2524 = vadd.f32 0.0, %v2523
        %v2525 = vpop.f32.mrb[0].mxu0
        %v2526 = vpop.f32.mrb[0].mxu0
        %v2527 = vadd.f32 0.0, %v2526
        %v2528 = vpop.f32.mrb[0].mxu0
        %2529 = vmatprep.mubr.bf16.mxu0 %v2290
        %2530 = vmatmul.mubr.bf16.gmra.mrb[0].mxu0 %v2289
        %v2531 = vpop.f32.mrb[0].mxu0
        %v2532 = vadd.f32 0.0, %v2531
        %v2533 = vpop.f32.mrb[0].mxu0
        %v2534 = vpop.f32.mrb[0].mxu0
        %v2535 = vadd.f32 0.0, %v2534
        %v2536 = vpop.f32.mrb[0].mxu0
        %2537 = vmatprep.mubr.bf16.mxu0 %v2292
        %2538 = vmatmul.mubr.bf16.gmra.mrb[0].mxu0 %v2291
        %v2539 = vpop.f32.mrb[0].mxu0
        %v2540 = vadd.f32 0.0, %v2539
        %v2541 = vpop.f32.mrb[0].mxu0
        %v2542 = vpop.f32.mrb[0].mxu0
        %v2543 = vadd.f32 0.0, %v2542
        %v2544 = vpop.f32.mrb[0].mxu0
        %2545 = vmatprep.mubr.bf16.mxu0 %v2294
        %2546 = vmatmul.mubr.bf16.gmra.mrb[0].mxu0 %v2293
        %v2547 = vpop.f32.mrb[0].mxu0
        %v2548 = vadd.f32 0.0, %v2547
        %v2549 = vpop.f32.mrb[0].mxu0
        %v2550 = vpop.f32.mrb[0].mxu0
        %v2551 = vadd.f32 0.0, %v2550
        %v2552 = vpop.f32.mrb[0].mxu0
        %2553 = vdwg.mxu0
        %2554 = vmatprep.subr.bf16.mxu0 0
        %2555 = vmatpush1.bf16.msra.mxu0 %v2457
        %2556 = vmatprep.subr.bf16.mxu0 0
        %2557 = vmatpush1.bf16.msra.mxu0 %v2458
        %2558 = vmatprep.subr.bf16.mxu0 0
        %2559 = vmatpush1.bf16.msra.mxu0 %v2459
        %2560 = vmatprep.subr.bf16.mxu0 0
        %2561 = vmatpush1.bf16.msra.mxu0 %v2460
        %2562 = vmatprep.subr.bf16.mxu0 0
        %2563 = vmatpush1.bf16.msra.mxu0 %v2461
        %2564 = vmatprep.subr.bf16.mxu0 0
        %2565 = vmatpush1.bf16.msra.mxu0 %v2462
        %2566 = vmatprep.subr.bf16.mxu0 0
        %2567 = vmatpush1.bf16.msra.mxu0 %v2463
        %2568 = vmatprep.subr.bf16.mxu0 0
        %2569 = vmatpush1.bf16.msra.mxu0 %v2464
        %2570 = vmatprep.subr.bf16.mxu0 0
        %2571 = vmatpush1.bf16.msra.mxu0 0
        %2572 = vmatprep.subr.bf16.mxu0 0
        %2573 = vmatpush1.bf16.msra.mxu0 0
        %2574 = vmatprep.subr.bf16.mxu0 0
        %2575 = vmatpush1.bf16.msra.mxu0 0
        %2576 = vmatprep.subr.bf16.mxu0 0
        %2577 = vmatpush1.bf16.msra.mxu0 0
        %2578 = vmatprep.subr.bf16.mxu0 0
        %2579 = vmatpush1.bf16.msra.mxu0 0
        %2580 = vmatprep.subr.bf16.mxu0 0
        %2581 = vmatpush1.bf16.msra.mxu0 0
        %2582 = vmatprep.subr.bf16.mxu0 0
        %2583 = vmatpush1.bf16.msra.mxu0 0
        %2584 = vmatprep.subr.bf16.mxu0 0
        %2585 = vmatpush1.bf16.msra.mxu0 0
        %2586 = vmatprep.mubr.bf16.mxu0 0
        %2587 = vmatmul.mubr.bf16.gmra.mrb[0].mxu0 %v2289
        %v2588 = vpop.f32.mrb[0].mxu0
        %v2589 = vadd.f32 %v2524, %v2588
        %v2590 = vpop.f32.mrb[0].mxu0
        %v2591 = vpop.f32.mrb[0].mxu0
        %v2592 = vadd.f32 %v2527, %v2591
        %v2593 = vpop.f32.mrb[0].mxu0
        %2594 = vmatprep.mubr.bf16.mxu0 0
        %2595 = vmatmul.mubr.bf16.gmra.mrb[0].mxu0 %v2291
        %v2596 = vpop.f32.mrb[0].mxu0
        %v2597 = vadd.f32 %v2532, %v2596
        %v2598 = vpop.f32.mrb[0].mxu0
        %v2599 = vpop.f32.mrb[0].mxu0
        %v2600 = vadd.f32 %v2535, %v2599
        %v2601 = vpop.f32.mrb[0].mxu0
        %2602 = vmatprep.mubr.bf16.mxu0 0
        %2603 = vmatmul.mubr.bf16.gmra.mrb[0].mxu0 %v2293
        %v2604 = vpop.f32.mrb[0].mxu0
        %v2605 = vadd.f32 %v2540, %v2604
        %v2606 = vpop.f32.mrb[0].mxu0
        %v2607 = vpop.f32.mrb[0].mxu0
        %v2608 = vadd.f32 %v2543, %v2607
        %v2609 = vpop.f32.mrb[0].mxu0
        %2610 = vmatprep.mubr.bf16.mxu0 0
        %2611 = vmatmul.mubr.bf16.gmra.mrb[0].mxu0 %v2295
        %v2612 = vpop.f32.mrb[0].mxu0
        %v2613 = vadd.f32 %v2548, %v2612
        %v2614 = vpop.f32.mrb[0].mxu0
        %v2615 = vpop.f32.mrb[0].mxu0
        %v2616 = vadd.f32 %v2551, %v2615
        %v2617 = vpop.f32.mrb[0].mxu0
        %2618 = vdwg.mxu0
        %v2619 = vsel %vm1483, 0.0, %v2589
        %v2620 = vsel %vm1483, 0.0, %v2592
        %v2621 = vsel %vm1483, 0.0, %v2597
        %v2622 = vsel %vm1483, 0.0, %v2600
        %v2623 = vsel %vm1483, 0.0, %v2605
        %v2624 = vsel %vm1483, 0.0, %v2608
        %v2625 = vsel %vm1483, 0.0, %v2613
        %v2626 = vsel %vm1483, 0.0, %v2616
        %v2627 = vadd.f32 %v2269, %v2619
        %v2628 = vadd.f32 %v2270, %v2620
        %v2629 = vadd.f32 %v2271, %v2621
        %v2630 = vadd.f32 %v2272, %v2622
        %v2631 = vadd.f32 %v2273, %v2623
        %v2632 = vadd.f32 %v2274, %v2624
        %v2633 = vadd.f32 %v2275, %v2625
        %v2634 = vadd.f32 %v2276, %v2626
        %v2635 = vld [vmem:[%s6] sm:$0x1]
        %v2637 = vlaneseq
        %v2638 = vshrl.u32 %v2637, 7
        %v2639 = vsub.s32 0, %v2638
        %v2640 = vrot.slane %v2635, %v2639
        %v2642 = vmul.f32 %v2627, %v2640
        %v2643 = vmul.f32 %v2628, %v2640
        %v2644 = vmul.f32 %v2629, %v2640
        %v2645 = vmul.f32 %v2630, %v2640
        %v2646 = vmul.f32 %v2631, %v2640
        %v2647 = vmul.f32 %v2632, %v2640
        %v2648 = vmul.f32 %v2633, %v2640
        %v2649 = vmul.f32 %v2634, %v2640
        %v2650 = vld [vmem:[%s7] sm:$0x1]
        %v2652 = vlaneseq
        %v2653 = vshrl.u32 %v2652, 7
        %v2654 = vsub.s32 0, %v2653
        %v2655 = vrot.slane %v2650, %v2654
        %v2657 = vadd.f32 %v2642, %v2655
        %v2658 = vadd.f32 %v2643, %v2655
        %v2659 = vadd.f32 %v2644, %v2655
        %v2660 = vadd.f32 %v2645, %v2655
        %v2661 = vadd.f32 %v2646, %v2655
        %v2662 = vadd.f32 %v2647, %v2655
        %v2663 = vadd.f32 %v2648, %v2655
        %v2664 = vadd.f32 %v2649, %v2655
        %vm2665 = vcmp.gt.f32.partialorder %v2657, 0.0
        %vm2666 = vcmp.gt.f32.partialorder %v2658, 0.0
        %vm2667 = vcmp.gt.f32.partialorder %v2659, 0.0
        %vm2668 = vcmp.gt.f32.partialorder %v2660, 0.0
        %vm2669 = vcmp.gt.f32.partialorder %v2661, 0.0
        %vm2670 = vcmp.gt.f32.partialorder %v2662, 0.0
        %vm2671 = vcmp.gt.f32.partialorder %v2663, 0.0
        %vm2672 = vcmp.gt.f32.partialorder %v2664, 0.0
        %v2673 = vmul.f32 %v2657, 0.01
        %v2674 = vmul.f32 %v2658, 0.01
        %v2675 = vmul.f32 %v2659, 0.01
        %v2676 = vmul.f32 %v2660, 0.01
        %v2677 = vmul.f32 %v2661, 0.01
        %v2678 = vmul.f32 %v2662, 0.01
        %v2679 = vmul.f32 %v2663, 0.01
        %v2680 = vmul.f32 %v2664, 0.01
        %v2681 = vsel %vm2665, %v2657, %v2673
        %v2682 = vsel %vm2666, %v2658, %v2674
        %v2683 = vsel %vm2667, %v2659, %v2675
        %v2684 = vsel %vm2668, %v2660, %v2676
        %v2685 = vsel %vm2669, %v2661, %v2677
        %v2686 = vsel %vm2670, %v2662, %v2678
        %v2687 = vsel %vm2671, %v2663, %v2679
        %v2688 = vsel %vm2672, %v2664, %v2680
        %2689 = vst [vmem:[#allocation2 + $0x10] sm:$0xff] %v2681
        %2690 = vst [vmem:[#allocation2 + $0x18] sm:$0xff] %v2682
        %2691 = vst [vmem:[#allocation2 + $0x20] sm:$0xff] %v2683
        %2692 = vst [vmem:[#allocation2 + $0x28] sm:$0xff] %v2684
        %2693 = vst [vmem:[#allocation2 + $0x30] sm:$0xff] %v2685
        %2694 = vst [vmem:[#allocation2 + $0x38] sm:$0xff] %v2686
        %2695 = vst [vmem:[#allocation2 + $0x40] sm:$0xff] %v2687
        %2696 = vst [vmem:[#allocation2 + $0x48] sm:$0xff] %v2688
        %v2697 = vld [vmem:[#allocation2 + $0x7] sm:$0xff]
        %v2698 = vld [vmem:[#allocation2 + $0xf] sm:$0xff]
        %v2699 = vld [vmem:[#allocation2 + $0x17] sm:$0xff]
        %v2700 = vld [vmem:[#allocation2 + $0x1f] sm:$0xff]
        %v2701 = vld [vmem:[#allocation2 + $0x27] sm:$0xff]
        %v2702 = vld [vmem:[#allocation2 + $0x2f] sm:$0xff]
        %v2703 = vld [vmem:[#allocation2 + $0x37] sm:$0xff]
        %v2704 = vld [vmem:[#allocation2 + $0x3f] sm:$0xff]
        %v2705 = vld [vmem:[#allocation2 + $0x47] sm:$0xff]
        %v2706 = vld [vmem:[#allocation2 + $0x4f] sm:$0xff]
        %v2707 = vpack.c.bf16 %v2698, %v2697
        %v2708 = vpack.c.bf16 %v2699, %v2698
        %v2709 = vpack.c.bf16 %v2700, %v2699
        %v2710 = vpack.c.bf16 %v2701, %v2700
        %v2711 = vpack.c.bf16 %v2702, %v2701
        %v2712 = vpack.c.bf16 %v2703, %v2702
        %v2713 = vpack.c.bf16 %v2704, %v2703
        %v2714 = vpack.c.bf16 %v2705, %v2704
        %v2715 = vpack.c.bf16 %v2706, %v2705
        %v2716 = vld [vmem:[#allocation10] sm:$0xf]
        %v2717 = vld [vmem:[#allocation10 + $0x4] sm:$0xf]
        %v2718 = vld [vmem:[#allocation10 + $0x8] sm:$0xf]
        %v2719 = vld [vmem:[#allocation10 + $0xc] sm:$0xf]
        %v2720 = vld [vmem:[#allocation10 + $0x10] sm:$0xf]
        %v2721 = vld [vmem:[#allocation10 + $0x14] sm:$0xf]
        %v2722 = vld [vmem:[#allocation10 + $0x18] sm:$0xf]
        %v2723 = vld [vmem:[#allocation10 + $0x1c] sm:$0xf]
        %v2724 = vld [vmem:[#allocation10 + $0x20] sm:$0xf]
        %v2725 = vld [vmem:[#allocation10 + $0x24] sm:$0xf]
        %v2726 = vld [vmem:[#allocation10 + $0x28] sm:$0xf]
        %v2727 = vld [vmem:[#allocation10 + $0x2c] sm:$0xf]
        %v2728 = vld [vmem:[#allocation10 + $0x30] sm:$0xf]
        %v2729 = vld [vmem:[#allocation10 + $0x34] sm:$0xf]
        %v2730 = vld [vmem:[#allocation10 + $0x38] sm:$0xf]
        %v2731 = vld [vmem:[#allocation10 + $0x3c] sm:$0xf]
        %v2732 = vld [vmem:[#allocation10 + $0x40] sm:$0xf]
        %v2733 = vld [vmem:[#allocation10 + $0x44] sm:$0xf]
        %v2734 = vld [vmem:[#allocation10 + $0x48] sm:$0xf]
        %v2735 = vld [vmem:[#allocation10 + $0x4c] sm:$0xf]
        %v2736 = vld [vmem:[#allocation10 + $0x50] sm:$0xf]
        %v2737 = vld [vmem:[#allocation10 + $0x54] sm:$0xf]
        %v2738 = vld [vmem:[#allocation10 + $0x58] sm:$0xf]
        %v2739 = vld [vmem:[#allocation10 + $0x5c] sm:$0xf]
        %v2740 = vld [vmem:[#allocation10 + $0x60] sm:$0xf]
        %v2741 = vld [vmem:[#allocation10 + $0x64] sm:$0xf]
        %v2742 = vld [vmem:[#allocation10 + $0x68] sm:$0xf]
        %v2743 = vld [vmem:[#allocation10 + $0x6c] sm:$0xf]
        %v2744 = vld [vmem:[#allocation10 + $0x70] sm:$0xf]
        %v2745 = vld [vmem:[#allocation10 + $0x74] sm:$0xf]
        %v2746 = vld [vmem:[#allocation10 + $0x78] sm:$0xf]
        %v2747 = vld [vmem:[#allocation10 + $0x7c] sm:$0xf]
        %v2748 = vld [vmem:[#allocation10 + $0x80] sm:$0xf]
        %v2749 = vld [vmem:[#allocation10 + $0x84] sm:$0xf]
        %v2750 = vld [vmem:[#allocation10 + $0x88] sm:$0xf]
        %v2751 = vld [vmem:[#allocation10 + $0x8c] sm:$0xf]
        %v2752 = vld [vmem:[#allocation10 + $0x90] sm:$0xf]
        %v2753 = vld [vmem:[#allocation10 + $0x94] sm:$0xf]
        %v2754 = vld [vmem:[#allocation10 + $0x98] sm:$0xf]
        %v2755 = vld [vmem:[#allocation10 + $0x9c] sm:$0xf]
        %v2756 = vld [vmem:[#allocation10 + $0xa0] sm:$0xf]
        %v2757 = vld [vmem:[#allocation10 + $0xa4] sm:$0xf]
        %v2758 = vld [vmem:[#allocation10 + $0xa8] sm:$0xf]
        %v2759 = vld [vmem:[#allocation10 + $0xac] sm:$0xf]
        %v2760 = vld [vmem:[#allocation10 + $0xb0] sm:$0xf]
        %v2761 = vld [vmem:[#allocation10 + $0xb4] sm:$0xf]
        %v2762 = vld [vmem:[#allocation10 + $0xb8] sm:$0xf]
        %v2763 = vld [vmem:[#allocation10 + $0xbc] sm:$0xf]
        %v2812 = vunpack.c.l.b16 %v2716
        %v2813 = vunpack.c.l.b16 %v2717
        %v2814 = vunpack.c.l.b16 %v2718
        %v2815 = vunpack.c.l.b16 %v2719
        %v2816 = vunpack.c.l.b16 %v2720
        %v2817 = vunpack.c.l.b16 %v2721
        %v2818 = vunpack.c.l.b16 %v2722
        %v2819 = vunpack.c.l.b16 %v2723
        %v2820 = vunpack.c.l.b16 %v2724
        %v2821 = vunpack.c.l.b16 %v2725
        %v2822 = vunpack.c.l.b16 %v2726
        %v2823 = vunpack.c.l.b16 %v2727
        %v2824 = vunpack.c.l.b16 %v2728
        %v2825 = vunpack.c.l.b16 %v2729
        %v2826 = vunpack.c.l.b16 %v2730
        %v2827 = vunpack.c.l.b16 %v2731
        %v2828 = vunpack.c.l.b16 %v2732
        %v2829 = vunpack.c.l.b16 %v2733
        %v2830 = vunpack.c.l.b16 %v2734
        %v2831 = vunpack.c.l.b16 %v2735
        %v2832 = vunpack.c.l.b16 %v2736
        %v2833 = vunpack.c.l.b16 %v2737
        %v2834 = vunpack.c.l.b16 %v2738
        %v2835 = vunpack.c.l.b16 %v2739
        %v2836 = vunpack.c.l.b16 %v2740
        %v2837 = vunpack.c.l.b16 %v2741
        %v2838 = vunpack.c.l.b16 %v2742
        %v2839 = vunpack.c.l.b16 %v2743
        %v2840 = vunpack.c.l.b16 %v2744
        %v2841 = vunpack.c.l.b16 %v2745
        %v2842 = vunpack.c.l.b16 %v2746
        %v2843 = vunpack.c.l.b16 %v2747
        %v2844 = vunpack.c.l.b16 %v2748
        %v2845 = vunpack.c.l.b16 %v2749
        %v2846 = vunpack.c.l.b16 %v2750
        %v2847 = vunpack.c.l.b16 %v2751
        %v2848 = vunpack.c.l.b16 %v2752
        %v2849 = vunpack.c.l.b16 %v2753
        %v2850 = vunpack.c.l.b16 %v2754
        %v2851 = vunpack.c.l.b16 %v2755
        %v2852 = vunpack.c.l.b16 %v2756
        %v2853 = vunpack.c.l.b16 %v2757
        %v2854 = vunpack.c.l.b16 %v2758
        %v2855 = vunpack.c.l.b16 %v2759
        %v2856 = vunpack.c.l.b16 %v2760
        %v2857 = vunpack.c.l.b16 %v2761
        %v2858 = vunpack.c.l.b16 %v2762
        %v2859 = vunpack.c.l.b16 %v2763
        %v2860 = vpack.c.b16 %v2813, %v2812
        %v2861 = vpack.c.b16 %v2815, %v2814
        %v2862 = vpack.c.b16 %v2817, %v2816
        %v2863 = vpack.c.b16 %v2819, %v2818
        %v2864 = vpack.c.b16 %v2821, %v2820
        %v2865 = vpack.c.b16 %v2823, %v2822
        %v2866 = vpack.c.b16 %v2825, %v2824
        %v2867 = vpack.c.b16 %v2827, %v2826
        %v2868 = vpack.c.b16 %v2829, %v2828
        %v2869 = vpack.c.b16 %v2831, %v2830
        %v2870 = vpack.c.b16 %v2833, %v2832
        %v2871 = vpack.c.b16 %v2835, %v2834
        %v2872 = vpack.c.b16 %v2837, %v2836
        %v2873 = vpack.c.b16 %v2839, %v2838
        %v2874 = vpack.c.b16 %v2841, %v2840
        %v2875 = vpack.c.b16 %v2843, %v2842
        %v2876 = vpack.c.b16 %v2845, %v2844
        %v2877 = vpack.c.b16 %v2847, %v2846
        %v2878 = vpack.c.b16 %v2849, %v2848
        %v2879 = vpack.c.b16 %v2851, %v2850
        %v2880 = vpack.c.b16 %v2853, %v2852
        %v2881 = vpack.c.b16 %v2855, %v2854
        %v2882 = vpack.c.b16 %v2857, %v2856
        %v2883 = vpack.c.b16 %v2859, %v2858
        %2908 = vmatprep.subr.bf16.mxu0 0
        %2909 = vmatpush1.bf16.msra.mxu0 %v2860
        %2910 = vmatprep.subr.bf16.mxu0 0
        %2911 = vmatpush1.bf16.msra.mxu0 %v2861
        %2912 = vmatprep.subr.bf16.mxu0 0
        %2913 = vmatpush1.bf16.msra.mxu0 %v2862
        %2914 = vmatprep.subr.bf16.mxu0 0
        %2915 = vmatpush1.bf16.msra.mxu0 %v2863
        %2916 = vmatprep.subr.bf16.mxu0 0
        %2917 = vmatpush1.bf16.msra.mxu0 %v2864
        %2918 = vmatprep.subr.bf16.mxu0 0
        %2919 = vmatpush1.bf16.msra.mxu0 %v2865
        %2920 = vmatprep.subr.bf16.mxu0 0
        %2921 = vmatpush1.bf16.msra.mxu0 %v2866
        %2922 = vmatprep.subr.bf16.mxu0 0
        %2923 = vmatpush1.bf16.msra.mxu0 %v2867
        %2924 = vmatprep.subr.bf16.mxu0 0
        %2925 = vmatpush1.bf16.msra.mxu0 %v2868
        %2926 = vmatprep.subr.bf16.mxu0 0
        %2927 = vmatpush1.bf16.msra.mxu0 %v2869
        %2928 = vmatprep.subr.bf16.mxu0 0
        %2929 = vmatpush1.bf16.msra.mxu0 %v2870
        %2930 = vmatprep.subr.bf16.mxu0 0
        %2931 = vmatpush1.bf16.msra.mxu0 %v2871
        %2932 = vmatprep.subr.bf16.mxu0 0
        %2933 = vmatpush1.bf16.msra.mxu0 %v2872
        %2934 = vmatprep.subr.bf16.mxu0 0
        %2935 = vmatpush1.bf16.msra.mxu0 %v2873
        %2936 = vmatprep.subr.bf16.mxu0 0
        %2937 = vmatpush1.bf16.msra.mxu0 %v2874
        %2938 = vmatprep.subr.bf16.mxu0 0
        %2939 = vmatpush1.bf16.msra.mxu0 %v2875
        %2940 = vmatprep.mubr.bf16.mxu0 %v2708
        %2941 = vmatmul.mubr.bf16.gmra.mrb[0].mxu0 %v2707
        %v2942 = vpop.f32.mrb[0].mxu0
        %v2943 = vadd.f32 0.0, %v2942
        %v2944 = vpop.f32.mrb[0].mxu0
        %v2945 = vpop.f32.mrb[0].mxu0
        %v2946 = vadd.f32 0.0, %v2945
        %v2947 = vpop.f32.mrb[0].mxu0
        %2948 = vmatprep.mubr.bf16.mxu0 %v2710
        %2949 = vmatmul.mubr.bf16.gmra.mrb[0].mxu0 %v2709
        %v2950 = vpop.f32.mrb[0].mxu0
        %v2951 = vadd.f32 0.0, %v2950
        %v2952 = vpop.f32.mrb[0].mxu0
        %v2953 = vpop.f32.mrb[0].mxu0
        %v2954 = vadd.f32 0.0, %v2953
        %v2955 = vpop.f32.mrb[0].mxu0
        %2956 = vmatprep.mubr.bf16.mxu0 %v2712
        %2957 = vmatmul.mubr.bf16.gmra.mrb[0].mxu0 %v2711
        %v2958 = vpop.f32.mrb[0].mxu0
        %v2959 = vadd.f32 0.0, %v2958
        %v2960 = vpop.f32.mrb[0].mxu0
        %v2961 = vpop.f32.mrb[0].mxu0
        %v2962 = vadd.f32 0.0, %v2961
        %v2963 = vpop.f32.mrb[0].mxu0
        %2964 = vmatprep.mubr.bf16.mxu0 %v2714
        %2965 = vmatmul.mubr.bf16.gmra.mrb[0].mxu0 %v2713
        %v2966 = vpop.f32.mrb[0].mxu0
        %v2967 = vadd.f32 0.0, %v2966
        %v2968 = vpop.f32.mrb[0].mxu0
        %v2969 = vpop.f32.mrb[0].mxu0
        %v2970 = vadd.f32 0.0, %v2969
        %v2971 = vpop.f32.mrb[0].mxu0
        %2972 = vdwg.mxu0
        %2973 = vmatprep.subr.bf16.mxu0 0
        %2974 = vmatpush1.bf16.msra.mxu0 %v2876
        %2975 = vmatprep.subr.bf16.mxu0 0
        %2976 = vmatpush1.bf16.msra.mxu0 %v2877
        %2977 = vmatprep.subr.bf16.mxu0 0
        %2978 = vmatpush1.bf16.msra.mxu0 %v2878
        %2979 = vmatprep.subr.bf16.mxu0 0
        %2980 = vmatpush1.bf16.msra.mxu0 %v2879
        %2981 = vmatprep.subr.bf16.mxu0 0
        %2982 = vmatpush1.bf16.msra.mxu0 %v2880
        %2983 = vmatprep.subr.bf16.mxu0 0
        %2984 = vmatpush1.bf16.msra.mxu0 %v2881
        %2985 = vmatprep.subr.bf16.mxu0 0
        %2986 = vmatpush1.bf16.msra.mxu0 %v2882
        %2987 = vmatprep.subr.bf16.mxu0 0
        %2988 = vmatpush1.bf16.msra.mxu0 %v2883
        %2989 = vmatprep.subr.bf16.mxu0 0
        %2990 = vmatpush1.bf16.msra.mxu0 0
        %2991 = vmatprep.subr.bf16.mxu0 0
        %2992 = vmatpush1.bf16.msra.mxu0 0
        %2993 = vmatprep.subr.bf16.mxu0 0
        %2994 = vmatpush1.bf16.msra.mxu0 0
        %2995 = vmatprep.subr.bf16.mxu0 0
        %2996 = vmatpush1.bf16.msra.mxu0 0
        %2997 = vmatprep.subr.bf16.mxu0 0
        %2998 = vmatpush1.bf16.msra.mxu0 0
        %2999 = vmatprep.subr.bf16.mxu0 0
        %3000 = vmatpush1.bf16.msra.mxu0 0
        %3001 = vmatprep.subr.bf16.mxu0 0
        %3002 = vmatpush1.bf16.msra.mxu0 0
        %3003 = vmatprep.subr.bf16.mxu0 0
        %3004 = vmatpush1.bf16.msra.mxu0 0
        %3005 = vmatprep.mubr.bf16.mxu0 0
        %3006 = vmatmul.mubr.bf16.gmra.mrb[0].mxu0 %v2709
        %v3007 = vpop.f32.mrb[0].mxu0
        %v3008 = vadd.f32 %v2943, %v3007
        %v3009 = vpop.f32.mrb[0].mxu0
        %v3010 = vpop.f32.mrb[0].mxu0
        %v3011 = vadd.f32 %v2946, %v3010
        %v3012 = vpop.f32.mrb[0].mxu0
        %3013 = vmatprep.mubr.bf16.mxu0 0
        %3014 = vmatmul.mubr.bf16.gmra.mrb[0].mxu0 %v2711
        %v3015 = vpop.f32.mrb[0].mxu0
        %v3016 = vadd.f32 %v2951, %v3015
        %v3017 = vpop.f32.mrb[0].mxu0
        %v3018 = vpop.f32.mrb[0].mxu0
        %v3019 = vadd.f32 %v2954, %v3018
        %v3020 = vpop.f32.mrb[0].mxu0
        %3021 = vmatprep.mubr.bf16.mxu0 0
        %3022 = vmatmul.mubr.bf16.gmra.mrb[0].mxu0 %v2713
        %v3023 = vpop.f32.mrb[0].mxu0
        %v3024 = vadd.f32 %v2959, %v3023
        %v3025 = vpop.f32.mrb[0].mxu0
        %v3026 = vpop.f32.mrb[0].mxu0
        %v3027 = vadd.f32 %v2962, %v3026
        %v3028 = vpop.f32.mrb[0].mxu0
        %3029 = vmatprep.mubr.bf16.mxu0 0
        %3030 = vmatmul.mubr.bf16.gmra.mrb[0].mxu0 %v2715
        %v3031 = vpop.f32.mrb[0].mxu0
        %v3032 = vadd.f32 %v2967, %v3031
        %v3033 = vpop.f32.mrb[0].mxu0
        %v3034 = vpop.f32.mrb[0].mxu0
        %v3035 = vadd.f32 %v2970, %v3034
        %v3036 = vpop.f32.mrb[0].mxu0
        %3037 = vdwg.mxu0
        %v3038 = vsel %vm773, 0.0, %v3008
        %v3039 = vsel %vm773, 0.0, %v3011
        %v3040 = vsel %vm773, 0.0, %v3016
        %v3041 = vsel %vm773, 0.0, %v3019
        %v3042 = vsel %vm773, 0.0, %v3024
        %v3043 = vsel %vm773, 0.0, %v3027
        %v3044 = vsel %vm773, 0.0, %v3032
        %v3045 = vsel %vm773, 0.0, %v3035
        %v3046 = vadd.f32 %v3038, 0.0
        %v3047 = vadd.f32 %v3039, 0.0
        %v3048 = vadd.f32 %v3040, 0.0
        %v3049 = vadd.f32 %v3041, 0.0
        %v3050 = vadd.f32 %v3042, 0.0
        %v3051 = vadd.f32 %v3043, 0.0
        %v3052 = vadd.f32 %v3044, 0.0
        %v3053 = vadd.f32 %v3045, 0.0
        %v3054 = vld [vmem:[#allocation2 + $0x8] sm:$0xff]
        %v3055 = vld [vmem:[#allocation2 + $0x10] sm:$0xff]
        %v3056 = vld [vmem:[#allocation2 + $0x18] sm:$0xff]
        %v3057 = vld [vmem:[#allocation2 + $0x20] sm:$0xff]
        %v3058 = vld [vmem:[#allocation2 + $0x28] sm:$0xff]
        %v3059 = vld [vmem:[#allocation2 + $0x30] sm:$0xff]
        %v3060 = vld [vmem:[#allocation2 + $0x38] sm:$0xff]
        %v3061 = vld [vmem:[#allocation2 + $0x40] sm:$0xff]
        %v3062 = vld [vmem:[#allocation2 + $0x48] sm:$0xff]
        %v3063 = vld [vmem:[#allocation2 + $0x50] sm:$0xff]
        %v3064 = vpack.c.bf16 %v3055, %v3054
        %v3065 = vpack.c.bf16 %v3056, %v3055
        %v3066 = vpack.c.bf16 %v3057, %v3056
        %v3067 = vpack.c.bf16 %v3058, %v3057
        %v3068 = vpack.c.bf16 %v3059, %v3058
        %v3069 = vpack.c.bf16 %v3060, %v3059
        %v3070 = vpack.c.bf16 %v3061, %v3060
        %v3071 = vpack.c.bf16 %v3062, %v3061
        %v3072 = vpack.c.bf16 %v3063, %v3062
        %s3073 = scalar_lea.vmem [#allocation10], 192
        %v3074 = vld [vmem:[%s3073] sm:$0xf]
        %v3075 = vld [vmem:[%s3073 + $0x4] sm:$0xf]
        %v3076 = vld [vmem:[%s3073 + $0x8] sm:$0xf]
        %v3077 = vld [vmem:[%s3073 + $0xc] sm:$0xf]
        %v3078 = vld [vmem:[%s3073 + $0x10] sm:$0xf]
        %v3079 = vld [vmem:[%s3073 + $0x14] sm:$0xf]
        %v3080 = vld [vmem:[%s3073 + $0x18] sm:$0xf]
        %v3081 = vld [vmem:[%s3073 + $0x1c] sm:$0xf]
        %v3082 = vld [vmem:[%s3073 + $0x20] sm:$0xf]
        %v3083 = vld [vmem:[%s3073 + $0x24] sm:$0xf]
        %v3084 = vld [vmem:[%s3073 + $0x28] sm:$0xf]
        %v3085 = vld [vmem:[%s3073 + $0x2c] sm:$0xf]
        %v3086 = vld [vmem:[%s3073 + $0x30] sm:$0xf]
        %v3087 = vld [vmem:[%s3073 + $0x34] sm:$0xf]
        %v3088 = vld [vmem:[%s3073 + $0x38] sm:$0xf]
        %v3089 = vld [vmem:[%s3073 + $0x3c] sm:$0xf]
        %v3090 = vld [vmem:[%s3073 + $0x40] sm:$0xf]
        %v3091 = vld [vmem:[%s3073 + $0x44] sm:$0xf]
        %v3092 = vld [vmem:[%s3073 + $0x48] sm:$0xf]
        %v3093 = vld [vmem:[%s3073 + $0x4c] sm:$0xf]
        %v3094 = vld [vmem:[%s3073 + $0x50] sm:$0xf]
        %v3095 = vld [vmem:[%s3073 + $0x54] sm:$0xf]
        %v3096 = vld [vmem:[%s3073 + $0x58] sm:$0xf]
        %v3097 = vld [vmem:[%s3073 + $0x5c] sm:$0xf]
        %v3098 = vld [vmem:[%s3073 + $0x60] sm:$0xf]
        %v3099 = vld [vmem:[%s3073 + $0x64] sm:$0xf]
        %v3100 = vld [vmem:[%s3073 + $0x68] sm:$0xf]
        %v3101 = vld [vmem:[%s3073 + $0x6c] sm:$0xf]
        %v3102 = vld [vmem:[%s3073 + $0x70] sm:$0xf]
        %v3103 = vld [vmem:[%s3073 + $0x74] sm:$0xf]
        %v3104 = vld [vmem:[%s3073 + $0x78] sm:$0xf]
        %v3105 = vld [vmem:[%s3073 + $0x7c] sm:$0xf]
        %v3106 = vld [vmem:[%s3073 + $0x80] sm:$0xf]
        %v3107 = vld [vmem:[%s3073 + $0x84] sm:$0xf]
        %v3108 = vld [vmem:[%s3073 + $0x88] sm:$0xf]
        %v3109 = vld [vmem:[%s3073 + $0x8c] sm:$0xf]
        %v3110 = vld [vmem:[%s3073 + $0x90] sm:$0xf]
        %v3111 = vld [vmem:[%s3073 + $0x94] sm:$0xf]
        %v3112 = vld [vmem:[%s3073 + $0x98] sm:$0xf]
        %v3113 = vld [vmem:[%s3073 + $0x9c] sm:$0xf]
        %v3114 = vld [vmem:[%s3073 + $0xa0] sm:$0xf]
        %v3115 = vld [vmem:[%s3073 + $0xa4] sm:$0xf]
        %v3116 = vld [vmem:[%s3073 + $0xa8] sm:$0xf]
        %v3117 = vld [vmem:[%s3073 + $0xac] sm:$0xf]
        %v3118 = vld [vmem:[%s3073 + $0xb0] sm:$0xf]
        %v3119 = vld [vmem:[%s3073 + $0xb4] sm:$0xf]
        %v3120 = vld [vmem:[%s3073 + $0xb8] sm:$0xf]
        %v3121 = vld [vmem:[%s3073 + $0xbc] sm:$0xf]
        %v3170 = vunpack.c.l.b16 %v3074
        %v3171 = vunpack.c.l.b16 %v3075
        %v3172 = vunpack.c.l.b16 %v3076
        %v3173 = vunpack.c.l.b16 %v3077
        %v3174 = vunpack.c.l.b16 %v3078
        %v3175 = vunpack.c.l.b16 %v3079
        %v3176 = vunpack.c.l.b16 %v3080
        %v3177 = vunpack.c.l.b16 %v3081
        %v3178 = vunpack.c.l.b16 %v3082
        %v3179 = vunpack.c.l.b16 %v3083
        %v3180 = vunpack.c.l.b16 %v3084
        %v3181 = vunpack.c.l.b16 %v3085
        %v3182 = vunpack.c.l.b16 %v3086
        %v3183 = vunpack.c.l.b16 %v3087
        %v3184 = vunpack.c.l.b16 %v3088
        %v3185 = vunpack.c.l.b16 %v3089
        %v3186 = vunpack.c.l.b16 %v3090
        %v3187 = vunpack.c.l.b16 %v3091
        %v3188 = vunpack.c.l.b16 %v3092
        %v3189 = vunpack.c.l.b16 %v3093
        %v3190 = vunpack.c.l.b16 %v3094
        %v3191 = vunpack.c.l.b16 %v3095
        %v3192 = vunpack.c.l.b16 %v3096
        %v3193 = vunpack.c.l.b16 %v3097
        %v3194 = vunpack.c.l.b16 %v3098
        %v3195 = vunpack.c.l.b16 %v3099
        %v3196 = vunpack.c.l.b16 %v3100
        %v3197 = vunpack.c.l.b16 %v3101
        %v3198 = vunpack.c.l.b16 %v3102
        %v3199 = vunpack.c.l.b16 %v3103
        %v3200 = vunpack.c.l.b16 %v3104
        %v3201 = vunpack.c.l.b16 %v3105
        %v3202 = vunpack.c.l.b16 %v3106
        %v3203 = vunpack.c.l.b16 %v3107
        %v3204 = vunpack.c.l.b16 %v3108
        %v3205 = vunpack.c.l.b16 %v3109
        %v3206 = vunpack.c.l.b16 %v3110
        %v3207 = vunpack.c.l.b16 %v3111
        %v3208 = vunpack.c.l.b16 %v3112
        %v3209 = vunpack.c.l.b16 %v3113
        %v3210 = vunpack.c.l.b16 %v3114
        %v3211 = vunpack.c.l.b16 %v3115
        %v3212 = vunpack.c.l.b16 %v3116
        %v3213 = vunpack.c.l.b16 %v3117
        %v3214 = vunpack.c.l.b16 %v3118
        %v3215 = vunpack.c.l.b16 %v3119
        %v3216 = vunpack.c.l.b16 %v3120
        %v3217 = vunpack.c.l.b16 %v3121
        %v3218 = vpack.c.b16 %v3171, %v3170
        %v3219 = vpack.c.b16 %v3173, %v3172
        %v3220 = vpack.c.b16 %v3175, %v3174
        %v3221 = vpack.c.b16 %v3177, %v3176
        %v3222 = vpack.c.b16 %v3179, %v3178
        %v3223 = vpack.c.b16 %v3181, %v3180
        %v3224 = vpack.c.b16 %v3183, %v3182
        %v3225 = vpack.c.b16 %v3185, %v3184
        %v3226 = vpack.c.b16 %v3187, %v3186
        %v3227 = vpack.c.b16 %v3189, %v3188
        %v3228 = vpack.c.b16 %v3191, %v3190
        %v3229 = vpack.c.b16 %v3193, %v3192
        %v3230 = vpack.c.b16 %v3195, %v3194
        %v3231 = vpack.c.b16 %v3197, %v3196
        %v3232 = vpack.c.b16 %v3199, %v3198
        %v3233 = vpack.c.b16 %v3201, %v3200
        %v3234 = vpack.c.b16 %v3203, %v3202
        %v3235 = vpack.c.b16 %v3205, %v3204
        %v3236 = vpack.c.b16 %v3207, %v3206
        %v3237 = vpack.c.b16 %v3209, %v3208
        %v3238 = vpack.c.b16 %v3211, %v3210
        %v3239 = vpack.c.b16 %v3213, %v3212
        %v3240 = vpack.c.b16 %v3215, %v3214
        %v3241 = vpack.c.b16 %v3217, %v3216
        %3266 = vmatprep.subr.bf16.mxu0 0
        %3267 = vmatpush1.bf16.msra.mxu0 %v3218
        %3268 = vmatprep.subr.bf16.mxu0 0
        %3269 = vmatpush1.bf16.msra.mxu0 %v3219
        %3270 = vmatprep.subr.bf16.mxu0 0
        %3271 = vmatpush1.bf16.msra.mxu0 %v3220
        %3272 = vmatprep.subr.bf16.mxu0 0
        %3273 = vmatpush1.bf16.msra.mxu0 %v3221
        %3274 = vmatprep.subr.bf16.mxu0 0
        %3275 = vmatpush1.bf16.msra.mxu0 %v3222
        %3276 = vmatprep.subr.bf16.mxu0 0
        %3277 = vmatpush1.bf16.msra.mxu0 %v3223
        %3278 = vmatprep.subr.bf16.mxu0 0
        %3279 = vmatpush1.bf16.msra.mxu0 %v3224
        %3280 = vmatprep.subr.bf16.mxu0 0
        %3281 = vmatpush1.bf16.msra.mxu0 %v3225
        %3282 = vmatprep.subr.bf16.mxu0 0
        %3283 = vmatpush1.bf16.msra.mxu0 %v3226
        %3284 = vmatprep.subr.bf16.mxu0 0
        %3285 = vmatpush1.bf16.msra.mxu0 %v3227
        %3286 = vmatprep.subr.bf16.mxu0 0
        %3287 = vmatpush1.bf16.msra.mxu0 %v3228
        %3288 = vmatprep.subr.bf16.mxu0 0
        %3289 = vmatpush1.bf16.msra.mxu0 %v3229
        %3290 = vmatprep.subr.bf16.mxu0 0
        %3291 = vmatpush1.bf16.msra.mxu0 %v3230
        %3292 = vmatprep.subr.bf16.mxu0 0
        %3293 = vmatpush1.bf16.msra.mxu0 %v3231
        %3294 = vmatprep.subr.bf16.mxu0 0
        %3295 = vmatpush1.bf16.msra.mxu0 %v3232
        %3296 = vmatprep.subr.bf16.mxu0 0
        %3297 = vmatpush1.bf16.msra.mxu0 %v3233
        %3298 = vmatprep.mubr.bf16.mxu0 %v3065
        %3299 = vmatmul.mubr.bf16.gmra.mrb[0].mxu0 %v3064
        %v3300 = vpop.f32.mrb[0].mxu0
        %v3301 = vadd.f32 0.0, %v3300
        %v3302 = vpop.f32.mrb[0].mxu0
        %v3303 = vpop.f32.mrb[0].mxu0
        %v3304 = vadd.f32 0.0, %v3303
        %v3305 = vpop.f32.mrb[0].mxu0
        %3306 = vmatprep.mubr.bf16.mxu0 %v3067
        %3307 = vmatmul.mubr.bf16.gmra.mrb[0].mxu0 %v3066
        %v3308 = vpop.f32.mrb[0].mxu0
        %v3309 = vadd.f32 0.0, %v3308
        %v3310 = vpop.f32.mrb[0].mxu0
        %v3311 = vpop.f32.mrb[0].mxu0
        %v3312 = vadd.f32 0.0, %v3311
        %v3313 = vpop.f32.mrb[0].mxu0
        %3314 = vmatprep.mubr.bf16.mxu0 %v3069
        %3315 = vmatmul.mubr.bf16.gmra.mrb[0].mxu0 %v3068
        %v3316 = vpop.f32.mrb[0].mxu0
        %v3317 = vadd.f32 0.0, %v3316
        %v3318 = vpop.f32.mrb[0].mxu0
        %v3319 = vpop.f32.mrb[0].mxu0
        %v3320 = vadd.f32 0.0, %v3319
        %v3321 = vpop.f32.mrb[0].mxu0
        %3322 = vmatprep.mubr.bf16.mxu0 %v3071
        %3323 = vmatmul.mubr.bf16.gmra.mrb[0].mxu0 %v3070
        %v3324 = vpop.f32.mrb[0].mxu0
        %v3325 = vadd.f32 0.0, %v3324
        %v3326 = vpop.f32.mrb[0].mxu0
        %v3327 = vpop.f32.mrb[0].mxu0
        %v3328 = vadd.f32 0.0, %v3327
        %v3329 = vpop.f32.mrb[0].mxu0
        %3330 = vdwg.mxu0
        %3331 = vmatprep.subr.bf16.mxu0 0
        %3332 = vmatpush1.bf16.msra.mxu0 %v3234
        %3333 = vmatprep.subr.bf16.mxu0 0
        %3334 = vmatpush1.bf16.msra.mxu0 %v3235
        %3335 = vmatprep.subr.bf16.mxu0 0
        %3336 = vmatpush1.bf16.msra.mxu0 %v3236
        %3337 = vmatprep.subr.bf16.mxu0 0
        %3338 = vmatpush1.bf16.msra.mxu0 %v3237
        %3339 = vmatprep.subr.bf16.mxu0 0
        %3340 = vmatpush1.bf16.msra.mxu0 %v3238
        %3341 = vmatprep.subr.bf16.mxu0 0
        %3342 = vmatpush1.bf16.msra.mxu0 %v3239
        %3343 = vmatprep.subr.bf16.mxu0 0
        %3344 = vmatpush1.bf16.msra.mxu0 %v3240
        %3345 = vmatprep.subr.bf16.mxu0 0
        %3346 = vmatpush1.bf16.msra.mxu0 %v3241
        %3347 = vmatprep.subr.bf16.mxu0 0
        %3348 = vmatpush1.bf16.msra.mxu0 0
        %3349 = vmatprep.subr.bf16.mxu0 0
        %3350 = vmatpush1.bf16.msra.mxu0 0
        %3351 = vmatprep.subr.bf16.mxu0 0
        %3352 = vmatpush1.bf16.msra.mxu0 0
        %3353 = vmatprep.subr.bf16.mxu0 0
        %3354 = vmatpush1.bf16.msra.mxu0 0
        %3355 = vmatprep.subr.bf16.mxu0 0
        %3356 = vmatpush1.bf16.msra.mxu0 0
        %3357 = vmatprep.subr.bf16.mxu0 0
        %3358 = vmatpush1.bf16.msra.mxu0 0
        %3359 = vmatprep.subr.bf16.mxu0 0
        %3360 = vmatpush1.bf16.msra.mxu0 0
        %3361 = vmatprep.subr.bf16.mxu0 0
        %3362 = vmatpush1.bf16.msra.mxu0 0
        %3363 = vmatprep.mubr.bf16.mxu0 0
        %3364 = vmatmul.mubr.bf16.gmra.mrb[0].mxu0 %v3066
        %v3365 = vpop.f32.mrb[0].mxu0
        %v3366 = vadd.f32 %v3301, %v3365
        %v3367 = vpop.f32.mrb[0].mxu0
        %v3368 = vpop.f32.mrb[0].mxu0
        %v3369 = vadd.f32 %v3304, %v3368
        %v3370 = vpop.f32.mrb[0].mxu0
        %3371 = vmatprep.mubr.bf16.mxu0 0
        %3372 = vmatmul.mubr.bf16.gmra.mrb[0].mxu0 %v3068
        %v3373 = vpop.f32.mrb[0].mxu0
        %v3374 = vadd.f32 %v3309, %v3373
        %v3375 = vpop.f32.mrb[0].mxu0
        %v3376 = vpop.f32.mrb[0].mxu0
        %v3377 = vadd.f32 %v3312, %v3376
        %v3378 = vpop.f32.mrb[0].mxu0
        %3379 = vmatprep.mubr.bf16.mxu0 0
        %3380 = vmatmul.mubr.bf16.gmra.mrb[0].mxu0 %v3070
        %v3381 = vpop.f32.mrb[0].mxu0
        %v3382 = vadd.f32 %v3317, %v3381
        %v3383 = vpop.f32.mrb[0].mxu0
        %v3384 = vpop.f32.mrb[0].mxu0
        %v3385 = vadd.f32 %v3320, %v3384
        %v3386 = vpop.f32.mrb[0].mxu0
        %3387 = vmatprep.mubr.bf16.mxu0 0
        %3388 = vmatmul.mubr.bf16.gmra.mrb[0].mxu0 %v3072
        %v3389 = vpop.f32.mrb[0].mxu0
        %v3390 = vadd.f32 %v3325, %v3389
        %v3391 = vpop.f32.mrb[0].mxu0
        %v3392 = vpop.f32.mrb[0].mxu0
        %v3393 = vadd.f32 %v3328, %v3392
        %v3394 = vpop.f32.mrb[0].mxu0
        %3395 = vdwg.mxu0
        %v3396 = vadd.f32 %v3046, %v3366
        %v3397 = vadd.f32 %v3047, %v3369
        %v3398 = vadd.f32 %v3048, %v3374
        %v3399 = vadd.f32 %v3049, %v3377
        %v3400 = vadd.f32 %v3050, %v3382
        %v3401 = vadd.f32 %v3051, %v3385
        %v3402 = vadd.f32 %v3052, %v3390
        %v3403 = vadd.f32 %v3053, %v3393
        %v3404 = vld [vmem:[#allocation2 + $0x9] sm:$0xff]
        %v3405 = vld [vmem:[#allocation2 + $0x11] sm:$0xff]
        %v3406 = vld [vmem:[#allocation2 + $0x19] sm:$0xff]
        %v3407 = vld [vmem:[#allocation2 + $0x21] sm:$0xff]
        %v3408 = vld [vmem:[#allocation2 + $0x29] sm:$0xff]
        %v3409 = vld [vmem:[#allocation2 + $0x31] sm:$0xff]
        %v3410 = vld [vmem:[#allocation2 + $0x39] sm:$0xff]
        %v3411 = vld [vmem:[#allocation2 + $0x41] sm:$0xff]
        %v3412 = vld [vmem:[#allocation2 + $0x49] sm:$0xff]
        %v3413 = vld [vmem:[#allocation2 + $0x51] sm:$0xff]
        %v3414 = vpack.c.bf16 %v3405, %v3404
        %v3415 = vpack.c.bf16 %v3406, %v3405
        %v3416 = vpack.c.bf16 %v3407, %v3406
        %v3417 = vpack.c.bf16 %v3408, %v3407
        %v3418 = vpack.c.bf16 %v3409, %v3408
        %v3419 = vpack.c.bf16 %v3410, %v3409
        %v3420 = vpack.c.bf16 %v3411, %v3410
        %v3421 = vpack.c.bf16 %v3412, %v3411
        %v3422 = vpack.c.bf16 %v3413, %v3412
        %s3423 = scalar_lea.vmem [#allocation10], 384
        %v3424 = vld [vmem:[%s3423] sm:$0xf]
        %v3425 = vld [vmem:[%s3423 + $0x4] sm:$0xf]
        %v3426 = vld [vmem:[%s3423 + $0x8] sm:$0xf]
        %v3427 = vld [vmem:[%s3423 + $0xc] sm:$0xf]
        %v3428 = vld [vmem:[%s3423 + $0x10] sm:$0xf]
        %v3429 = vld [vmem:[%s3423 + $0x14] sm:$0xf]
        %v3430 = vld [vmem:[%s3423 + $0x18] sm:$0xf]
        %v3431 = vld [vmem:[%s3423 + $0x1c] sm:$0xf]
        %v3432 = vld [vmem:[%s3423 + $0x20] sm:$0xf]
        %v3433 = vld [vmem:[%s3423 + $0x24] sm:$0xf]
        %v3434 = vld [vmem:[%s3423 + $0x28] sm:$0xf]
        %v3435 = vld [vmem:[%s3423 + $0x2c] sm:$0xf]
        %v3436 = vld [vmem:[%s3423 + $0x30] sm:$0xf]
        %v3437 = vld [vmem:[%s3423 + $0x34] sm:$0xf]
        %v3438 = vld [vmem:[%s3423 + $0x38] sm:$0xf]
        %v3439 = vld [vmem:[%s3423 + $0x3c] sm:$0xf]
        %v3440 = vld [vmem:[%s3423 + $0x40] sm:$0xf]
        %v3441 = vld [vmem:[%s3423 + $0x44] sm:$0xf]
        %v3442 = vld [vmem:[%s3423 + $0x48] sm:$0xf]
        %v3443 = vld [vmem:[%s3423 + $0x4c] sm:$0xf]
        %v3444 = vld [vmem:[%s3423 + $0x50] sm:$0xf]
        %v3445 = vld [vmem:[%s3423 + $0x54] sm:$0xf]
        %v3446 = vld [vmem:[%s3423 + $0x58] sm:$0xf]
        %v3447 = vld [vmem:[%s3423 + $0x5c] sm:$0xf]
        %v3448 = vld [vmem:[%s3423 + $0x60] sm:$0xf]
        %v3449 = vld [vmem:[%s3423 + $0x64] sm:$0xf]
        %v3450 = vld [vmem:[%s3423 + $0x68] sm:$0xf]
        %v3451 = vld [vmem:[%s3423 + $0x6c] sm:$0xf]
        %v3452 = vld [vmem:[%s3423 + $0x70] sm:$0xf]
        %v3453 = vld [vmem:[%s3423 + $0x74] sm:$0xf]
        %v3454 = vld [vmem:[%s3423 + $0x78] sm:$0xf]
        %v3455 = vld [vmem:[%s3423 + $0x7c] sm:$0xf]
        %v3456 = vld [vmem:[%s3423 + $0x80] sm:$0xf]
        %v3457 = vld [vmem:[%s3423 + $0x84] sm:$0xf]
        %v3458 = vld [vmem:[%s3423 + $0x88] sm:$0xf]
        %v3459 = vld [vmem:[%s3423 + $0x8c] sm:$0xf]
        %v3460 = vld [vmem:[%s3423 + $0x90] sm:$0xf]
        %v3461 = vld [vmem:[%s3423 + $0x94] sm:$0xf]
        %v3462 = vld [vmem:[%s3423 + $0x98] sm:$0xf]
        %v3463 = vld [vmem:[%s3423 + $0x9c] sm:$0xf]
        %v3464 = vld [vmem:[%s3423 + $0xa0] sm:$0xf]
        %v3465 = vld [vmem:[%s3423 + $0xa4] sm:$0xf]
        %v3466 = vld [vmem:[%s3423 + $0xa8] sm:$0xf]
        %v3467 = vld [vmem:[%s3423 + $0xac] sm:$0xf]
        %v3468 = vld [vmem:[%s3423 + $0xb0] sm:$0xf]
        %v3469 = vld [vmem:[%s3423 + $0xb4] sm:$0xf]
        %v3470 = vld [vmem:[%s3423 + $0xb8] sm:$0xf]
        %v3471 = vld [vmem:[%s3423 + $0xbc] sm:$0xf]
        %v3520 = vunpack.c.l.b16 %v3424
        %v3521 = vunpack.c.l.b16 %v3425
        %v3522 = vunpack.c.l.b16 %v3426
        %v3523 = vunpack.c.l.b16 %v3427
        %v3524 = vunpack.c.l.b16 %v3428
        %v3525 = vunpack.c.l.b16 %v3429
        %v3526 = vunpack.c.l.b16 %v3430
        %v3527 = vunpack.c.l.b16 %v3431
        %v3528 = vunpack.c.l.b16 %v3432
        %v3529 = vunpack.c.l.b16 %v3433
        %v3530 = vunpack.c.l.b16 %v3434
        %v3531 = vunpack.c.l.b16 %v3435
        %v3532 = vunpack.c.l.b16 %v3436
        %v3533 = vunpack.c.l.b16 %v3437
        %v3534 = vunpack.c.l.b16 %v3438
        %v3535 = vunpack.c.l.b16 %v3439
        %v3536 = vunpack.c.l.b16 %v3440
        %v3537 = vunpack.c.l.b16 %v3441
        %v3538 = vunpack.c.l.b16 %v3442
        %v3539 = vunpack.c.l.b16 %v3443
        %v3540 = vunpack.c.l.b16 %v3444
        %v3541 = vunpack.c.l.b16 %v3445
        %v3542 = vunpack.c.l.b16 %v3446
        %v3543 = vunpack.c.l.b16 %v3447
        %v3544 = vunpack.c.l.b16 %v3448
        %v3545 = vunpack.c.l.b16 %v3449
        %v3546 = vunpack.c.l.b16 %v3450
        %v3547 = vunpack.c.l.b16 %v3451
        %v3548 = vunpack.c.l.b16 %v3452
        %v3549 = vunpack.c.l.b16 %v3453
        %v3550 = vunpack.c.l.b16 %v3454
        %v3551 = vunpack.c.l.b16 %v3455
        %v3552 = vunpack.c.l.b16 %v3456
        %v3553 = vunpack.c.l.b16 %v3457
        %v3554 = vunpack.c.l.b16 %v3458
        %v3555 = vunpack.c.l.b16 %v3459
        %v3556 = vunpack.c.l.b16 %v3460
        %v3557 = vunpack.c.l.b16 %v3461
        %v3558 = vunpack.c.l.b16 %v3462
        %v3559 = vunpack.c.l.b16 %v3463
        %v3560 = vunpack.c.l.b16 %v3464
        %v3561 = vunpack.c.l.b16 %v3465
        %v3562 = vunpack.c.l.b16 %v3466
        %v3563 = vunpack.c.l.b16 %v3467
        %v3564 = vunpack.c.l.b16 %v3468
        %v3565 = vunpack.c.l.b16 %v3469
        %v3566 = vunpack.c.l.b16 %v3470
        %v3567 = vunpack.c.l.b16 %v3471
        %v3568 = vpack.c.b16 %v3521, %v3520
        %v3569 = vpack.c.b16 %v3523, %v3522
        %v3570 = vpack.c.b16 %v3525, %v3524
        %v3571 = vpack.c.b16 %v3527, %v3526
        %v3572 = vpack.c.b16 %v3529, %v3528
        %v3573 = vpack.c.b16 %v3531, %v3530
        %v3574 = vpack.c.b16 %v3533, %v3532
        %v3575 = vpack.c.b16 %v3535, %v3534
        %v3576 = vpack.c.b16 %v3537, %v3536
        %v3577 = vpack.c.b16 %v3539, %v3538
        %v3578 = vpack.c.b16 %v3541, %v3540
        %v3579 = vpack.c.b16 %v3543, %v3542
        %v3580 = vpack.c.b16 %v3545, %v3544
        %v3581 = vpack.c.b16 %v3547, %v3546
        %v3582 = vpack.c.b16 %v3549, %v3548
        %v3583 = vpack.c.b16 %v3551, %v3550
        %v3584 = vpack.c.b16 %v3553, %v3552
        %v3585 = vpack.c.b16 %v3555, %v3554
        %v3586 = vpack.c.b16 %v3557, %v3556
        %v3587 = vpack.c.b16 %v3559, %v3558
        %v3588 = vpack.c.b16 %v3561, %v3560
        %v3589 = vpack.c.b16 %v3563, %v3562
        %v3590 = vpack.c.b16 %v3565, %v3564
        %v3591 = vpack.c.b16 %v3567, %v3566
        %3616 = vmatprep.subr.bf16.mxu0 0
        %3617 = vmatpush1.bf16.msra.mxu0 %v3568
        %3618 = vmatprep.subr.bf16.mxu0 0
        %3619 = vmatpush1.bf16.msra.mxu0 %v3569
        %3620 = vmatprep.subr.bf16.mxu0 0
        %3621 = vmatpush1.bf16.msra.mxu0 %v3570
        %3622 = vmatprep.subr.bf16.mxu0 0
        %3623 = vmatpush1.bf16.msra.mxu0 %v3571
        %3624 = vmatprep.subr.bf16.mxu0 0
        %3625 = vmatpush1.bf16.msra.mxu0 %v3572
        %3626 = vmatprep.subr.bf16.mxu0 0
        %3627 = vmatpush1.bf16.msra.mxu0 %v3573
        %3628 = vmatprep.subr.bf16.mxu0 0
        %3629 = vmatpush1.bf16.msra.mxu0 %v3574
        %3630 = vmatprep.subr.bf16.mxu0 0
        %3631 = vmatpush1.bf16.msra.mxu0 %v3575
        %3632 = vmatprep.subr.bf16.mxu0 0
        %3633 = vmatpush1.bf16.msra.mxu0 %v3576
        %3634 = vmatprep.subr.bf16.mxu0 0
        %3635 = vmatpush1.bf16.msra.mxu0 %v3577
        %3636 = vmatprep.subr.bf16.mxu0 0
        %3637 = vmatpush1.bf16.msra.mxu0 %v3578
        %3638 = vmatprep.subr.bf16.mxu0 0
        %3639 = vmatpush1.bf16.msra.mxu0 %v3579
        %3640 = vmatprep.subr.bf16.mxu0 0
        %3641 = vmatpush1.bf16.msra.mxu0 %v3580
        %3642 = vmatprep.subr.bf16.mxu0 0
        %3643 = vmatpush1.bf16.msra.mxu0 %v3581
        %3644 = vmatprep.subr.bf16.mxu0 0
        %3645 = vmatpush1.bf16.msra.mxu0 %v3582
        %3646 = vmatprep.subr.bf16.mxu0 0
        %3647 = vmatpush1.bf16.msra.mxu0 %v3583
        %3648 = vmatprep.mubr.bf16.mxu0 %v3415
        %3649 = vmatmul.mubr.bf16.gmra.mrb[0].mxu0 %v3414
        %v3650 = vpop.f32.mrb[0].mxu0
        %v3651 = vadd.f32 0.0, %v3650
        %v3652 = vpop.f32.mrb[0].mxu0
        %v3653 = vpop.f32.mrb[0].mxu0
        %v3654 = vadd.f32 0.0, %v3653
        %v3655 = vpop.f32.mrb[0].mxu0
        %3656 = vmatprep.mubr.bf16.mxu0 %v3417
        %3657 = vmatmul.mubr.bf16.gmra.mrb[0].mxu0 %v3416
        %v3658 = vpop.f32.mrb[0].mxu0
        %v3659 = vadd.f32 0.0, %v3658
        %v3660 = vpop.f32.mrb[0].mxu0
        %v3661 = vpop.f32.mrb[0].mxu0
        %v3662 = vadd.f32 0.0, %v3661
        %v3663 = vpop.f32.mrb[0].mxu0
        %3664 = vmatprep.mubr.bf16.mxu0 %v3419
        %3665 = vmatmul.mubr.bf16.gmra.mrb[0].mxu0 %v3418
        %v3666 = vpop.f32.mrb[0].mxu0
        %v3667 = vadd.f32 0.0, %v3666
        %v3668 = vpop.f32.mrb[0].mxu0
        %v3669 = vpop.f32.mrb[0].mxu0
        %v3670 = vadd.f32 0.0, %v3669
        %v3671 = vpop.f32.mrb[0].mxu0
        %3672 = vmatprep.mubr.bf16.mxu0 %v3421
        %3673 = vmatmul.mubr.bf16.gmra.mrb[0].mxu0 %v3420
        %v3674 = vpop.f32.mrb[0].mxu0
        %v3675 = vadd.f32 0.0, %v3674
        %v3676 = vpop.f32.mrb[0].mxu0
        %v3677 = vpop.f32.mrb[0].mxu0
        %v3678 = vadd.f32 0.0, %v3677
        %v3679 = vpop.f32.mrb[0].mxu0
        %3680 = vdwg.mxu0
        %3681 = vmatprep.subr.bf16.mxu0 0
        %3682 = vmatpush1.bf16.msra.mxu0 %v3584
        %3683 = vmatprep.subr.bf16.mxu0 0
        %3684 = vmatpush1.bf16.msra.mxu0 %v3585
        %3685 = vmatprep.subr.bf16.mxu0 0
        %3686 = vmatpush1.bf16.msra.mxu0 %v3586
        %3687 = vmatprep.subr.bf16.mxu0 0
        %3688 = vmatpush1.bf16.msra.mxu0 %v3587
        %3689 = vmatprep.subr.bf16.mxu0 0
        %3690 = vmatpush1.bf16.msra.mxu0 %v3588
        %3691 = vmatprep.subr.bf16.mxu0 0
        %3692 = vmatpush1.bf16.msra.mxu0 %v3589
        %3693 = vmatprep.subr.bf16.mxu0 0
        %3694 = vmatpush1.bf16.msra.mxu0 %v3590
        %3695 = vmatprep.subr.bf16.mxu0 0
        %3696 = vmatpush1.bf16.msra.mxu0 %v3591
        %3697 = vmatprep.subr.bf16.mxu0 0
        %3698 = vmatpush1.bf16.msra.mxu0 0
        %3699 = vmatprep.subr.bf16.mxu0 0
        %3700 = vmatpush1.bf16.msra.mxu0 0
        %3701 = vmatprep.subr.bf16.mxu0 0
        %3702 = vmatpush1.bf16.msra.mxu0 0
        %3703 = vmatprep.subr.bf16.mxu0 0
        %3704 = vmatpush1.bf16.msra.mxu0 0
        %3705 = vmatprep.subr.bf16.mxu0 0
        %3706 = vmatpush1.bf16.msra.mxu0 0
        %3707 = vmatprep.subr.bf16.mxu0 0
        %3708 = vmatpush1.bf16.msra.mxu0 0
        %3709 = vmatprep.subr.bf16.mxu0 0
        %3710 = vmatpush1.bf16.msra.mxu0 0
        %3711 = vmatprep.subr.bf16.mxu0 0
        %3712 = vmatpush1.bf16.msra.mxu0 0
        %3713 = vmatprep.mubr.bf16.mxu0 0
        %3714 = vmatmul.mubr.bf16.gmra.mrb[0].mxu0 %v3416
        %v3715 = vpop.f32.mrb[0].mxu0
        %v3716 = vadd.f32 %v3651, %v3715
        %v3717 = vpop.f32.mrb[0].mxu0
        %v3718 = vpop.f32.mrb[0].mxu0
        %v3719 = vadd.f32 %v3654, %v3718
        %v3720 = vpop.f32.mrb[0].mxu0
        %3721 = vmatprep.mubr.bf16.mxu0 0
        %3722 = vmatmul.mubr.bf16.gmra.mrb[0].mxu0 %v3418
        %v3723 = vpop.f32.mrb[0].mxu0
        %v3724 = vadd.f32 %v3659, %v3723
        %v3725 = vpop.f32.mrb[0].mxu0
        %v3726 = vpop.f32.mrb[0].mxu0
        %v3727 = vadd.f32 %v3662, %v3726
        %v3728 = vpop.f32.mrb[0].mxu0
        %3729 = vmatprep.mubr.bf16.mxu0 0
        %3730 = vmatmul.mubr.bf16.gmra.mrb[0].mxu0 %v3420
        %v3731 = vpop.f32.mrb[0].mxu0
        %v3732 = vadd.f32 %v3667, %v3731
        %v3733 = vpop.f32.mrb[0].mxu0
        %v3734 = vpop.f32.mrb[0].mxu0
        %v3735 = vadd.f32 %v3670, %v3734
        %v3736 = vpop.f32.mrb[0].mxu0
        %3737 = vmatprep.mubr.bf16.mxu0 0
        %3738 = vmatmul.mubr.bf16.gmra.mrb[0].mxu0 %v3422
        %v3739 = vpop.f32.mrb[0].mxu0
        %v3740 = vadd.f32 %v3675, %v3739
        %v3741 = vpop.f32.mrb[0].mxu0
        %v3742 = vpop.f32.mrb[0].mxu0
        %v3743 = vadd.f32 %v3678, %v3742
        %v3744 = vpop.f32.mrb[0].mxu0
        %3745 = vdwg.mxu0
        %v3746 = vsel %vm1483, 0.0, %v3716
        %v3747 = vsel %vm1483, 0.0, %v3719
        %v3748 = vsel %vm1483, 0.0, %v3724
        %v3749 = vsel %vm1483, 0.0, %v3727
        %v3750 = vsel %vm1483, 0.0, %v3732
        %v3751 = vsel %vm1483, 0.0, %v3735
        %v3752 = vsel %vm1483, 0.0, %v3740
        %v3753 = vsel %vm1483, 0.0, %v3743
        %v3754 = vadd.f32 %v3396, %v3746
        %v3755 = vadd.f32 %v3397, %v3747
        %v3756 = vadd.f32 %v3398, %v3748
        %v3757 = vadd.f32 %v3399, %v3749
        %v3758 = vadd.f32 %v3400, %v3750
        %v3759 = vadd.f32 %v3401, %v3751
        %v3760 = vadd.f32 %v3402, %v3752
        %v3761 = vadd.f32 %v3403, %v3753
        %v3762 = vld [vmem:[%s8] sm:$0x1]
        %v3764 = vlaneseq
        %v3765 = vshrl.u32 %v3764, 7
        %v3766 = vsub.s32 0, %v3765
        %v3767 = vrot.slane %v3762, %v3766
        %v3769 = vmul.f32 %v3754, %v3767
        %v3770 = vmul.f32 %v3755, %v3767
        %v3771 = vmul.f32 %v3756, %v3767
        %v3772 = vmul.f32 %v3757, %v3767
        %v3773 = vmul.f32 %v3758, %v3767
        %v3774 = vmul.f32 %v3759, %v3767
        %v3775 = vmul.f32 %v3760, %v3767
        %v3776 = vmul.f32 %v3761, %v3767
        %v3777 = vld [vmem:[%s9] sm:$0x1]
        %v3779 = vlaneseq
        %v3780 = vshrl.u32 %v3779, 7
        %v3781 = vsub.s32 0, %v3780
        %v3782 = vrot.slane %v3777, %v3781
        %v3784 = vadd.f32 %v3769, %v3782
        %v3785 = vadd.f32 %v3770, %v3782
        %v3786 = vadd.f32 %v3771, %v3782
        %v3787 = vadd.f32 %v3772, %v3782
        %v3788 = vadd.f32 %v3773, %v3782
        %v3789 = vadd.f32 %v3774, %v3782
        %v3790 = vadd.f32 %v3775, %v3782
        %v3791 = vadd.f32 %v3776, %v3782
        %v3792 = vld [vmem:[#allocation3] sm:$0xff]
        %v3793 = vld [vmem:[#allocation3 + $0x8] sm:$0xff]
        %v3794 = vld [vmem:[#allocation3 + $0x10] sm:$0xff]
        %v3795 = vld [vmem:[#allocation3 + $0x18] sm:$0xff]
        %v3796 = vld [vmem:[#allocation3 + $0x20] sm:$0xff]
        %v3797 = vld [vmem:[#allocation3 + $0x28] sm:$0xff]
        %v3798 = vld [vmem:[#allocation3 + $0x30] sm:$0xff]
        %v3799 = vld [vmem:[#allocation3 + $0x38] sm:$0xff]
        %v3800 = vadd.f32 %v3784, %v3792
        %v3801 = vadd.f32 %v3785, %v3793
        %v3802 = vadd.f32 %v3786, %v3794
        %v3803 = vadd.f32 %v3787, %v3795
        %v3804 = vadd.f32 %v3788, %v3796
        %v3805 = vadd.f32 %v3789, %v3797
        %v3806 = vadd.f32 %v3790, %v3798
        %v3807 = vadd.f32 %v3791, %v3799
        %vm3808 = vcmp.gt.f32.partialorder %v3800, 0.0
        %vm3809 = vcmp.gt.f32.partialorder %v3801, 0.0
        %vm3810 = vcmp.gt.f32.partialorder %v3802, 0.0
        %vm3811 = vcmp.gt.f32.partialorder %v3803, 0.0
        %vm3812 = vcmp.gt.f32.partialorder %v3804, 0.0
        %vm3813 = vcmp.gt.f32.partialorder %v3805, 0.0
        %vm3814 = vcmp.gt.f32.partialorder %v3806, 0.0
        %vm3815 = vcmp.gt.f32.partialorder %v3807, 0.0
        %v3816 = vmul.f32 %v3800, 0.01
        %v3817 = vmul.f32 %v3801, 0.01
        %v3818 = vmul.f32 %v3802, 0.01
        %v3819 = vmul.f32 %v3803, 0.01
        %v3820 = vmul.f32 %v3804, 0.01
        %v3821 = vmul.f32 %v3805, 0.01
        %v3822 = vmul.f32 %v3806, 0.01
        %v3823 = vmul.f32 %v3807, 0.01
        %v3824 = vsel %vm3808, %v3800, %v3816
        %v3825 = vsel %vm3809, %v3801, %v3817
        %v3826 = vsel %vm3810, %v3802, %v3818
        %v3827 = vsel %vm3811, %v3803, %v3819
        %v3828 = vsel %vm3812, %v3804, %v3820
        %v3829 = vsel %vm3813, %v3805, %v3821
        %v3830 = vsel %vm3814, %v3806, %v3822
        %v3831 = vsel %vm3815, %v3807, %v3823
        %3832 = vst [vmem:[%s421] sm:$0xff] %v3824
        %3833 = vst [vmem:[%s421 + $0x8] sm:$0xff] %v3825
        %3834 = vst [vmem:[%s421 + $0x10] sm:$0xff] %v3826
        %3835 = vst [vmem:[%s421 + $0x18] sm:$0xff] %v3827
        %3836 = vst [vmem:[%s421 + $0x20] sm:$0xff] %v3828
        %3837 = vst [vmem:[%s421 + $0x28] sm:$0xff] %v3829
        %3838 = vst [vmem:[%s421 + $0x30] sm:$0xff] %v3830
        %3839 = vst [vmem:[%s421 + $0x38] sm:$0xff] %v3831
        %s3840 = sand.u32 %s252, 1
        %s3841 = scalar_lea.sflag [#allocation6], %s3840
        %s3842 = sand.u32 %s252, 1
        %s3843 = smul.addr %s3842, 64
        %s3844 = scalar_lea.vmem [#allocation12], %s3843
        // Predicated region
        $region77: #{tpu_custom_call.1} parent=59 // pred_check
          %p3845 = pneg %p262
        $region78: #{tpu_custom_call.1} parent=59 // pred_check_branch
          %3847 = sbr.rel (%p3845) target = $region80
        $region79: #{tpu_custom_call.1} parent=59 // pred_region
          %s3849 = ssub.s32 1024, 1024
          %3850 = vsyncadd %s3841, %s3849
          %s3851 = smul.addr %s29, 8
          %s3852 = smul.addr %s3851, 128
          %s3853 = scalar_lea.hbm %s10, %s3852
          %s3854 = sshll.u32 %s3844, 4
          %s3855 = int_to_ptr.vmem [resolvable:$true] %s3854
          %3860 = dma.vmem_to_hbm [thread:$0]  %s3855, 1024, %s3853, %s3841, 128, 128, 8
        $region80: #{tpu_custom_call.1} parent=59 // pred_fallthru
          _
      $region60: #{tpu_custom_call.1} parent=5 // pred_fallthru
        _
      %p3861 = scmp.le.s32.totalorder 2, %s24
      // Predicated region
      $region81: #{tpu_custom_call.1} parent=5 // pred_check
        %p3862 = pneg %p3861
      $region82: #{tpu_custom_call.1} parent=5 // pred_check_branch
        %3864 = sbr.rel (%p3862) target = $region84
      $region83: #{tpu_custom_call.1} parent=5 // pred_region
        %s3865 = ssub.s32 %s24, 2
        // Predicated region
        $region85: #{tpu_custom_call.1} parent=83 // pred_check
          %p3866 = pneg %p268
        $region86: #{tpu_custom_call.1} parent=83 // pred_check_branch
          %3868 = sbr.rel (%p3866) target = $region88
        $region87: #{tpu_custom_call.1} parent=83 // pred_region
          %s3869 = sand.u32 %s253, 1
          %s3870 = scalar_lea.sflag [#allocation6], %s3869
          %s3871 = sand.u32 %s253, 1
          %s3872 = smul.addr %s3871, 64
          %s3873 = scalar_lea.vmem [#allocation12], %s3872
          %3874 = dma.done %s3870, 1024
        $region88: #{tpu_custom_call.1} parent=83 // pred_fallthru
          _
      $region84: #{tpu_custom_call.1} parent=5 // pred_fallthru
        _
    $region6: #{tpu_custom_call.1} parent=1 // loop_footer
      %s28 = sadd.s32 1, %s24
    $region7: #{tpu_custom_call.1} parent=1 // loop_footer_branch
      %23 = sbr.rel target = $region3
    $region8: #{tpu_custom_call.1} parent=1 // loop_exit
      _
    %3875 = vsyncpa [#allocation5], 1
    %s3876 = scalar_lea.sflag [#allocation5], 1
    %3877 = vsyncpa %s3876, 1
    %3878 = vsyncpa [#allocation8], 1
    %3879 = vsyncpa [#allocation11], 1
    %3880 = vsyncpa [#allocation6], 1
    %s3881 = scalar_lea.sflag [#allocation6], 1
    %3882 = vsyncpa %s3881, 1

</llo_original>
